<compile_context>
chip_gen: v7x
topology: tpu7x:2x2x1
jax: 0.10.0
libtpu: 0.0.40
codegen_flags: <defaults>
</compile_context>

<pallas_src>
import math
from functools import partial

import jax
import jax.numpy as jnp
from jax.experimental import pallas as pl
from jax.experimental.pallas import tpu as pltpu


P_PER_LAYER = 12  # wqkv, bqkv, wo, bo, g1, be1, g2, be2, w1, b1, w2, b2


def fused_encoder_kernel(x_ref, *refs, S, D, nhead, num_layers):
    """One batch element per grid step: full encoder stack + seq-mean in VMEM.

    x_ref : (1, S, D) f32 block
    refs  : 12 * num_layers resident weight refs, then out_ref (1, 1, D) f32
    """
    out_ref = refs[-1]
    prefs = refs[:-1]
    hd = D // nhead
    scale = 1.0 / math.sqrt(hd)
    bf16, f32 = jnp.bfloat16, jnp.float32

    x = x_ref[0]                                               # (S, D) f32

    for l in range(num_layers):
        (wqkv, bqkv, wo, bo, g1, be1, g2, be2, w1, b1, w2, b2) = \
            prefs[l * P_PER_LAYER:(l + 1) * P_PER_LAYER]

        # ---- fused QKV projection (bf16 MXU, f32 accumulation) -------------
        qkv = jnp.dot(x.astype(bf16), wqkv[...],
                      preferred_element_type=f32) + bqkv[...]   # (S, 3D)

        # ---- head split: lane slices stacked on a new leading head axis ----
        q3 = jnp.stack([qkv[:, h * hd:(h + 1) * hd]
                        for h in range(nhead)], axis=0).astype(bf16)      # (H,S,hd)
        k3 = jnp.stack([qkv[:, D + h * hd:D + (h + 1) * hd]
                        for h in range(nhead)], axis=0).astype(bf16)
        v3 = jnp.stack([qkv[:, 2 * D + h * hd:2 * D + (h + 1) * hd]
                        for h in range(nhead)], axis=0).astype(bf16)

        # ---- head-batched attention (single einsums, single softmax) -------
        s = jnp.einsum('hqd,hkd->hqk', q3, k3,
                       preferred_element_type=f32) * scale                # (H,S,S)
        s = s - jnp.max(s, axis=-1, keepdims=True)
        p = jnp.exp(s)
        p = p * pl.reciprocal(jnp.sum(p, axis=-1, keepdims=True), approx=True)
        ctx = jnp.einsum('hqk,hkd->hqd', p.astype(bf16), v3,
                         preferred_element_type=f32)                      # (H,S,hd)

        # ---- output projection: one head-batched einsum + head reduction ---
        attn = jnp.einsum('hqd,hdf->hqf', ctx.astype(bf16), wo[...],
                          preferred_element_type=f32).sum(axis=0) + bo[...]  # (S,D)

        # ---- residual + LayerNorm 1 (f32 VPU math) --------------------------
        h1 = x + attn
        mu = jnp.mean(h1, axis=-1, keepdims=True)
        var = jnp.mean((h1 - mu) ** 2, axis=-1, keepdims=True)
        h1 = (h1 - mu) * jax.lax.rsqrt(var + 1e-5) * g1[...] + be1[...]

        # ---- feed-forward (relu) --------------------------------------------
        f = jnp.dot(h1.astype(bf16), w1[...],
                    preferred_element_type=f32) + b1[...]                 # (S, dff)
        f = jnp.maximum(f, 0.0)
        f = jnp.dot(f.astype(bf16), w2[...],
                    preferred_element_type=f32) + b2[...]                 # (S, D)

        # ---- residual + LayerNorm 2 ------------------------------------------
        h2 = h1 + f
        mu2 = jnp.mean(h2, axis=-1, keepdims=True)
        var2 = jnp.mean((h2 - mu2) ** 2, axis=-1, keepdims=True)
        x = (h2 - mu2) * jax.lax.rsqrt(var2 + 1e-5) * g2[...] + be2[...]

    # ---- epilogue: mean over the sequence dim for this batch element ---------
    out_ref[...] = jnp.mean(x, axis=0, keepdims=True).reshape(1, 1, D)


# ------------------------------- wrapper ------------------------------------- #

def transformer_encoder(x, params, nhead):
    """x: (B, S, D) f32; params: list of per-layer dicts. Returns (B, D) f32."""
    B, S, D = x.shape
    flat = []
    for p in params:
        flat += [p["wqkv"], p["bqkv"], p["wo"], p["bo"],
                 p["g1"], p["be1"], p["g2"], p["be2"],
                 p["w1"], p["b1"], p["w2"], p["b2"]]

    def resident(a):
        # Whole-array block with a constant index_map -> stays VMEM-resident
        # across the batch grid (no per-step re-streaming).
        nd = a.ndim
        return pl.BlockSpec(a.shape, lambda b, _nd=nd: (0,) * _nd)

    kernel = partial(fused_encoder_kernel, S=S, D=D, nhead=nhead,
                     num_layers=len(params))

    out = pl.pallas_call(
        kernel,
        out_shape=jax.ShapeDtypeStruct((B, 1, D), jnp.float32),
        grid=(B,),
        in_specs=[pl.BlockSpec((1, S, D), lambda b: (b, 0, 0))]
                 + [resident(a) for a in flat],
        out_specs=pl.BlockSpec((1, 1, D), lambda b: (b, 0, 0)),
        compiler_params=pltpu.CompilerParams(
            dimension_semantics=("parallel",)),
    )(x, *flat)
    return out[:, 0, :]


# ----------------------------- parameter init -------------------------------- #

def init_layer_params(key, d_model, dff, nhead):
    ks = jax.random.split(key, 8)
    s = 0.05
    f32 = jnp.float32
    bf16 = jnp.bfloat16
    hd = d_model // nhead

    wqkv = jax.random.normal(ks[0], (d_model, 3 * d_model), f32) * s
    bqkv = jax.random.normal(ks[1], (1, 3 * d_model), f32) * 0.01
    wo = jax.random.normal(ks[2], (d_model, d_model), f32) * s
    bo = jax.random.normal(ks[3], (1, d_model), f32) * 0.01
    w1 = jax.random.normal(ks[4], (d_model, dff), f32) * s
    b1 = jax.random.normal(ks[5], (1, dff), f32) * 0.01
    w2 = jax.random.normal(ks[6], (dff, d_model), f32) * s
    b2 = jax.random.normal(ks[7], (1, d_model), f32) * 0.01

    return dict(
        # matmul weights stored bf16 (MXU inputs); biases / LN params stay f32
        wqkv=wqkv.astype(bf16),
        bqkv=bqkv,
        wo=wo.reshape(nhead, hd, d_model).astype(bf16),   # head-major W_out
        bo=bo,
        g1=jnp.ones((1, d_model), f32),
        be1=jnp.zeros((1, d_model), f32),
        g2=jnp.ones((1, d_model), f32),
        be2=jnp.zeros((1, d_model), f32),
        w1=w1.astype(bf16), b1=b1,
        w2=w2.astype(bf16), b2=b2,
    )


# --------------------------------- main --------------------------------------- #

if __name__ == "__main__":
    batch, seq, embedding_dim, nhead, num_layers = 2, 8, 32, 4, 2
    dim_feedforward = 2048   # PyTorch TransformerEncoderLayer default

    key = jax.random.PRNGKey(0)
    xkey, pkey = jax.random.split(key)
    x = jax.random.normal(xkey, (batch, seq, embedding_dim), jnp.float32)

    params = [init_layer_params(jax.random.fold_in(pkey, i),
                                embedding_dim, dim_feedforward, nhead)
              for i in range(num_layers)]

    fwd = jax.jit(partial(transformer_encoder, nhead=nhead))
    out = jax.block_until_ready(fwd(x, params))   # (batch, embedding_dim)

    assert out.shape == (batch, embedding_dim)
    assert bool(jnp.all(jnp.isfinite(out)))
    print("KERNEL_OK")
</pallas_src>

<mosaic_0001>
module attributes {stable_mosaic.version = 11 : i64} {
  func.func @fused_encoder_kernel(%arg0: i32, %arg1: memref<1x8x32xf32, #tpu.memory_space<vmem>>, %arg2: memref<32x96xbf16, #tpu.memory_space<vmem>>, %arg3: memref<1x96xf32, #tpu.memory_space<vmem>>, %arg4: memref<4x8x32xbf16, #tpu.memory_space<vmem>>, %arg5: memref<1x32xf32, #tpu.memory_space<vmem>>, %arg6: memref<1x32xf32, #tpu.memory_space<vmem>>, %arg7: memref<1x32xf32, #tpu.memory_space<vmem>>, %arg8: memref<1x32xf32, #tpu.memory_space<vmem>>, %arg9: memref<1x32xf32, #tpu.memory_space<vmem>>, %arg10: memref<32x2048xbf16, #tpu.memory_space<vmem>>, %arg11: memref<1x2048xf32, #tpu.memory_space<vmem>>, %arg12: memref<2048x32xbf16, #tpu.memory_space<vmem>>, %arg13: memref<1x32xf32, #tpu.memory_space<vmem>>, %arg14: memref<32x96xbf16, #tpu.memory_space<vmem>>, %arg15: memref<1x96xf32, #tpu.memory_space<vmem>>, %arg16: memref<4x8x32xbf16, #tpu.memory_space<vmem>>, %arg17: memref<1x32xf32, #tpu.memory_space<vmem>>, %arg18: memref<1x32xf32, #tpu.memory_space<vmem>>, %arg19: memref<1x32xf32, #tpu.memory_space<vmem>>, %arg20: memref<1x32xf32, #tpu.memory_space<vmem>>, %arg21: memref<1x32xf32, #tpu.memory_space<vmem>>, %arg22: memref<32x2048xbf16, #tpu.memory_space<vmem>>, %arg23: memref<1x2048xf32, #tpu.memory_space<vmem>>, %arg24: memref<2048x32xbf16, #tpu.memory_space<vmem>>, %arg25: memref<1x32xf32, #tpu.memory_space<vmem>>, %arg26: memref<1x1x32xf32, #tpu.memory_space<vmem>>) attributes {dimension_semantics = [#tpu.dimension_semantics<parallel>], iteration_bounds = array<i64: 2>, scalar_prefetch = 0 : i64, scratch_operands = 0 : i64, tpu.core_type = #tpu.core_type<tc>, window_params = [{transform_indices = @transform_0, window_bounds = array<i64: 1, 8, 32>}, {pipeline_mode = #tpu.pipeline_mode<synchronous>, transform_indices = @transform_1, window_bounds = array<i64: 32, 96>}, {pipeline_mode = #tpu.pipeline_mode<synchronous>, transform_indices = @transform_2, window_bounds = array<i64: 1, 96>}, {pipeline_mode = #tpu.pipeline_mode<synchronous>, transform_indices = @transform_3, window_bounds = array<i64: 4, 8, 32>}, {pipeline_mode = #tpu.pipeline_mode<synchronous>, transform_indices = @transform_4, window_bounds = array<i64: 1, 32>}, {pipeline_mode = #tpu.pipeline_mode<synchronous>, transform_indices = @transform_5, window_bounds = array<i64: 1, 32>}, {pipeline_mode = #tpu.pipeline_mode<synchronous>, transform_indices = @transform_6, window_bounds = array<i64: 1, 32>}, {pipeline_mode = #tpu.pipeline_mode<synchronous>, transform_indices = @transform_7, window_bounds = array<i64: 1, 32>}, {pipeline_mode = #tpu.pipeline_mode<synchronous>, transform_indices = @transform_8, window_bounds = array<i64: 1, 32>}, {pipeline_mode = #tpu.pipeline_mode<synchronous>, transform_indices = @transform_9, window_bounds = array<i64: 32, 2048>}, {pipeline_mode = #tpu.pipeline_mode<synchronous>, transform_indices = @transform_10, window_bounds = array<i64: 1, 2048>}, {pipeline_mode = #tpu.pipeline_mode<synchronous>, transform_indices = @transform_11, window_bounds = array<i64: 2048, 32>}, {pipeline_mode = #tpu.pipeline_mode<synchronous>, transform_indices = @transform_12, window_bounds = array<i64: 1, 32>}, {pipeline_mode = #tpu.pipeline_mode<synchronous>, transform_indices = @transform_13, window_bounds = array<i64: 32, 96>}, {pipeline_mode = #tpu.pipeline_mode<synchronous>, transform_indices = @transform_14, window_bounds = array<i64: 1, 96>}, {pipeline_mode = #tpu.pipeline_mode<synchronous>, transform_indices = @transform_15, window_bounds = array<i64: 4, 8, 32>}, {pipeline_mode = #tpu.pipeline_mode<synchronous>, transform_indices = @transform_16, window_bounds = array<i64: 1, 32>}, {pipeline_mode = #tpu.pipeline_mode<synchronous>, transform_indices = @transform_17, window_bounds = array<i64: 1, 32>}, {pipeline_mode = #tpu.pipeline_mode<synchronous>, transform_indices = @transform_18, window_bounds = array<i64: 1, 32>}, {pipeline_mode = #tpu.pipeline_mode<synchronous>, transform_indices = @transform_19, window_bounds = array<i64: 1, 32>}, {pipeline_mode = #tpu.pipeline_mode<synchronous>, transform_indices = @transform_20, window_bounds = array<i64: 1, 32>}, {pipeline_mode = #tpu.pipeline_mode<synchronous>, transform_indices = @transform_21, window_bounds = array<i64: 32, 2048>}, {pipeline_mode = #tpu.pipeline_mode<synchronous>, transform_indices = @transform_22, window_bounds = array<i64: 1, 2048>}, {pipeline_mode = #tpu.pipeline_mode<synchronous>, transform_indices = @transform_23, window_bounds = array<i64: 2048, 32>}, {pipeline_mode = #tpu.pipeline_mode<synchronous>, transform_indices = @transform_24, window_bounds = array<i64: 1, 32>}, {transform_indices = @transform_25, window_bounds = array<i64: 1, 1, 32>}]} {
    %c0 = arith.constant 0 : index
    %c0_0 = arith.constant 0 : index
    %c0_1 = arith.constant 0 : index
    %0 = vector.load %arg1[%c0, %c0_0, %c0_1] : memref<1x8x32xf32, #tpu.memory_space<vmem>>, vector<1x8x32xf32>
    %1 = vector.shape_cast %0 : vector<1x8x32xf32> to vector<8x32xf32>
    %2 = arith.truncf %1 : vector<8x32xf32> to vector<8x32xbf16>
    %c0_2 = arith.constant 0 : index
    %c0_3 = arith.constant 0 : index
    %3 = vector.load %arg2[%c0_2, %c0_3] : memref<32x96xbf16, #tpu.memory_space<vmem>>, vector<32x96xbf16>
    %cst = arith.constant dense<0.000000e+00> : vector<8x96xf32>
    %4 = tpu.matmul %2, %3, %cst {dimension_numbers = #tpu.dot_dimension_numbers<[1], [0], [0], [1], [0, 0, 1, 1], [], []>} : vector<8x32xbf16>, vector<32x96xbf16>, vector<8x96xf32> -> vector<8x96xf32>
    %c0_4 = arith.constant 0 : index
    %c0_5 = arith.constant 0 : index
    %5 = vector.load %arg3[%c0_4, %c0_5] : memref<1x96xf32, #tpu.memory_space<vmem>>, vector<1x96xf32>
    %6 = vector.broadcast %5 : vector<1x96xf32> to vector<8x96xf32>
    %7 = arith.addf %4, %6 : vector<8x96xf32>
    %8 = vector.extract_strided_slice %7 {offsets = [0, 0], sizes = [8, 8], strides = [1, 1]} : vector<8x96xf32> to vector<8x8xf32>
    %9 = vector.extract_strided_slice %7 {offsets = [0, 8], sizes = [8, 8], strides = [1, 1]} : vector<8x96xf32> to vector<8x8xf32>
    %10 = vector.extract_strided_slice %7 {offsets = [0, 16], sizes = [8, 8], strides = [1, 1]} : vector<8x96xf32> to vector<8x8xf32>
    %11 = vector.extract_strided_slice %7 {offsets = [0, 24], sizes = [8, 8], strides = [1, 1]} : vector<8x96xf32> to vector<8x8xf32>
    %12 = vector.shape_cast %8 : vector<8x8xf32> to vector<1x8x8xf32>
    %13 = vector.shape_cast %9 : vector<8x8xf32> to vector<1x8x8xf32>
    %14 = vector.shape_cast %10 : vector<8x8xf32> to vector<1x8x8xf32>
    %15 = vector.shape_cast %11 : vector<8x8xf32> to vector<1x8x8xf32>
    %16 = tpu.concatenate %12, %13, %14, %15 in 0 : vector<1x8x8xf32>, vector<1x8x8xf32>, vector<1x8x8xf32>, vector<1x8x8xf32> -> vector<4x8x8xf32>
    %17 = arith.truncf %16 : vector<4x8x8xf32> to vector<4x8x8xbf16>
    %18 = vector.extract_strided_slice %7 {offsets = [0, 32], sizes = [8, 8], strides = [1, 1]} : vector<8x96xf32> to vector<8x8xf32>
    %19 = vector.extract_strided_slice %7 {offsets = [0, 40], sizes = [8, 8], strides = [1, 1]} : vector<8x96xf32> to vector<8x8xf32>
    %20 = vector.extract_strided_slice %7 {offsets = [0, 48], sizes = [8, 8], strides = [1, 1]} : vector<8x96xf32> to vector<8x8xf32>
    %21 = vector.extract_strided_slice %7 {offsets = [0, 56], sizes = [8, 8], strides = [1, 1]} : vector<8x96xf32> to vector<8x8xf32>
    %22 = vector.shape_cast %18 : vector<8x8xf32> to vector<1x8x8xf32>
    %23 = vector.shape_cast %19 : vector<8x8xf32> to vector<1x8x8xf32>
    %24 = vector.shape_cast %20 : vector<8x8xf32> to vector<1x8x8xf32>
    %25 = vector.shape_cast %21 : vector<8x8xf32> to vector<1x8x8xf32>
    %26 = tpu.concatenate %22, %23, %24, %25 in 0 : vector<1x8x8xf32>, vector<1x8x8xf32>, vector<1x8x8xf32>, vector<1x8x8xf32> -> vector<4x8x8xf32>
    %27 = arith.truncf %26 : vector<4x8x8xf32> to vector<4x8x8xbf16>
    %28 = vector.extract_strided_slice %7 {offsets = [0, 64], sizes = [8, 8], strides = [1, 1]} : vector<8x96xf32> to vector<8x8xf32>
    %29 = vector.extract_strided_slice %7 {offsets = [0, 72], sizes = [8, 8], strides = [1, 1]} : vector<8x96xf32> to vector<8x8xf32>
    %30 = vector.extract_strided_slice %7 {offsets = [0, 80], sizes = [8, 8], strides = [1, 1]} : vector<8x96xf32> to vector<8x8xf32>
    %31 = vector.extract_strided_slice %7 {offsets = [0, 88], sizes = [8, 8], strides = [1, 1]} : vector<8x96xf32> to vector<8x8xf32>
    %32 = vector.shape_cast %28 : vector<8x8xf32> to vector<1x8x8xf32>
    %33 = vector.shape_cast %29 : vector<8x8xf32> to vector<1x8x8xf32>
    %34 = vector.shape_cast %30 : vector<8x8xf32> to vector<1x8x8xf32>
    %35 = vector.shape_cast %31 : vector<8x8xf32> to vector<1x8x8xf32>
    %36 = tpu.concatenate %32, %33, %34, %35 in 0 : vector<1x8x8xf32>, vector<1x8x8xf32>, vector<1x8x8xf32>, vector<1x8x8xf32> -> vector<4x8x8xf32>
    %37 = arith.truncf %36 : vector<4x8x8xf32> to vector<4x8x8xbf16>
    "tpu.trace_start"() <{level = 10 : i32, message = "hqd,hkd->hqk"}> : () -> ()
    %cst_6 = arith.constant dense<0.000000e+00> : vector<4x8x8xf32>
    %38 = tpu.matmul %17, %27, %cst_6 {dimension_numbers = #tpu.dot_dimension_numbers<[2], [2], [1], [1], [0, 0, 0, 1, 1, 1], [0], [0]>} : vector<4x8x8xbf16>, vector<4x8x8xbf16>, vector<4x8x8xf32> -> vector<4x8x8xf32>
    "tpu.trace_stop"() : () -> ()
    %cst_7 = arith.constant 0.353553385 : f32
    %39 = vector.broadcast %cst_7 : f32 to vector<4x8x8xf32>
    %40 = arith.mulf %38, %39 : vector<4x8x8xf32>
    %cst_8 = arith.constant dense<0xFF800000> : vector<4x8xf32>
    %41 = vector.multi_reduction <maximumf>, %40, %cst_8 [2] : vector<4x8x8xf32> to vector<4x8xf32>
    %42 = vector.shape_cast %41 : vector<4x8xf32> to vector<4x8x1xf32>
    %43 = vector.broadcast %42 : vector<4x8x1xf32> to vector<4x8x8xf32>
    %44 = arith.subf %40, %43 : vector<4x8x8xf32>
    %45 = math.exp %44 : vector<4x8x8xf32>
    %cst_9 = arith.constant dense<0.000000e+00> : vector<4x8xf32>
    %46 = vector.multi_reduction <add>, %45, %cst_9 [2] : vector<4x8x8xf32> to vector<4x8xf32>
    %47 = vector.shape_cast %46 : vector<4x8xf32> to vector<4x8x1xf32>
    %48 = tpu.reciprocal %47 {approx = true} : vector<4x8x1xf32> -> vector<4x8x1xf32>
    %49 = vector.broadcast %48 : vector<4x8x1xf32> to vector<4x8x8xf32>
    %50 = arith.mulf %45, %49 : vector<4x8x8xf32>
    %51 = arith.truncf %50 : vector<4x8x8xf32> to vector<4x8x8xbf16>
    "tpu.trace_start"() <{level = 10 : i32, message = "hqk,hkd->hqd"}> : () -> ()
    %cst_10 = arith.constant dense<0.000000e+00> : vector<4x8x8xf32>
    %52 = tpu.matmul %51, %37, %cst_10 {dimension_numbers = #tpu.dot_dimension_numbers<[2], [1], [1], [2], [0, 0, 0, 1, 1, 2], [0], [0]>} : vector<4x8x8xbf16>, vector<4x8x8xbf16>, vector<4x8x8xf32> -> vector<4x8x8xf32>
    "tpu.trace_stop"() : () -> ()
    %53 = arith.truncf %52 : vector<4x8x8xf32> to vector<4x8x8xbf16>
    %c0_11 = arith.constant 0 : index
    %c0_12 = arith.constant 0 : index
    %c0_13 = arith.constant 0 : index
    %54 = vector.load %arg4[%c0_11, %c0_12, %c0_13] : memref<4x8x32xbf16, #tpu.memory_space<vmem>>, vector<4x8x32xbf16>
    "tpu.trace_start"() <{level = 10 : i32, message = "hqd,hdf->hqf"}> : () -> ()
    %cst_14 = arith.constant dense<0.000000e+00> : vector<4x8x32xf32>
    %55 = tpu.matmul %53, %54, %cst_14 {dimension_numbers = #tpu.dot_dimension_numbers<[2], [1], [1], [2], [0, 0, 0, 1, 1, 2], [0], [0]>} : vector<4x8x8xbf16>, vector<4x8x32xbf16>, vector<4x8x32xf32> -> vector<4x8x32xf32>
    "tpu.trace_stop"() : () -> ()
    %cst_15 = arith.constant dense<0.000000e+00> : vector<8x32xf32>
    %56 = vector.multi_reduction <add>, %55, %cst_15 [0] : vector<4x8x32xf32> to vector<8x32xf32>
    %c0_16 = arith.constant 0 : index
    %c0_17 = arith.constant 0 : index
    %57 = vector.load %arg5[%c0_16, %c0_17] : memref<1x32xf32, #tpu.memory_space<vmem>>, vector<1x32xf32>
    %58 = vector.broadcast %57 : vector<1x32xf32> to vector<8x32xf32>
    %59 = arith.addf %56, %58 : vector<8x32xf32>
    %60 = arith.addf %1, %59 : vector<8x32xf32>
    %cst_18 = arith.constant dense<0.000000e+00> : vector<8xf32>
    %61 = vector.multi_reduction <add>, %60, %cst_18 [1] : vector<8x32xf32> to vector<8xf32>
    %62 = vector.shape_cast %61 : vector<8xf32> to vector<8x1xf32>
    %cst_19 = arith.constant 3.200000e+01 : f32
    %63 = vector.broadcast %cst_19 : f32 to vector<8x1xf32>
    %64 = arith.divf %62, %63 : vector<8x1xf32>
    %65 = vector.broadcast %64 : vector<8x1xf32> to vector<8x32xf32>
    %66 = arith.subf %60, %65 : vector<8x32xf32>
    %67 = arith.mulf %66, %66 : vector<8x32xf32>
    %cst_20 = arith.constant dense<0.000000e+00> : vector<8xf32>
    %68 = vector.multi_reduction <add>, %67, %cst_20 [1] : vector<8x32xf32> to vector<8xf32>
    %69 = vector.shape_cast %68 : vector<8xf32> to vector<8x1xf32>
    %cst_21 = arith.constant 3.200000e+01 : f32
    %70 = vector.broadcast %cst_21 : f32 to vector<8x1xf32>
    %71 = arith.divf %69, %70 : vector<8x1xf32>
    %72 = vector.broadcast %64 : vector<8x1xf32> to vector<8x32xf32>
    %73 = arith.subf %60, %72 : vector<8x32xf32>
    %cst_22 = arith.constant 9.99999974E-6 : f32
    %74 = vector.broadcast %cst_22 : f32 to vector<8x1xf32>
    %75 = arith.addf %71, %74 : vector<8x1xf32>
    %76 = math.rsqrt %75 : vector<8x1xf32>
    %77 = vector.broadcast %76 : vector<8x1xf32> to vector<8x32xf32>
    %78 = arith.mulf %73, %77 : vector<8x32xf32>
    %c0_23 = arith.constant 0 : index
    %c0_24 = arith.constant 0 : index
    %79 = vector.load %arg6[%c0_23, %c0_24] : memref<1x32xf32, #tpu.memory_space<vmem>>, vector<1x32xf32>
    %80 = vector.broadcast %79 : vector<1x32xf32> to vector<8x32xf32>
    %81 = arith.mulf %78, %80 : vector<8x32xf32>
    %c0_25 = arith.constant 0 : index
    %c0_26 = arith.constant 0 : index
    %82 = vector.load %arg7[%c0_25, %c0_26] : memref<1x32xf32, #tpu.memory_space<vmem>>, vector<1x32xf32>
    %83 = vector.broadcast %82 : vector<1x32xf32> to vector<8x32xf32>
    %84 = arith.addf %81, %83 : vector<8x32xf32>
    %85 = arith.truncf %84 : vector<8x32xf32> to vector<8x32xbf16>
    %c0_27 = arith.constant 0 : index
    %c0_28 = arith.constant 0 : index
    %86 = vector.load %arg10[%c0_27, %c0_28] : memref<32x2048xbf16, #tpu.memory_space<vmem>>, vector<32x2048xbf16>
    %cst_29 = arith.constant dense<0.000000e+00> : vector<8x2048xf32>
    %87 = tpu.matmul %85, %86, %cst_29 {dimension_numbers = #tpu.dot_dimension_numbers<[1], [0], [0], [1], [0, 0, 1, 1], [], []>} : vector<8x32xbf16>, vector<32x2048xbf16>, vector<8x2048xf32> -> vector<8x2048xf32>
    %c0_30 = arith.constant 0 : index
    %c0_31 = arith.constant 0 : index
    %88 = vector.load %arg11[%c0_30, %c0_31] : memref<1x2048xf32, #tpu.memory_space<vmem>>, vector<1x2048xf32>
    %89 = vector.broadcast %88 : vector<1x2048xf32> to vector<8x2048xf32>
    %90 = arith.addf %87, %89 : vector<8x2048xf32>
    %cst_32 = arith.constant 0.000000e+00 : f32
    %91 = vector.broadcast %cst_32 : f32 to vector<8x2048xf32>
    %92 = arith.maximumf %90, %91 : vector<8x2048xf32>
    %93 = arith.truncf %92 : vector<8x2048xf32> to vector<8x2048xbf16>
    %c0_33 = arith.constant 0 : index
    %c0_34 = arith.constant 0 : index
    %94 = vector.load %arg12[%c0_33, %c0_34] : memref<2048x32xbf16, #tpu.memory_space<vmem>>, vector<2048x32xbf16>
    %cst_35 = arith.constant dense<0.000000e+00> : vector<8x32xf32>
    %95 = tpu.matmul %93, %94, %cst_35 {dimension_numbers = #tpu.dot_dimension_numbers<[1], [0], [0], [1], [0, 0, 1, 1], [], []>} : vector<8x2048xbf16>, vector<2048x32xbf16>, vector<8x32xf32> -> vector<8x32xf32>
    %c0_36 = arith.constant 0 : index
    %c0_37 = arith.constant 0 : index
    %96 = vector.load %arg13[%c0_36, %c0_37] : memref<1x32xf32, #tpu.memory_space<vmem>>, vector<1x32xf32>
    %97 = vector.broadcast %96 : vector<1x32xf32> to vector<8x32xf32>
    %98 = arith.addf %95, %97 : vector<8x32xf32>
    %99 = arith.addf %84, %98 : vector<8x32xf32>
    %cst_38 = arith.constant dense<0.000000e+00> : vector<8xf32>
    %100 = vector.multi_reduction <add>, %99, %cst_38 [1] : vector<8x32xf32> to vector<8xf32>
    %101 = vector.shape_cast %100 : vector<8xf32> to vector<8x1xf32>
    %cst_39 = arith.constant 3.200000e+01 : f32
    %102 = vector.broadcast %cst_39 : f32 to vector<8x1xf32>
    %103 = arith.divf %101, %102 : vector<8x1xf32>
    %104 = vector.broadcast %103 : vector<8x1xf32> to vector<8x32xf32>
    %105 = arith.subf %99, %104 : vector<8x32xf32>
    %106 = arith.mulf %105, %105 : vector<8x32xf32>
    %cst_40 = arith.constant dense<0.000000e+00> : vector<8xf32>
    %107 = vector.multi_reduction <add>, %106, %cst_40 [1] : vector<8x32xf32> to vector<8xf32>
    %108 = vector.shape_cast %107 : vector<8xf32> to vector<8x1xf32>
    %cst_41 = arith.constant 3.200000e+01 : f32
    %109 = vector.broadcast %cst_41 : f32 to vector<8x1xf32>
    %110 = arith.divf %108, %109 : vector<8x1xf32>
    %111 = vector.broadcast %103 : vector<8x1xf32> to vector<8x32xf32>
    %112 = arith.subf %99, %111 : vector<8x32xf32>
    %cst_42 = arith.constant 9.99999974E-6 : f32
    %113 = vector.broadcast %cst_42 : f32 to vector<8x1xf32>
    %114 = arith.addf %110, %113 : vector<8x1xf32>
    %115 = math.rsqrt %114 : vector<8x1xf32>
    %116 = vector.broadcast %115 : vector<8x1xf32> to vector<8x32xf32>
    %117 = arith.mulf %112, %116 : vector<8x32xf32>
    %c0_43 = arith.constant 0 : index
    %c0_44 = arith.constant 0 : index
    %118 = vector.load %arg8[%c0_43, %c0_44] : memref<1x32xf32, #tpu.memory_space<vmem>>, vector<1x32xf32>
    %119 = vector.broadcast %118 : vector<1x32xf32> to vector<8x32xf32>
    %120 = arith.mulf %117, %119 : vector<8x32xf32>
    %c0_45 = arith.constant 0 : index
    %c0_46 = arith.constant 0 : index
    %121 = vector.load %arg9[%c0_45, %c0_46] : memref<1x32xf32, #tpu.memory_space<vmem>>, vector<1x32xf32>
    %122 = vector.broadcast %121 : vector<1x32xf32> to vector<8x32xf32>
    %123 = arith.addf %120, %122 : vector<8x32xf32>
    %124 = arith.truncf %123 : vector<8x32xf32> to vector<8x32xbf16>
    %c0_47 = arith.constant 0 : index
    %c0_48 = arith.constant 0 : index
    %125 = vector.load %arg14[%c0_47, %c0_48] : memref<32x96xbf16, #tpu.memory_space<vmem>>, vector<32x96xbf16>
    %cst_49 = arith.constant dense<0.000000e+00> : vector<8x96xf32>
    %126 = tpu.matmul %124, %125, %cst_49 {dimension_numbers = #tpu.dot_dimension_numbers<[1], [0], [0], [1], [0, 0, 1, 1], [], []>} : vector<8x32xbf16>, vector<32x96xbf16>, vector<8x96xf32> -> vector<8x96xf32>
    %c0_50 = arith.constant 0 : index
    %c0_51 = arith.constant 0 : index
    %127 = vector.load %arg15[%c0_50, %c0_51] : memref<1x96xf32, #tpu.memory_space<vmem>>, vector<1x96xf32>
    %128 = vector.broadcast %127 : vector<1x96xf32> to vector<8x96xf32>
    %129 = arith.addf %126, %128 : vector<8x96xf32>
    %130 = vector.extract_strided_slice %129 {offsets = [0, 0], sizes = [8, 8], strides = [1, 1]} : vector<8x96xf32> to vector<8x8xf32>
    %131 = vector.extract_strided_slice %129 {offsets = [0, 8], sizes = [8, 8], strides = [1, 1]} : vector<8x96xf32> to vector<8x8xf32>
    %132 = vector.extract_strided_slice %129 {offsets = [0, 16], sizes = [8, 8], strides = [1, 1]} : vector<8x96xf32> to vector<8x8xf32>
    %133 = vector.extract_strided_slice %129 {offsets = [0, 24], sizes = [8, 8], strides = [1, 1]} : vector<8x96xf32> to vector<8x8xf32>
    %134 = vector.shape_cast %130 : vector<8x8xf32> to vector<1x8x8xf32>
    %135 = vector.shape_cast %131 : vector<8x8xf32> to vector<1x8x8xf32>
    %136 = vector.shape_cast %132 : vector<8x8xf32> to vector<1x8x8xf32>
    %137 = vector.shape_cast %133 : vector<8x8xf32> to vector<1x8x8xf32>
    %138 = tpu.concatenate %134, %135, %136, %137 in 0 : vector<1x8x8xf32>, vector<1x8x8xf32>, vector<1x8x8xf32>, vector<1x8x8xf32> -> vector<4x8x8xf32>
    %139 = arith.truncf %138 : vector<4x8x8xf32> to vector<4x8x8xbf16>
    %140 = vector.extract_strided_slice %129 {offsets = [0, 32], sizes = [8, 8], strides = [1, 1]} : vector<8x96xf32> to vector<8x8xf32>
    %141 = vector.extract_strided_slice %129 {offsets = [0, 40], sizes = [8, 8], strides = [1, 1]} : vector<8x96xf32> to vector<8x8xf32>
    %142 = vector.extract_strided_slice %129 {offsets = [0, 48], sizes = [8, 8], strides = [1, 1]} : vector<8x96xf32> to vector<8x8xf32>
    %143 = vector.extract_strided_slice %129 {offsets = [0, 56], sizes = [8, 8], strides = [1, 1]} : vector<8x96xf32> to vector<8x8xf32>
    %144 = vector.shape_cast %140 : vector<8x8xf32> to vector<1x8x8xf32>
    %145 = vector.shape_cast %141 : vector<8x8xf32> to vector<1x8x8xf32>
    %146 = vector.shape_cast %142 : vector<8x8xf32> to vector<1x8x8xf32>
    %147 = vector.shape_cast %143 : vector<8x8xf32> to vector<1x8x8xf32>
    %148 = tpu.concatenate %144, %145, %146, %147 in 0 : vector<1x8x8xf32>, vector<1x8x8xf32>, vector<1x8x8xf32>, vector<1x8x8xf32> -> vector<4x8x8xf32>
    %149 = arith.truncf %148 : vector<4x8x8xf32> to vector<4x8x8xbf16>
    %150 = vector.extract_strided_slice %129 {offsets = [0, 64], sizes = [8, 8], strides = [1, 1]} : vector<8x96xf32> to vector<8x8xf32>
    %151 = vector.extract_strided_slice %129 {offsets = [0, 72], sizes = [8, 8], strides = [1, 1]} : vector<8x96xf32> to vector<8x8xf32>
    %152 = vector.extract_strided_slice %129 {offsets = [0, 80], sizes = [8, 8], strides = [1, 1]} : vector<8x96xf32> to vector<8x8xf32>
    %153 = vector.extract_strided_slice %129 {offsets = [0, 88], sizes = [8, 8], strides = [1, 1]} : vector<8x96xf32> to vector<8x8xf32>
    %154 = vector.shape_cast %150 : vector<8x8xf32> to vector<1x8x8xf32>
    %155 = vector.shape_cast %151 : vector<8x8xf32> to vector<1x8x8xf32>
    %156 = vector.shape_cast %152 : vector<8x8xf32> to vector<1x8x8xf32>
    %157 = vector.shape_cast %153 : vector<8x8xf32> to vector<1x8x8xf32>
    %158 = tpu.concatenate %154, %155, %156, %157 in 0 : vector<1x8x8xf32>, vector<1x8x8xf32>, vector<1x8x8xf32>, vector<1x8x8xf32> -> vector<4x8x8xf32>
    %159 = arith.truncf %158 : vector<4x8x8xf32> to vector<4x8x8xbf16>
    "tpu.trace_start"() <{level = 10 : i32, message = "hqd,hkd->hqk"}> : () -> ()
    %cst_52 = arith.constant dense<0.000000e+00> : vector<4x8x8xf32>
    %160 = tpu.matmul %139, %149, %cst_52 {dimension_numbers = #tpu.dot_dimension_numbers<[2], [2], [1], [1], [0, 0, 0, 1, 1, 1], [0], [0]>} : vector<4x8x8xbf16>, vector<4x8x8xbf16>, vector<4x8x8xf32> -> vector<4x8x8xf32>
    "tpu.trace_stop"() : () -> ()
    %cst_53 = arith.constant 0.353553385 : f32
    %161 = vector.broadcast %cst_53 : f32 to vector<4x8x8xf32>
    %162 = arith.mulf %160, %161 : vector<4x8x8xf32>
    %cst_54 = arith.constant dense<0xFF800000> : vector<4x8xf32>
    %163 = vector.multi_reduction <maximumf>, %162, %cst_54 [2] : vector<4x8x8xf32> to vector<4x8xf32>
    %164 = vector.shape_cast %163 : vector<4x8xf32> to vector<4x8x1xf32>
    %165 = vector.broadcast %164 : vector<4x8x1xf32> to vector<4x8x8xf32>
    %166 = arith.subf %162, %165 : vector<4x8x8xf32>
    %167 = math.exp %166 : vector<4x8x8xf32>
    %cst_55 = arith.constant dense<0.000000e+00> : vector<4x8xf32>
    %168 = vector.multi_reduction <add>, %167, %cst_55 [2] : vector<4x8x8xf32> to vector<4x8xf32>
    %169 = vector.shape_cast %168 : vector<4x8xf32> to vector<4x8x1xf32>
    %170 = tpu.reciprocal %169 {approx = true} : vector<4x8x1xf32> -> vector<4x8x1xf32>
    %171 = vector.broadcast %170 : vector<4x8x1xf32> to vector<4x8x8xf32>
    %172 = arith.mulf %167, %171 : vector<4x8x8xf32>
    %173 = arith.truncf %172 : vector<4x8x8xf32> to vector<4x8x8xbf16>
    "tpu.trace_start"() <{level = 10 : i32, message = "hqk,hkd->hqd"}> : () -> ()
    %cst_56 = arith.constant dense<0.000000e+00> : vector<4x8x8xf32>
    %174 = tpu.matmul %173, %159, %cst_56 {dimension_numbers = #tpu.dot_dimension_numbers<[2], [1], [1], [2], [0, 0, 0, 1, 1, 2], [0], [0]>} : vector<4x8x8xbf16>, vector<4x8x8xbf16>, vector<4x8x8xf32> -> vector<4x8x8xf32>
    "tpu.trace_stop"() : () -> ()
    %175 = arith.truncf %174 : vector<4x8x8xf32> to vector<4x8x8xbf16>
    %c0_57 = arith.constant 0 : index
    %c0_58 = arith.constant 0 : index
    %c0_59 = arith.constant 0 : index
    %176 = vector.load %arg16[%c0_57, %c0_58, %c0_59] : memref<4x8x32xbf16, #tpu.memory_space<vmem>>, vector<4x8x32xbf16>
    "tpu.trace_start"() <{level = 10 : i32, message = "hqd,hdf->hqf"}> : () -> ()
    %cst_60 = arith.constant dense<0.000000e+00> : vector<4x8x32xf32>
    %177 = tpu.matmul %175, %176, %cst_60 {dimension_numbers = #tpu.dot_dimension_numbers<[2], [1], [1], [2], [0, 0, 0, 1, 1, 2], [0], [0]>} : vector<4x8x8xbf16>, vector<4x8x32xbf16>, vector<4x8x32xf32> -> vector<4x8x32xf32>
    "tpu.trace_stop"() : () -> ()
    %cst_61 = arith.constant dense<0.000000e+00> : vector<8x32xf32>
    %178 = vector.multi_reduction <add>, %177, %cst_61 [0] : vector<4x8x32xf32> to vector<8x32xf32>
    %c0_62 = arith.constant 0 : index
    %c0_63 = arith.constant 0 : index
    %179 = vector.load %arg17[%c0_62, %c0_63] : memref<1x32xf32, #tpu.memory_space<vmem>>, vector<1x32xf32>
    %180 = vector.broadcast %179 : vector<1x32xf32> to vector<8x32xf32>
    %181 = arith.addf %178, %180 : vector<8x32xf32>
    %182 = arith.addf %123, %181 : vector<8x32xf32>
    %cst_64 = arith.constant dense<0.000000e+00> : vector<8xf32>
    %183 = vector.multi_reduction <add>, %182, %cst_64 [1] : vector<8x32xf32> to vector<8xf32>
    %184 = vector.shape_cast %183 : vector<8xf32> to vector<8x1xf32>
    %cst_65 = arith.constant 3.200000e+01 : f32
    %185 = vector.broadcast %cst_65 : f32 to vector<8x1xf32>
    %186 = arith.divf %184, %185 : vector<8x1xf32>
    %187 = vector.broadcast %186 : vector<8x1xf32> to vector<8x32xf32>
    %188 = arith.subf %182, %187 : vector<8x32xf32>
    %189 = arith.mulf %188, %188 : vector<8x32xf32>
    %cst_66 = arith.constant dense<0.000000e+00> : vector<8xf32>
    %190 = vector.multi_reduction <add>, %189, %cst_66 [1] : vector<8x32xf32> to vector<8xf32>
    %191 = vector.shape_cast %190 : vector<8xf32> to vector<8x1xf32>
    %cst_67 = arith.constant 3.200000e+01 : f32
    %192 = vector.broadcast %cst_67 : f32 to vector<8x1xf32>
    %193 = arith.divf %191, %192 : vector<8x1xf32>
    %194 = vector.broadcast %186 : vector<8x1xf32> to vector<8x32xf32>
    %195 = arith.subf %182, %194 : vector<8x32xf32>
    %cst_68 = arith.constant 9.99999974E-6 : f32
    %196 = vector.broadcast %cst_68 : f32 to vector<8x1xf32>
    %197 = arith.addf %193, %196 : vector<8x1xf32>
    %198 = math.rsqrt %197 : vector<8x1xf32>
    %199 = vector.broadcast %198 : vector<8x1xf32> to vector<8x32xf32>
    %200 = arith.mulf %195, %199 : vector<8x32xf32>
    %c0_69 = arith.constant 0 : index
    %c0_70 = arith.constant 0 : index
    %201 = vector.load %arg18[%c0_69, %c0_70] : memref<1x32xf32, #tpu.memory_space<vmem>>, vector<1x32xf32>
    %202 = vector.broadcast %201 : vector<1x32xf32> to vector<8x32xf32>
    %203 = arith.mulf %200, %202 : vector<8x32xf32>
    %c0_71 = arith.constant 0 : index
    %c0_72 = arith.constant 0 : index
    %204 = vector.load %arg19[%c0_71, %c0_72] : memref<1x32xf32, #tpu.memory_space<vmem>>, vector<1x32xf32>
    %205 = vector.broadcast %204 : vector<1x32xf32> to vector<8x32xf32>
    %206 = arith.addf %203, %205 : vector<8x32xf32>
    %207 = arith.truncf %206 : vector<8x32xf32> to vector<8x32xbf16>
    %c0_73 = arith.constant 0 : index
    %c0_74 = arith.constant 0 : index
    %208 = vector.load %arg22[%c0_73, %c0_74] : memref<32x2048xbf16, #tpu.memory_space<vmem>>, vector<32x2048xbf16>
    %cst_75 = arith.constant dense<0.000000e+00> : vector<8x2048xf32>
    %209 = tpu.matmul %207, %208, %cst_75 {dimension_numbers = #tpu.dot_dimension_numbers<[1], [0], [0], [1], [0, 0, 1, 1], [], []>} : vector<8x32xbf16>, vector<32x2048xbf16>, vector<8x2048xf32> -> vector<8x2048xf32>
    %c0_76 = arith.constant 0 : index
    %c0_77 = arith.constant 0 : index
    %210 = vector.load %arg23[%c0_76, %c0_77] : memref<1x2048xf32, #tpu.memory_space<vmem>>, vector<1x2048xf32>
    %211 = vector.broadcast %210 : vector<1x2048xf32> to vector<8x2048xf32>
    %212 = arith.addf %209, %211 : vector<8x2048xf32>
    %cst_78 = arith.constant 0.000000e+00 : f32
    %213 = vector.broadcast %cst_78 : f32 to vector<8x2048xf32>
    %214 = arith.maximumf %212, %213 : vector<8x2048xf32>
    %215 = arith.truncf %214 : vector<8x2048xf32> to vector<8x2048xbf16>
    %c0_79 = arith.constant 0 : index
    %c0_80 = arith.constant 0 : index
    %216 = vector.load %arg24[%c0_79, %c0_80] : memref<2048x32xbf16, #tpu.memory_space<vmem>>, vector<2048x32xbf16>
    %cst_81 = arith.constant dense<0.000000e+00> : vector<8x32xf32>
    %217 = tpu.matmul %215, %216, %cst_81 {dimension_numbers = #tpu.dot_dimension_numbers<[1], [0], [0], [1], [0, 0, 1, 1], [], []>} : vector<8x2048xbf16>, vector<2048x32xbf16>, vector<8x32xf32> -> vector<8x32xf32>
    %c0_82 = arith.constant 0 : index
    %c0_83 = arith.constant 0 : index
    %218 = vector.load %arg25[%c0_82, %c0_83] : memref<1x32xf32, #tpu.memory_space<vmem>>, vector<1x32xf32>
    %219 = vector.broadcast %218 : vector<1x32xf32> to vector<8x32xf32>
    %220 = arith.addf %217, %219 : vector<8x32xf32>
    %221 = arith.addf %206, %220 : vector<8x32xf32>
    %cst_84 = arith.constant dense<0.000000e+00> : vector<8xf32>
    %222 = vector.multi_reduction <add>, %221, %cst_84 [1] : vector<8x32xf32> to vector<8xf32>
    %223 = vector.shape_cast %222 : vector<8xf32> to vector<8x1xf32>
    %cst_85 = arith.constant 3.200000e+01 : f32
    %224 = vector.broadcast %cst_85 : f32 to vector<8x1xf32>
    %225 = arith.divf %223, %224 : vector<8x1xf32>
    %226 = vector.broadcast %225 : vector<8x1xf32> to vector<8x32xf32>
    %227 = arith.subf %221, %226 : vector<8x32xf32>
    %228 = arith.mulf %227, %227 : vector<8x32xf32>
    %cst_86 = arith.constant dense<0.000000e+00> : vector<8xf32>
    %229 = vector.multi_reduction <add>, %228, %cst_86 [1] : vector<8x32xf32> to vector<8xf32>
    %230 = vector.shape_cast %229 : vector<8xf32> to vector<8x1xf32>
    %cst_87 = arith.constant 3.200000e+01 : f32
    %231 = vector.broadcast %cst_87 : f32 to vector<8x1xf32>
    %232 = arith.divf %230, %231 : vector<8x1xf32>
    %233 = vector.broadcast %225 : vector<8x1xf32> to vector<8x32xf32>
    %234 = arith.subf %221, %233 : vector<8x32xf32>
    %cst_88 = arith.constant 9.99999974E-6 : f32
    %235 = vector.broadcast %cst_88 : f32 to vector<8x1xf32>
    %236 = arith.addf %232, %235 : vector<8x1xf32>
    %237 = math.rsqrt %236 : vector<8x1xf32>
    %238 = vector.broadcast %237 : vector<8x1xf32> to vector<8x32xf32>
    %239 = arith.mulf %234, %238 : vector<8x32xf32>
    %c0_89 = arith.constant 0 : index
    %c0_90 = arith.constant 0 : index
    %240 = vector.load %arg20[%c0_89, %c0_90] : memref<1x32xf32, #tpu.memory_space<vmem>>, vector<1x32xf32>
    %241 = vector.broadcast %240 : vector<1x32xf32> to vector<8x32xf32>
    %242 = arith.mulf %239, %241 : vector<8x32xf32>
    %c0_91 = arith.constant 0 : index
    %c0_92 = arith.constant 0 : index
    %243 = vector.load %arg21[%c0_91, %c0_92] : memref<1x32xf32, #tpu.memory_space<vmem>>, vector<1x32xf32>
    %244 = vector.broadcast %243 : vector<1x32xf32> to vector<8x32xf32>
    %245 = arith.addf %242, %244 : vector<8x32xf32>
    %cst_93 = arith.constant dense<0.000000e+00> : vector<32xf32>
    %246 = vector.multi_reduction <add>, %245, %cst_93 [0] : vector<8x32xf32> to vector<32xf32>
    %247 = vector.shape_cast %246 : vector<32xf32> to vector<1x32xf32>
    %cst_94 = arith.constant 8.000000e+00 : f32
    %248 = vector.broadcast %cst_94 : f32 to vector<1x32xf32>
    %249 = arith.divf %247, %248 : vector<1x32xf32>
    %250 = vector.shape_cast %249 : vector<1x32xf32> to vector<1x1x32xf32>
    %c0_95 = arith.constant 0 : index
    %c0_96 = arith.constant 0 : index
    %c0_97 = arith.constant 0 : index
    %251 = vector.load %arg26[%c0_95, %c0_96, %c0_97] : memref<1x1x32xf32, #tpu.memory_space<vmem>>, vector<1x1x32xf32>
    tpu.vector_store %arg26[%c0_95, %c0_96, %c0_97], %250 {strides = array<i32>} : memref<1x1x32xf32, #tpu.memory_space<vmem>>, vector<1x1x32xf32>,
    return
  }
  func.func @transform_0(%arg0: i32) -> (i32, i32, i32) {
    %c0_i32 = arith.constant 0 : i32
    %c0_i32_0 = arith.constant 0 : i32
    %c0_i32_1 = arith.constant 0 : i32
    return %arg0, %c0_i32, %c0_i32_0 : i32, i32, i32
  }
  func.func @transform_1(%arg0: i32) -> (i32, i32) {
    %c0_i32 = arith.constant 0 : i32
    %c0_i32_0 = arith.constant 0 : i32
    %c0_i32_1 = arith.constant 0 : i32
    return %c0_i32, %c0_i32_0 : i32, i32
  }
  func.func @transform_2(%arg0: i32) -> (i32, i32) {
    %c0_i32 = arith.constant 0 : i32
    %c0_i32_0 = arith.constant 0 : i32
    %c0_i32_1 = arith.constant 0 : i32
    return %c0_i32, %c0_i32_0 : i32, i32
  }
  func.func @transform_3(%arg0: i32) -> (i32, i32, i32) {
    %c0_i32 = arith.constant 0 : i32
    %c0_i32_0 = arith.constant 0 : i32
    %c0_i32_1 = arith.constant 0 : i32
    %c0_i32_2 = arith.constant 0 : i32
    return %c0_i32, %c0_i32_0, %c0_i32_1 : i32, i32, i32
  }
  func.func @transform_4(%arg0: i32) -> (i32, i32) {
    %c0_i32 = arith.constant 0 : i32
    %c0_i32_0 = arith.constant 0 : i32
    %c0_i32_1 = arith.constant 0 : i32
    return %c0_i32, %c0_i32_0 : i32, i32
  }
  func.func @transform_5(%arg0: i32) -> (i32, i32) {
    %c0_i32 = arith.constant 0 : i32
    %c0_i32_0 = arith.constant 0 : i32
    %c0_i32_1 = arith.constant 0 : i32
    return %c0_i32, %c0_i32_0 : i32, i32
  }
  func.func @transform_6(%arg0: i32) -> (i32, i32) {
    %c0_i32 = arith.constant 0 : i32
    %c0_i32_0 = arith.constant 0 : i32
    %c0_i32_1 = arith.constant 0 : i32
    return %c0_i32, %c0_i32_0 : i32, i32
  }
  func.func @transform_7(%arg0: i32) -> (i32, i32) {
    %c0_i32 = arith.constant 0 : i32
    %c0_i32_0 = arith.constant 0 : i32
    %c0_i32_1 = arith.constant 0 : i32
    return %c0_i32, %c0_i32_0 : i32, i32
  }
  func.func @transform_8(%arg0: i32) -> (i32, i32) {
    %c0_i32 = arith.constant 0 : i32
    %c0_i32_0 = arith.constant 0 : i32
    %c0_i32_1 = arith.constant 0 : i32
    return %c0_i32, %c0_i32_0 : i32, i32
  }
  func.func @transform_9(%arg0: i32) -> (i32, i32) {
    %c0_i32 = arith.constant 0 : i32
    %c0_i32_0 = arith.constant 0 : i32
    %c0_i32_1 = arith.constant 0 : i32
    return %c0_i32, %c0_i32_0 : i32, i32
  }
  func.func @transform_10(%arg0: i32) -> (i32, i32) {
    %c0_i32 = arith.constant 0 : i32
    %c0_i32_0 = arith.constant 0 : i32
    %c0_i32_1 = arith.constant 0 : i32
    return %c0_i32, %c0_i32_0 : i32, i32
  }
  func.func @transform_11(%arg0: i32) -> (i32, i32) {
    %c0_i32 = arith.constant 0 : i32
    %c0_i32_0 = arith.constant 0 : i32
    %c0_i32_1 = arith.constant 0 : i32
    return %c0_i32, %c0_i32_0 : i32, i32
  }
  func.func @transform_12(%arg0: i32) -> (i32, i32) {
    %c0_i32 = arith.constant 0 : i32
    %c0_i32_0 = arith.constant 0 : i32
    %c0_i32_1 = arith.constant 0 : i32
    return %c0_i32, %c0_i32_0 : i32, i32
  }
  func.func @transform_13(%arg0: i32) -> (i32, i32) {
    %c0_i32 = arith.constant 0 : i32
    %c0_i32_0 = arith.constant 0 : i32
    %c0_i32_1 = arith.constant 0 : i32
    return %c0_i32, %c0_i32_0 : i32, i32
  }
  func.func @transform_14(%arg0: i32) -> (i32, i32) {
    %c0_i32 = arith.constant 0 : i32
    %c0_i32_0 = arith.constant 0 : i32
    %c0_i32_1 = arith.constant 0 : i32
    return %c0_i32, %c0_i32_0 : i32, i32
  }
  func.func @transform_15(%arg0: i32) -> (i32, i32, i32) {
    %c0_i32 = arith.constant 0 : i32
    %c0_i32_0 = arith.constant 0 : i32
    %c0_i32_1 = arith.constant 0 : i32
    %c0_i32_2 = arith.constant 0 : i32
    return %c0_i32, %c0_i32_0, %c0_i32_1 : i32, i32, i32
  }
  func.func @transform_16(%arg0: i32) -> (i32, i32) {
    %c0_i32 = arith.constant 0 : i32
    %c0_i32_0 = arith.constant 0 : i32
    %c0_i32_1 = arith.constant 0 : i32
    return %c0_i32, %c0_i32_0 : i32, i32
  }
  func.func @transform_17(%arg0: i32) -> (i32, i32) {
    %c0_i32 = arith.constant 0 : i32
    %c0_i32_0 = arith.constant 0 : i32
    %c0_i32_1 = arith.constant 0 : i32
    return %c0_i32, %c0_i32_0 : i32, i32
  }
  func.func @transform_18(%arg0: i32) -> (i32, i32) {
    %c0_i32 = arith.constant 0 : i32
    %c0_i32_0 = arith.constant 0 : i32
    %c0_i32_1 = arith.constant 0 : i32
    return %c0_i32, %c0_i32_0 : i32, i32
  }
  func.func @transform_19(%arg0: i32) -> (i32, i32) {
    %c0_i32 = arith.constant 0 : i32
    %c0_i32_0 = arith.constant 0 : i32
    %c0_i32_1 = arith.constant 0 : i32
    return %c0_i32, %c0_i32_0 : i32, i32
  }
  func.func @transform_20(%arg0: i32) -> (i32, i32) {
    %c0_i32 = arith.constant 0 : i32
    %c0_i32_0 = arith.constant 0 : i32
    %c0_i32_1 = arith.constant 0 : i32
    return %c0_i32, %c0_i32_0 : i32, i32
  }
  func.func @transform_21(%arg0: i32) -> (i32, i32) {
    %c0_i32 = arith.constant 0 : i32
    %c0_i32_0 = arith.constant 0 : i32
    %c0_i32_1 = arith.constant 0 : i32
    return %c0_i32, %c0_i32_0 : i32, i32
  }
  func.func @transform_22(%arg0: i32) -> (i32, i32) {
    %c0_i32 = arith.constant 0 : i32
    %c0_i32_0 = arith.constant 0 : i32
    %c0_i32_1 = arith.constant 0 : i32
    return %c0_i32, %c0_i32_0 : i32, i32
  }
  func.func @transform_23(%arg0: i32) -> (i32, i32) {
    %c0_i32 = arith.constant 0 : i32
    %c0_i32_0 = arith.constant 0 : i32
    %c0_i32_1 = arith.constant 0 : i32
    return %c0_i32, %c0_i32_0 : i32, i32
  }
  func.func @transform_24(%arg0: i32) -> (i32, i32) {
    %c0_i32 = arith.constant 0 : i32
    %c0_i32_0 = arith.constant 0 : i32
    %c0_i32_1 = arith.constant 0 : i32
    return %c0_i32, %c0_i32_0 : i32, i32
  }
  func.func @transform_25(%arg0: i32) -> (i32, i32, i32) {
    %c0_i32 = arith.constant 0 : i32
    %c0_i32_0 = arith.constant 0 : i32
    %c0_i32_1 = arith.constant 0 : i32
    return %arg0, %c0_i32, %c0_i32_0 : i32, i32, i32
  }
}

</mosaic_0001>

<llo_original>
// kernel: transformer_encoder.1
$region0: #{transformer_encoder.1}
  #allocation0 [shape = 'u32[]', space=smem, size = 0x4, offset = 0x4, fixed_abs, tag = 'smem constant byte address 0x4 - core index']
  #allocation1 [shape = 'u32[144,128]{1,0:T(1,128)}', space=vmem, size = 0x12000, scoped, tag = 'internal scratch']
  %s0 = inlined_call_operand.vmem [shape: f32[2,8,32], index: 0, kind: input, shape index: {}]
  %s1 = inlined_call_operand.vmem [shape: bf16[32,96], index: 1, kind: input, shape index: {}]
  %s2 = inlined_call_operand.vmem [shape: f32[1,96], index: 2, kind: input, shape index: {}]
  %s3 = inlined_call_operand.vmem [shape: bf16[4,8,32], index: 3, kind: input, shape index: {}]
  %s4 = inlined_call_operand.vmem [shape: f32[1,32], index: 4, kind: input, shape index: {}]
  %s5 = inlined_call_operand.vmem [shape: f32[1,32], index: 5, kind: input, shape index: {}]
  %s6 = inlined_call_operand.vmem [shape: f32[1,32], index: 6, kind: input, shape index: {}]
  %s7 = inlined_call_operand.vmem [shape: f32[1,32], index: 7, kind: input, shape index: {}]
  %s8 = inlined_call_operand.vmem [shape: f32[1,32], index: 8, kind: input, shape index: {}]
  %s9 = inlined_call_operand.vmem [shape: bf16[32,2048], index: 9, kind: input, shape index: {}]
  %s10 = inlined_call_operand.vmem [shape: f32[1,2048], index: 10, kind: input, shape index: {}]
  %s11 = inlined_call_operand.vmem [shape: bf16[2048,32], index: 11, kind: input, shape index: {}]
  %s12 = inlined_call_operand.vmem [shape: f32[1,32], index: 12, kind: input, shape index: {}]
  %s13 = inlined_call_operand.vmem [shape: bf16[32,96], index: 13, kind: input, shape index: {}]
  %s14 = inlined_call_operand.vmem [shape: f32[1,96], index: 14, kind: input, shape index: {}]
  %s15 = inlined_call_operand.vmem [shape: bf16[4,8,32], index: 15, kind: input, shape index: {}]
  %s16 = inlined_call_operand.vmem [shape: f32[1,32], index: 16, kind: input, shape index: {}]
  %s17 = inlined_call_operand.vmem [shape: f32[1,32], index: 17, kind: input, shape index: {}]
  %s18 = inlined_call_operand.vmem [shape: f32[1,32], index: 18, kind: input, shape index: {}]
  %s19 = inlined_call_operand.vmem [shape: f32[1,32], index: 19, kind: input, shape index: {}]
  %s20 = inlined_call_operand.vmem [shape: f32[1,32], index: 20, kind: input, shape index: {}]
  %s21 = inlined_call_operand.vmem [shape: bf16[32,2048], index: 21, kind: input, shape index: {}]
  %s22 = inlined_call_operand.vmem [shape: f32[1,2048], index: 22, kind: input, shape index: {}]
  %s23 = inlined_call_operand.vmem [shape: bf16[2048,32], index: 23, kind: input, shape index: {}]
  %s24 = inlined_call_operand.vmem [shape: f32[1,32], index: 24, kind: input, shape index: {}]
  %s25 = inlined_call_operand.hbm [shape: f32[2,1,32], index: 25, kind: output, shape index: {}]
  %s26 = sld [smem:[#allocation0]]
  $region133: #{transformer_encoder.1} parent=0
    _
  %s28 = ssub.s32 1, %s26
  %s29 = scalar_select 0, %s28, %s26
  $region1: #{transformer_encoder.1} parent=0
    #allocation2 [shape = 'u8[1024]{0}', space=vmem, size = 0x400, scoped, tag = 'output window, operand 0']
    #allocation3 [shape = 's32[2]{0}', space=sflag, size = 0x8, scoped, tag = 'scoped memory for transformer_encoder.1']
    %30 = vsyncpa [#allocation3], 0
    %s31 = scalar_lea.sflag [#allocation3], 1
    %32 = vsyncpa %s31, 0
    loop: start=0, step=1, limit=4
    $region2: #{transformer_encoder.1} parent=1 // loop_pre_header
      _
    $region3: #{transformer_encoder.1} parent=1 // loop_header
      %s34 = sphi 0, %s38
      %p35 = scmp.ge.s32.totalorder %s34, 4
      %s44 = sphi 0, %s46
      %s47 = sphi 0, %s44
      %s48 = sphi 0, %s47
      %s64 = sphi 0, %s48
      %s68 = sphi 0, %s68
      %s70 = sphi 0, %s68
      %s71 = sphi 0, %s70
      %s85 = sphi 0, %s71
      %s89 = sphi 0, %s89
      %s91 = sphi 0, %s89
      %s92 = sphi 0, %s91
      %s106 = sphi 0, %s92
      %s110 = sphi 0, %s110
      %s112 = sphi 0, %s110
      %s113 = sphi 0, %s112
      %s127 = sphi 0, %s113
      %s131 = sphi 0, %s131
      %s133 = sphi 0, %s131
      %s134 = sphi 0, %s133
      %s148 = sphi 0, %s134
      %s152 = sphi 0, %s152
      %s154 = sphi 0, %s152
      %s155 = sphi 0, %s154
      %s169 = sphi 0, %s155
      %s173 = sphi 0, %s173
      %s175 = sphi 0, %s173
      %s176 = sphi 0, %s175
      %s190 = sphi 0, %s176
      %s194 = sphi 0, %s194
      %s196 = sphi 0, %s194
      %s197 = sphi 0, %s196
      %s211 = sphi 0, %s197
      %s215 = sphi 0, %s215
      %s217 = sphi 0, %s215
      %s218 = sphi 0, %s217
      %s232 = sphi 0, %s218
      %s236 = sphi 0, %s236
      %s238 = sphi 0, %s236
      %s239 = sphi 0, %s238
      %s253 = sphi 0, %s239
      %s257 = sphi 0, %s257
      %s259 = sphi 0, %s257
      %s260 = sphi 0, %s259
      %s274 = sphi 0, %s260
      %s278 = sphi 0, %s278
      %s280 = sphi 0, %s278
      %s281 = sphi 0, %s280
      %s295 = sphi 0, %s281
      %s299 = sphi 0, %s299
      %s301 = sphi 0, %s299
      %s302 = sphi 0, %s301
      %s316 = sphi 0, %s302
      %s320 = sphi 0, %s320
      %s322 = sphi 0, %s320
      %s323 = sphi 0, %s322
      %s337 = sphi 0, %s323
      %s341 = sphi 0, %s341
      %s343 = sphi 0, %s341
      %s344 = sphi 0, %s343
      %s358 = sphi 0, %s344
      %s362 = sphi 0, %s362
      %s364 = sphi 0, %s362
      %s365 = sphi 0, %s364
      %s379 = sphi 0, %s365
      %s383 = sphi 0, %s383
      %s385 = sphi 0, %s383
      %s386 = sphi 0, %s385
      %s400 = sphi 0, %s386
      %s404 = sphi 0, %s404
      %s406 = sphi 0, %s404
      %s407 = sphi 0, %s406
      %s421 = sphi 0, %s407
      %s425 = sphi 0, %s425
      %s427 = sphi 0, %s425
      %s428 = sphi 0, %s427
      %s442 = sphi 0, %s428
      %s446 = sphi 0, %s446
      %s448 = sphi 0, %s446
      %s449 = sphi 0, %s448
      %s463 = sphi 0, %s449
      %s467 = sphi 0, %s467
      %s469 = sphi 0, %s467
      %s470 = sphi 0, %s469
      %s484 = sphi 0, %s470
      %s488 = sphi 0, %s488
      %s490 = sphi 0, %s488
      %s491 = sphi 0, %s490
      %s505 = sphi 0, %s491
      %s509 = sphi 0, %s509
      %s511 = sphi 0, %s509
      %s512 = sphi 0, %s511
      %s526 = sphi 0, %s512
      %s530 = sphi 0, %s530
      %s532 = sphi 0, %s530
      %s533 = sphi 0, %s532
      %s547 = sphi 0, %s533
      %s551 = sphi 0, %s551
      %s553 = sphi 0, %s551
      %s554 = sphi 0, %s553
      %s568 = sphi 0, %s554
      %s574 = sphi 0, %s576
      %s577 = sphi 0, %s574
      %s578 = sphi 0, %s577
      %s594 = sphi 0, %s578
    $region4: #{transformer_encoder.1} parent=1 // loop_header_branch
      %37 = sbr.rel (%p35) target = $region8
    $region5: #{transformer_encoder.1} parent=1 // loop_body
      %s39 = ssub.s32 %s34, 1
      %s40 = ssub.s32 %s34, 2
      %s41 = sadd.s32 %s34, 1
      %s42 = ssub.s32 %s34, %s41
      %p43 = scmp.eq.s32.totalorder %s42, 0
      %s45 = sadd.s32 %s44, 1
      %s46 = scalar_select %p43, %s44, %s45
      %p49 = pneg %p43
      %p50 = scmp.eq.s32.totalorder %s34, 1
      %p51 = por %p49, %p50
      %p52 = scmp.ne.s32.totalorder %s44, %s47
      %p53 = scmp.eq.s32.totalorder %s34, 0
      %p54 = por %p52, %p53
      %p55 = scmp.ne.s32.totalorder %s44, %s47
      %p56 = scmp.eq.s32.totalorder %s39, 1
      %p57 = por %p55, %p56
      %p58 = scmp.ne.s32.totalorder %s47, %s48
      %p59 = scmp.eq.s32.totalorder %s39, 0
      %p60 = por %p58, %p59
      %p61 = scmp.ne.s32.totalorder %s47, %s48
      %p62 = scmp.eq.s32.totalorder %s40, 1
      %p63 = por %p61, %p62
      %p65 = scmp.ne.s32.totalorder %s48, %s64
      %p66 = scmp.eq.s32.totalorder %s40, 0
      %p67 = por %p65, %p66
      %s69 = sadd.s32 %s68, 1
      %p72 = scmp.eq.s32.totalorder %s34, 1
      %p73 = scmp.ne.s32.totalorder %s68, %s70
      %p74 = scmp.eq.s32.totalorder %s34, 0
      %p75 = por %p73, %p74
      %p76 = scmp.ne.s32.totalorder %s68, %s70
      %p77 = scmp.eq.s32.totalorder %s39, 1
      %p78 = por %p76, %p77
      %p79 = scmp.ne.s32.totalorder %s70, %s71
      %p80 = scmp.eq.s32.totalorder %s39, 0
      %p81 = por %p79, %p80
      %p82 = scmp.ne.s32.totalorder %s70, %s71
      %p83 = scmp.eq.s32.totalorder %s40, 1
      %p84 = por %p82, %p83
      %p86 = scmp.ne.s32.totalorder %s71, %s85
      %p87 = scmp.eq.s32.totalorder %s40, 0
      %p88 = por %p86, %p87
      %s90 = sadd.s32 %s89, 1
      %p93 = scmp.eq.s32.totalorder %s34, 1
      %p94 = scmp.ne.s32.totalorder %s89, %s91
      %p95 = scmp.eq.s32.totalorder %s34, 0
      %p96 = por %p94, %p95
      %p97 = scmp.ne.s32.totalorder %s89, %s91
      %p98 = scmp.eq.s32.totalorder %s39, 1
      %p99 = por %p97, %p98
      %p100 = scmp.ne.s32.totalorder %s91, %s92
      %p101 = scmp.eq.s32.totalorder %s39, 0
      %p102 = por %p100, %p101
      %p103 = scmp.ne.s32.totalorder %s91, %s92
      %p104 = scmp.eq.s32.totalorder %s40, 1
      %p105 = por %p103, %p104
      %p107 = scmp.ne.s32.totalorder %s92, %s106
      %p108 = scmp.eq.s32.totalorder %s40, 0
      %p109 = por %p107, %p108
      %s111 = sadd.s32 %s110, 1
      %p114 = scmp.eq.s32.totalorder %s34, 1
      %p115 = scmp.ne.s32.totalorder %s110, %s112
      %p116 = scmp.eq.s32.totalorder %s34, 0
      %p117 = por %p115, %p116
      %p118 = scmp.ne.s32.totalorder %s110, %s112
      %p119 = scmp.eq.s32.totalorder %s39, 1
      %p120 = por %p118, %p119
      %p121 = scmp.ne.s32.totalorder %s112, %s113
      %p122 = scmp.eq.s32.totalorder %s39, 0
      %p123 = por %p121, %p122
      %p124 = scmp.ne.s32.totalorder %s112, %s113
      %p125 = scmp.eq.s32.totalorder %s40, 1
      %p126 = por %p124, %p125
      %p128 = scmp.ne.s32.totalorder %s113, %s127
      %p129 = scmp.eq.s32.totalorder %s40, 0
      %p130 = por %p128, %p129
      %s132 = sadd.s32 %s131, 1
      %p135 = scmp.eq.s32.totalorder %s34, 1
      %p136 = scmp.ne.s32.totalorder %s131, %s133
      %p137 = scmp.eq.s32.totalorder %s34, 0
      %p138 = por %p136, %p137
      %p139 = scmp.ne.s32.totalorder %s131, %s133
      %p140 = scmp.eq.s32.totalorder %s39, 1
      %p141 = por %p139, %p140
      %p142 = scmp.ne.s32.totalorder %s133, %s134
      %p143 = scmp.eq.s32.totalorder %s39, 0
      %p144 = por %p142, %p143
      %p145 = scmp.ne.s32.totalorder %s133, %s134
      %p146 = scmp.eq.s32.totalorder %s40, 1
      %p147 = por %p145, %p146
      %p149 = scmp.ne.s32.totalorder %s134, %s148
      %p150 = scmp.eq.s32.totalorder %s40, 0
      %p151 = por %p149, %p150
      %s153 = sadd.s32 %s152, 1
      %p156 = scmp.eq.s32.totalorder %s34, 1
      %p157 = scmp.ne.s32.totalorder %s152, %s154
      %p158 = scmp.eq.s32.totalorder %s34, 0
      %p159 = por %p157, %p158
      %p160 = scmp.ne.s32.totalorder %s152, %s154
      %p161 = scmp.eq.s32.totalorder %s39, 1
      %p162 = por %p160, %p161
      %p163 = scmp.ne.s32.totalorder %s154, %s155
      %p164 = scmp.eq.s32.totalorder %s39, 0
      %p165 = por %p163, %p164
      %p166 = scmp.ne.s32.totalorder %s154, %s155
      %p167 = scmp.eq.s32.totalorder %s40, 1
      %p168 = por %p166, %p167
      %p170 = scmp.ne.s32.totalorder %s155, %s169
      %p171 = scmp.eq.s32.totalorder %s40, 0
      %p172 = por %p170, %p171
      %s174 = sadd.s32 %s173, 1
      %p177 = scmp.eq.s32.totalorder %s34, 1
      %p178 = scmp.ne.s32.totalorder %s173, %s175
      %p179 = scmp.eq.s32.totalorder %s34, 0
      %p180 = por %p178, %p179
      %p181 = scmp.ne.s32.totalorder %s173, %s175
      %p182 = scmp.eq.s32.totalorder %s39, 1
      %p183 = por %p181, %p182
      %p184 = scmp.ne.s32.totalorder %s175, %s176
      %p185 = scmp.eq.s32.totalorder %s39, 0
      %p186 = por %p184, %p185
      %p187 = scmp.ne.s32.totalorder %s175, %s176
      %p188 = scmp.eq.s32.totalorder %s40, 1
      %p189 = por %p187, %p188
      %p191 = scmp.ne.s32.totalorder %s176, %s190
      %p192 = scmp.eq.s32.totalorder %s40, 0
      %p193 = por %p191, %p192
      %s195 = sadd.s32 %s194, 1
      %p198 = scmp.eq.s32.totalorder %s34, 1
      %p199 = scmp.ne.s32.totalorder %s194, %s196
      %p200 = scmp.eq.s32.totalorder %s34, 0
      %p201 = por %p199, %p200
      %p202 = scmp.ne.s32.totalorder %s194, %s196
      %p203 = scmp.eq.s32.totalorder %s39, 1
      %p204 = por %p202, %p203
      %p205 = scmp.ne.s32.totalorder %s196, %s197
      %p206 = scmp.eq.s32.totalorder %s39, 0
      %p207 = por %p205, %p206
      %p208 = scmp.ne.s32.totalorder %s196, %s197
      %p209 = scmp.eq.s32.totalorder %s40, 1
      %p210 = por %p208, %p209
      %p212 = scmp.ne.s32.totalorder %s197, %s211
      %p213 = scmp.eq.s32.totalorder %s40, 0
      %p214 = por %p212, %p213
      %s216 = sadd.s32 %s215, 1
      %p219 = scmp.eq.s32.totalorder %s34, 1
      %p220 = scmp.ne.s32.totalorder %s215, %s217
      %p221 = scmp.eq.s32.totalorder %s34, 0
      %p222 = por %p220, %p221
      %p223 = scmp.ne.s32.totalorder %s215, %s217
      %p224 = scmp.eq.s32.totalorder %s39, 1
      %p225 = por %p223, %p224
      %p226 = scmp.ne.s32.totalorder %s217, %s218
      %p227 = scmp.eq.s32.totalorder %s39, 0
      %p228 = por %p226, %p227
      %p229 = scmp.ne.s32.totalorder %s217, %s218
      %p230 = scmp.eq.s32.totalorder %s40, 1
      %p231 = por %p229, %p230
      %p233 = scmp.ne.s32.totalorder %s218, %s232
      %p234 = scmp.eq.s32.totalorder %s40, 0
      %p235 = por %p233, %p234
      %s237 = sadd.s32 %s236, 1
      %p240 = scmp.eq.s32.totalorder %s34, 1
      %p241 = scmp.ne.s32.totalorder %s236, %s238
      %p242 = scmp.eq.s32.totalorder %s34, 0
      %p243 = por %p241, %p242
      %p244 = scmp.ne.s32.totalorder %s236, %s238
      %p245 = scmp.eq.s32.totalorder %s39, 1
      %p246 = por %p244, %p245
      %p247 = scmp.ne.s32.totalorder %s238, %s239
      %p248 = scmp.eq.s32.totalorder %s39, 0
      %p249 = por %p247, %p248
      %p250 = scmp.ne.s32.totalorder %s238, %s239
      %p251 = scmp.eq.s32.totalorder %s40, 1
      %p252 = por %p250, %p251
      %p254 = scmp.ne.s32.totalorder %s239, %s253
      %p255 = scmp.eq.s32.totalorder %s40, 0
      %p256 = por %p254, %p255
      %s258 = sadd.s32 %s257, 1
      %p261 = scmp.eq.s32.totalorder %s34, 1
      %p262 = scmp.ne.s32.totalorder %s257, %s259
      %p263 = scmp.eq.s32.totalorder %s34, 0
      %p264 = por %p262, %p263
      %p265 = scmp.ne.s32.totalorder %s257, %s259
      %p266 = scmp.eq.s32.totalorder %s39, 1
      %p267 = por %p265, %p266
      %p268 = scmp.ne.s32.totalorder %s259, %s260
      %p269 = scmp.eq.s32.totalorder %s39, 0
      %p270 = por %p268, %p269
      %p271 = scmp.ne.s32.totalorder %s259, %s260
      %p272 = scmp.eq.s32.totalorder %s40, 1
      %p273 = por %p271, %p272
      %p275 = scmp.ne.s32.totalorder %s260, %s274
      %p276 = scmp.eq.s32.totalorder %s40, 0
      %p277 = por %p275, %p276
      %s279 = sadd.s32 %s278, 1
      %p282 = scmp.eq.s32.totalorder %s34, 1
      %p283 = scmp.ne.s32.totalorder %s278, %s280
      %p284 = scmp.eq.s32.totalorder %s34, 0
      %p285 = por %p283, %p284
      %p286 = scmp.ne.s32.totalorder %s278, %s280
      %p287 = scmp.eq.s32.totalorder %s39, 1
      %p288 = por %p286, %p287
      %p289 = scmp.ne.s32.totalorder %s280, %s281
      %p290 = scmp.eq.s32.totalorder %s39, 0
      %p291 = por %p289, %p290
      %p292 = scmp.ne.s32.totalorder %s280, %s281
      %p293 = scmp.eq.s32.totalorder %s40, 1
      %p294 = por %p292, %p293
      %p296 = scmp.ne.s32.totalorder %s281, %s295
      %p297 = scmp.eq.s32.totalorder %s40, 0
      %p298 = por %p296, %p297
      %s300 = sadd.s32 %s299, 1
      %p303 = scmp.eq.s32.totalorder %s34, 1
      %p304 = scmp.ne.s32.totalorder %s299, %s301
      %p305 = scmp.eq.s32.totalorder %s34, 0
      %p306 = por %p304, %p305
      %p307 = scmp.ne.s32.totalorder %s299, %s301
      %p308 = scmp.eq.s32.totalorder %s39, 1
      %p309 = por %p307, %p308
      %p310 = scmp.ne.s32.totalorder %s301, %s302
      %p311 = scmp.eq.s32.totalorder %s39, 0
      %p312 = por %p310, %p311
      %p313 = scmp.ne.s32.totalorder %s301, %s302
      %p314 = scmp.eq.s32.totalorder %s40, 1
      %p315 = por %p313, %p314
      %p317 = scmp.ne.s32.totalorder %s302, %s316
      %p318 = scmp.eq.s32.totalorder %s40, 0
      %p319 = por %p317, %p318
      %s321 = sadd.s32 %s320, 1
      %p324 = scmp.eq.s32.totalorder %s34, 1
      %p325 = scmp.ne.s32.totalorder %s320, %s322
      %p326 = scmp.eq.s32.totalorder %s34, 0
      %p327 = por %p325, %p326
      %p328 = scmp.ne.s32.totalorder %s320, %s322
      %p329 = scmp.eq.s32.totalorder %s39, 1
      %p330 = por %p328, %p329
      %p331 = scmp.ne.s32.totalorder %s322, %s323
      %p332 = scmp.eq.s32.totalorder %s39, 0
      %p333 = por %p331, %p332
      %p334 = scmp.ne.s32.totalorder %s322, %s323
      %p335 = scmp.eq.s32.totalorder %s40, 1
      %p336 = por %p334, %p335
      %p338 = scmp.ne.s32.totalorder %s323, %s337
      %p339 = scmp.eq.s32.totalorder %s40, 0
      %p340 = por %p338, %p339
      %s342 = sadd.s32 %s341, 1
      %p345 = scmp.eq.s32.totalorder %s34, 1
      %p346 = scmp.ne.s32.totalorder %s341, %s343
      %p347 = scmp.eq.s32.totalorder %s34, 0
      %p348 = por %p346, %p347
      %p349 = scmp.ne.s32.totalorder %s341, %s343
      %p350 = scmp.eq.s32.totalorder %s39, 1
      %p351 = por %p349, %p350
      %p352 = scmp.ne.s32.totalorder %s343, %s344
      %p353 = scmp.eq.s32.totalorder %s39, 0
      %p354 = por %p352, %p353
      %p355 = scmp.ne.s32.totalorder %s343, %s344
      %p356 = scmp.eq.s32.totalorder %s40, 1
      %p357 = por %p355, %p356
      %p359 = scmp.ne.s32.totalorder %s344, %s358
      %p360 = scmp.eq.s32.totalorder %s40, 0
      %p361 = por %p359, %p360
      %s363 = sadd.s32 %s362, 1
      %p366 = scmp.eq.s32.totalorder %s34, 1
      %p367 = scmp.ne.s32.totalorder %s362, %s364
      %p368 = scmp.eq.s32.totalorder %s34, 0
      %p369 = por %p367, %p368
      %p370 = scmp.ne.s32.totalorder %s362, %s364
      %p371 = scmp.eq.s32.totalorder %s39, 1
      %p372 = por %p370, %p371
      %p373 = scmp.ne.s32.totalorder %s364, %s365
      %p374 = scmp.eq.s32.totalorder %s39, 0
      %p375 = por %p373, %p374
      %p376 = scmp.ne.s32.totalorder %s364, %s365
      %p377 = scmp.eq.s32.totalorder %s40, 1
      %p378 = por %p376, %p377
      %p380 = scmp.ne.s32.totalorder %s365, %s379
      %p381 = scmp.eq.s32.totalorder %s40, 0
      %p382 = por %p380, %p381
      %s384 = sadd.s32 %s383, 1
      %p387 = scmp.eq.s32.totalorder %s34, 1
      %p388 = scmp.ne.s32.totalorder %s383, %s385
      %p389 = scmp.eq.s32.totalorder %s34, 0
      %p390 = por %p388, %p389
      %p391 = scmp.ne.s32.totalorder %s383, %s385
      %p392 = scmp.eq.s32.totalorder %s39, 1
      %p393 = por %p391, %p392
      %p394 = scmp.ne.s32.totalorder %s385, %s386
      %p395 = scmp.eq.s32.totalorder %s39, 0
      %p396 = por %p394, %p395
      %p397 = scmp.ne.s32.totalorder %s385, %s386
      %p398 = scmp.eq.s32.totalorder %s40, 1
      %p399 = por %p397, %p398
      %p401 = scmp.ne.s32.totalorder %s386, %s400
      %p402 = scmp.eq.s32.totalorder %s40, 0
      %p403 = por %p401, %p402
      %s405 = sadd.s32 %s404, 1
      %p408 = scmp.eq.s32.totalorder %s34, 1
      %p409 = scmp.ne.s32.totalorder %s404, %s406
      %p410 = scmp.eq.s32.totalorder %s34, 0
      %p411 = por %p409, %p410
      %p412 = scmp.ne.s32.totalorder %s404, %s406
      %p413 = scmp.eq.s32.totalorder %s39, 1
      %p414 = por %p412, %p413
      %p415 = scmp.ne.s32.totalorder %s406, %s407
      %p416 = scmp.eq.s32.totalorder %s39, 0
      %p417 = por %p415, %p416
      %p418 = scmp.ne.s32.totalorder %s406, %s407
      %p419 = scmp.eq.s32.totalorder %s40, 1
      %p420 = por %p418, %p419
      %p422 = scmp.ne.s32.totalorder %s407, %s421
      %p423 = scmp.eq.s32.totalorder %s40, 0
      %p424 = por %p422, %p423
      %s426 = sadd.s32 %s425, 1
      %p429 = scmp.eq.s32.totalorder %s34, 1
      %p430 = scmp.ne.s32.totalorder %s425, %s427
      %p431 = scmp.eq.s32.totalorder %s34, 0
      %p432 = por %p430, %p431
      %p433 = scmp.ne.s32.totalorder %s425, %s427
      %p434 = scmp.eq.s32.totalorder %s39, 1
      %p435 = por %p433, %p434
      %p436 = scmp.ne.s32.totalorder %s427, %s428
      %p437 = scmp.eq.s32.totalorder %s39, 0
      %p438 = por %p436, %p437
      %p439 = scmp.ne.s32.totalorder %s427, %s428
      %p440 = scmp.eq.s32.totalorder %s40, 1
      %p441 = por %p439, %p440
      %p443 = scmp.ne.s32.totalorder %s428, %s442
      %p444 = scmp.eq.s32.totalorder %s40, 0
      %p445 = por %p443, %p444
      %s447 = sadd.s32 %s446, 1
      %p450 = scmp.eq.s32.totalorder %s34, 1
      %p451 = scmp.ne.s32.totalorder %s446, %s448
      %p452 = scmp.eq.s32.totalorder %s34, 0
      %p453 = por %p451, %p452
      %p454 = scmp.ne.s32.totalorder %s446, %s448
      %p455 = scmp.eq.s32.totalorder %s39, 1
      %p456 = por %p454, %p455
      %p457 = scmp.ne.s32.totalorder %s448, %s449
      %p458 = scmp.eq.s32.totalorder %s39, 0
      %p459 = por %p457, %p458
      %p460 = scmp.ne.s32.totalorder %s448, %s449
      %p461 = scmp.eq.s32.totalorder %s40, 1
      %p462 = por %p460, %p461
      %p464 = scmp.ne.s32.totalorder %s449, %s463
      %p465 = scmp.eq.s32.totalorder %s40, 0
      %p466 = por %p464, %p465
      %s468 = sadd.s32 %s467, 1
      %p471 = scmp.eq.s32.totalorder %s34, 1
      %p472 = scmp.ne.s32.totalorder %s467, %s469
      %p473 = scmp.eq.s32.totalorder %s34, 0
      %p474 = por %p472, %p473
      %p475 = scmp.ne.s32.totalorder %s467, %s469
      %p476 = scmp.eq.s32.totalorder %s39, 1
      %p477 = por %p475, %p476
      %p478 = scmp.ne.s32.totalorder %s469, %s470
      %p479 = scmp.eq.s32.totalorder %s39, 0
      %p480 = por %p478, %p479
      %p481 = scmp.ne.s32.totalorder %s469, %s470
      %p482 = scmp.eq.s32.totalorder %s40, 1
      %p483 = por %p481, %p482
      %p485 = scmp.ne.s32.totalorder %s470, %s484
      %p486 = scmp.eq.s32.totalorder %s40, 0
      %p487 = por %p485, %p486
      %s489 = sadd.s32 %s488, 1
      %p492 = scmp.eq.s32.totalorder %s34, 1
      %p493 = scmp.ne.s32.totalorder %s488, %s490
      %p494 = scmp.eq.s32.totalorder %s34, 0
      %p495 = por %p493, %p494
      %p496 = scmp.ne.s32.totalorder %s488, %s490
      %p497 = scmp.eq.s32.totalorder %s39, 1
      %p498 = por %p496, %p497
      %p499 = scmp.ne.s32.totalorder %s490, %s491
      %p500 = scmp.eq.s32.totalorder %s39, 0
      %p501 = por %p499, %p500
      %p502 = scmp.ne.s32.totalorder %s490, %s491
      %p503 = scmp.eq.s32.totalorder %s40, 1
      %p504 = por %p502, %p503
      %p506 = scmp.ne.s32.totalorder %s491, %s505
      %p507 = scmp.eq.s32.totalorder %s40, 0
      %p508 = por %p506, %p507
      %s510 = sadd.s32 %s509, 1
      %p513 = scmp.eq.s32.totalorder %s34, 1
      %p514 = scmp.ne.s32.totalorder %s509, %s511
      %p515 = scmp.eq.s32.totalorder %s34, 0
      %p516 = por %p514, %p515
      %p517 = scmp.ne.s32.totalorder %s509, %s511
      %p518 = scmp.eq.s32.totalorder %s39, 1
      %p519 = por %p517, %p518
      %p520 = scmp.ne.s32.totalorder %s511, %s512
      %p521 = scmp.eq.s32.totalorder %s39, 0
      %p522 = por %p520, %p521
      %p523 = scmp.ne.s32.totalorder %s511, %s512
      %p524 = scmp.eq.s32.totalorder %s40, 1
      %p525 = por %p523, %p524
      %p527 = scmp.ne.s32.totalorder %s512, %s526
      %p528 = scmp.eq.s32.totalorder %s40, 0
      %p529 = por %p527, %p528
      %s531 = sadd.s32 %s530, 1
      %p534 = scmp.eq.s32.totalorder %s34, 1
      %p535 = scmp.ne.s32.totalorder %s530, %s532
      %p536 = scmp.eq.s32.totalorder %s34, 0
      %p537 = por %p535, %p536
      %p538 = scmp.ne.s32.totalorder %s530, %s532
      %p539 = scmp.eq.s32.totalorder %s39, 1
      %p540 = por %p538, %p539
      %p541 = scmp.ne.s32.totalorder %s532, %s533
      %p542 = scmp.eq.s32.totalorder %s39, 0
      %p543 = por %p541, %p542
      %p544 = scmp.ne.s32.totalorder %s532, %s533
      %p545 = scmp.eq.s32.totalorder %s40, 1
      %p546 = por %p544, %p545
      %p548 = scmp.ne.s32.totalorder %s533, %s547
      %p549 = scmp.eq.s32.totalorder %s40, 0
      %p550 = por %p548, %p549
      %s552 = sadd.s32 %s551, 1
      %p555 = scmp.eq.s32.totalorder %s34, 1
      %p556 = scmp.ne.s32.totalorder %s551, %s553
      %p557 = scmp.eq.s32.totalorder %s34, 0
      %p558 = por %p556, %p557
      %p559 = scmp.ne.s32.totalorder %s551, %s553
      %p560 = scmp.eq.s32.totalorder %s39, 1
      %p561 = por %p559, %p560
      %p562 = scmp.ne.s32.totalorder %s553, %s554
      %p563 = scmp.eq.s32.totalorder %s39, 0
      %p564 = por %p562, %p563
      %p565 = scmp.ne.s32.totalorder %s553, %s554
      %p566 = scmp.eq.s32.totalorder %s40, 1
      %p567 = por %p565, %p566
      %p569 = scmp.ne.s32.totalorder %s554, %s568
      %p570 = scmp.eq.s32.totalorder %s40, 0
      %p571 = por %p569, %p570
      %s572 = ssub.s32 %s34, %s41
      %p573 = scmp.eq.s32.totalorder %s572, 0
      %s575 = sadd.s32 %s574, 1
      %s576 = scalar_select %p573, %s574, %s575
      %p579 = pneg %p573
      %p580 = scmp.eq.s32.totalorder %s34, 1
      %p581 = por %p579, %p580
      %p582 = scmp.ne.s32.totalorder %s574, %s577
      %p583 = scmp.eq.s32.totalorder %s34, 0
      %p584 = por %p582, %p583
      %p585 = scmp.ne.s32.totalorder %s574, %s577
      %p586 = scmp.eq.s32.totalorder %s39, 1
      %p587 = por %p585, %p586
      %p588 = scmp.ne.s32.totalorder %s577, %s578
      %p589 = scmp.eq.s32.totalorder %s39, 0
      %p590 = por %p588, %p589
      %p591 = scmp.ne.s32.totalorder %s577, %s578
      %p592 = scmp.eq.s32.totalorder %s40, 1
      %p593 = por %p591, %p592
      %p595 = scmp.ne.s32.totalorder %s578, %s594
      %p596 = scmp.eq.s32.totalorder %s40, 0
      %p597 = por %p595, %p596
      %p598 = scmp.le.s32.totalorder 1, %s34
      %p599 = scmp.lt.s32.totalorder %s34, 3
      %p600 = pnand %p598, %p599
      %p601 = pneg %p600
      // Predicated region
      $region9: #{transformer_encoder.1} parent=5 // pred_check
        _
      $region10: #{transformer_encoder.1} parent=5 // pred_check_branch
        %603 = sbr.rel (%p600) target = $region12
      $region11: #{transformer_encoder.1} parent=5 // pred_region
        %s604 = ssub.s32 %s34, 1
        // Predicated region
        $region13: #{transformer_encoder.1} parent=11 // pred_check
          %p605 = pneg %p81
        $region14: #{transformer_encoder.1} parent=11 // pred_check_branch
          %607 = sbr.rel (%p605) target = $region16
        $region15: #{transformer_encoder.1} parent=11 // pred_region
          _
        $region16: #{transformer_encoder.1} parent=11 // pred_fallthru
          _
        // Predicated region
        $region17: #{transformer_encoder.1} parent=11 // pred_check
          %p608 = pneg %p102
        $region18: #{transformer_encoder.1} parent=11 // pred_check_branch
          %610 = sbr.rel (%p608) target = $region20
        $region19: #{transformer_encoder.1} parent=11 // pred_region
          _
        $region20: #{transformer_encoder.1} parent=11 // pred_fallthru
          _
        // Predicated region
        $region21: #{transformer_encoder.1} parent=11 // pred_check
          %p611 = pneg %p123
        $region22: #{transformer_encoder.1} parent=11 // pred_check_branch
          %613 = sbr.rel (%p611) target = $region24
        $region23: #{transformer_encoder.1} parent=11 // pred_region
          _
        $region24: #{transformer_encoder.1} parent=11 // pred_fallthru
          _
        // Predicated region
        $region25: #{transformer_encoder.1} parent=11 // pred_check
          %p614 = pneg %p144
        $region26: #{transformer_encoder.1} parent=11 // pred_check_branch
          %616 = sbr.rel (%p614) target = $region28
        $region27: #{transformer_encoder.1} parent=11 // pred_region
          _
        $region28: #{transformer_encoder.1} parent=11 // pred_fallthru
          _
        // Predicated region
        $region29: #{transformer_encoder.1} parent=11 // pred_check
          %p617 = pneg %p165
        $region30: #{transformer_encoder.1} parent=11 // pred_check_branch
          %619 = sbr.rel (%p617) target = $region32
        $region31: #{transformer_encoder.1} parent=11 // pred_region
          _
        $region32: #{transformer_encoder.1} parent=11 // pred_fallthru
          _
        // Predicated region
        $region33: #{transformer_encoder.1} parent=11 // pred_check
          %p620 = pneg %p186
        $region34: #{transformer_encoder.1} parent=11 // pred_check_branch
          %622 = sbr.rel (%p620) target = $region36
        $region35: #{transformer_encoder.1} parent=11 // pred_region
          _
        $region36: #{transformer_encoder.1} parent=11 // pred_fallthru
          _
        // Predicated region
        $region37: #{transformer_encoder.1} parent=11 // pred_check
          %p623 = pneg %p207
        $region38: #{transformer_encoder.1} parent=11 // pred_check_branch
          %625 = sbr.rel (%p623) target = $region40
        $region39: #{transformer_encoder.1} parent=11 // pred_region
          _
        $region40: #{transformer_encoder.1} parent=11 // pred_fallthru
          _
        // Predicated region
        $region41: #{transformer_encoder.1} parent=11 // pred_check
          %p626 = pneg %p228
        $region42: #{transformer_encoder.1} parent=11 // pred_check_branch
          %628 = sbr.rel (%p626) target = $region44
        $region43: #{transformer_encoder.1} parent=11 // pred_region
          _
        $region44: #{transformer_encoder.1} parent=11 // pred_fallthru
          _
        // Predicated region
        $region45: #{transformer_encoder.1} parent=11 // pred_check
          %p629 = pneg %p249
        $region46: #{transformer_encoder.1} parent=11 // pred_check_branch
          %631 = sbr.rel (%p629) target = $region48
        $region47: #{transformer_encoder.1} parent=11 // pred_region
          _
        $region48: #{transformer_encoder.1} parent=11 // pred_fallthru
          _
        // Predicated region
        $region49: #{transformer_encoder.1} parent=11 // pred_check
          %p632 = pneg %p270
        $region50: #{transformer_encoder.1} parent=11 // pred_check_branch
          %634 = sbr.rel (%p632) target = $region52
        $region51: #{transformer_encoder.1} parent=11 // pred_region
          _
        $region52: #{transformer_encoder.1} parent=11 // pred_fallthru
          _
        // Predicated region
        $region53: #{transformer_encoder.1} parent=11 // pred_check
          %p635 = pneg %p291
        $region54: #{transformer_encoder.1} parent=11 // pred_check_branch
          %637 = sbr.rel (%p635) target = $region56
        $region55: #{transformer_encoder.1} parent=11 // pred_region
          _
        $region56: #{transformer_encoder.1} parent=11 // pred_fallthru
          _
        // Predicated region
        $region57: #{transformer_encoder.1} parent=11 // pred_check
          %p638 = pneg %p312
        $region58: #{transformer_encoder.1} parent=11 // pred_check_branch
          %640 = sbr.rel (%p638) target = $region60
        $region59: #{transformer_encoder.1} parent=11 // pred_region
          _
        $region60: #{transformer_encoder.1} parent=11 // pred_fallthru
          _
        // Predicated region
        $region61: #{transformer_encoder.1} parent=11 // pred_check
          %p641 = pneg %p333
        $region62: #{transformer_encoder.1} parent=11 // pred_check_branch
          %643 = sbr.rel (%p641) target = $region64
        $region63: #{transformer_encoder.1} parent=11 // pred_region
          _
        $region64: #{transformer_encoder.1} parent=11 // pred_fallthru
          _
        // Predicated region
        $region65: #{transformer_encoder.1} parent=11 // pred_check
          %p644 = pneg %p354
        $region66: #{transformer_encoder.1} parent=11 // pred_check_branch
          %646 = sbr.rel (%p644) target = $region68
        $region67: #{transformer_encoder.1} parent=11 // pred_region
          _
        $region68: #{transformer_encoder.1} parent=11 // pred_fallthru
          _
        // Predicated region
        $region69: #{transformer_encoder.1} parent=11 // pred_check
          %p647 = pneg %p375
        $region70: #{transformer_encoder.1} parent=11 // pred_check_branch
          %649 = sbr.rel (%p647) target = $region72
        $region71: #{transformer_encoder.1} parent=11 // pred_region
          _
        $region72: #{transformer_encoder.1} parent=11 // pred_fallthru
          _
        // Predicated region
        $region73: #{transformer_encoder.1} parent=11 // pred_check
          %p650 = pneg %p396
        $region74: #{transformer_encoder.1} parent=11 // pred_check_branch
          %652 = sbr.rel (%p650) target = $region76
        $region75: #{transformer_encoder.1} parent=11 // pred_region
          _
        $region76: #{transformer_encoder.1} parent=11 // pred_fallthru
          _
        // Predicated region
        $region77: #{transformer_encoder.1} parent=11 // pred_check
          %p653 = pneg %p417
        $region78: #{transformer_encoder.1} parent=11 // pred_check_branch
          %655 = sbr.rel (%p653) target = $region80
        $region79: #{transformer_encoder.1} parent=11 // pred_region
          _
        $region80: #{transformer_encoder.1} parent=11 // pred_fallthru
          _
        // Predicated region
        $region81: #{transformer_encoder.1} parent=11 // pred_check
          %p656 = pneg %p438
        $region82: #{transformer_encoder.1} parent=11 // pred_check_branch
          %658 = sbr.rel (%p656) target = $region84
        $region83: #{transformer_encoder.1} parent=11 // pred_region
          _
        $region84: #{transformer_encoder.1} parent=11 // pred_fallthru
          _
        // Predicated region
        $region85: #{transformer_encoder.1} parent=11 // pred_check
          %p659 = pneg %p459
        $region86: #{transformer_encoder.1} parent=11 // pred_check_branch
          %661 = sbr.rel (%p659) target = $region88
        $region87: #{transformer_encoder.1} parent=11 // pred_region
          _
        $region88: #{transformer_encoder.1} parent=11 // pred_fallthru
          _
        // Predicated region
        $region89: #{transformer_encoder.1} parent=11 // pred_check
          %p662 = pneg %p480
        $region90: #{transformer_encoder.1} parent=11 // pred_check_branch
          %664 = sbr.rel (%p662) target = $region92
        $region91: #{transformer_encoder.1} parent=11 // pred_region
          _
        $region92: #{transformer_encoder.1} parent=11 // pred_fallthru
          _
        // Predicated region
        $region93: #{transformer_encoder.1} parent=11 // pred_check
          %p665 = pneg %p501
        $region94: #{transformer_encoder.1} parent=11 // pred_check_branch
          %667 = sbr.rel (%p665) target = $region96
        $region95: #{transformer_encoder.1} parent=11 // pred_region
          _
        $region96: #{transformer_encoder.1} parent=11 // pred_fallthru
          _
        // Predicated region
        $region97: #{transformer_encoder.1} parent=11 // pred_check
          %p668 = pneg %p522
        $region98: #{transformer_encoder.1} parent=11 // pred_check_branch
          %670 = sbr.rel (%p668) target = $region100
        $region99: #{transformer_encoder.1} parent=11 // pred_region
          _
        $region100: #{transformer_encoder.1} parent=11 // pred_fallthru
          _
        // Predicated region
        $region101: #{transformer_encoder.1} parent=11 // pred_check
          %p671 = pneg %p543
        $region102: #{transformer_encoder.1} parent=11 // pred_check_branch
          %673 = sbr.rel (%p671) target = $region104
        $region103: #{transformer_encoder.1} parent=11 // pred_region
          _
        $region104: #{transformer_encoder.1} parent=11 // pred_fallthru
          _
        // Predicated region
        $region105: #{transformer_encoder.1} parent=11 // pred_check
          %p674 = pneg %p564
        $region106: #{transformer_encoder.1} parent=11 // pred_check_branch
          %676 = sbr.rel (%p674) target = $region108
        $region107: #{transformer_encoder.1} parent=11 // pred_region
          _
        $region108: #{transformer_encoder.1} parent=11 // pred_fallthru
          _
      $region12: #{transformer_encoder.1} parent=5 // pred_fallthru
        _
      %p677 = scmp.lt.s32.totalorder %s34, 2
      // Predicated region
      $region109: #{transformer_encoder.1} parent=5 // pred_check
        %p678 = pneg %p677
      $region110: #{transformer_encoder.1} parent=5 // pred_check_branch
        %680 = sbr.rel (%p678) target = $region112
      $region111: #{transformer_encoder.1} parent=5 // pred_region
        // Predicated region
        $region113: #{transformer_encoder.1} parent=111 // pred_check
          %p681 = pneg %p54
        $region114: #{transformer_encoder.1} parent=111 // pred_check_branch
          %683 = sbr.rel (%p681) target = $region116
        $region115: #{transformer_encoder.1} parent=111 // pred_region
          %p684 = scmp.lt.s32.totalorder %s34, 1
          %s685 = scalar_select %p684, %s34, 1
          %s686 = smul.addr %s685, 8
          %s687 = scalar_lea.vmem %s0, %s686
        $region116: #{transformer_encoder.1} parent=111 // pred_fallthru
          _
      $region112: #{transformer_encoder.1} parent=5 // pred_fallthru
        _
      %p688 = scmp.le.s32.totalorder 1, %s34
      %p689 = scmp.lt.s32.totalorder %s34, 3
      %p690 = pnand %p688, %p689
      %p691 = pneg %p690
      // Predicated region
      $region117: #{transformer_encoder.1} parent=5 // pred_check
        _
      $region118: #{transformer_encoder.1} parent=5 // pred_check_branch
        %693 = sbr.rel (%p690) target = $region120
      $region119: #{transformer_encoder.1} parent=5 // pred_region
        %s694 = ssub.s32 %s34, 1
        %p695 = scmp.lt.s32.totalorder %s39, 1
        %s696 = scalar_select %p695, %s39, 1
        %s697 = smul.addr %s696, 8
        %s698 = scalar_lea.vmem %s0, %s697
        %p699 = pneg %p60
        %p700 = pneg %p57
        %p701 = pneg %p81
        %p702 = pneg %p78
        %p703 = pneg %p102
        %p704 = pneg %p99
        %p705 = pneg %p123
        %p706 = pneg %p120
        %p707 = pneg %p144
        %p708 = pneg %p141
        %p709 = pneg %p165
        %p710 = pneg %p162
        %p711 = pneg %p186
        %p712 = pneg %p183
        %p713 = pneg %p207
        %p714 = pneg %p204
        %p715 = pneg %p228
        %p716 = pneg %p225
        %p717 = pneg %p249
        %p718 = pneg %p246
        %p719 = pneg %p270
        %p720 = pneg %p267
        %p721 = pneg %p291
        %p722 = pneg %p288
        %p723 = pneg %p312
        %p724 = pneg %p309
        %p725 = pneg %p333
        %p726 = pneg %p330
        %p727 = pneg %p354
        %p728 = pneg %p351
        %p729 = pneg %p375
        %p730 = pneg %p372
        %p731 = pneg %p396
        %p732 = pneg %p393
        %p733 = pneg %p417
        %p734 = pneg %p414
        %p735 = pneg %p438
        %p736 = pneg %p435
        %p737 = pneg %p459
        %p738 = pneg %p456
        %p739 = pneg %p480
        %p740 = pneg %p477
        %p741 = pneg %p501
        %p742 = pneg %p498
        %p743 = pneg %p522
        %p744 = pneg %p519
        %p745 = pneg %p543
        %p746 = pneg %p540
        %p747 = pneg %p564
        %p748 = pneg %p561
        %p749 = pneg %p590
        %p750 = pneg %p587
        %s751 = sand.u32 %s577, 1
        %s752 = scalar_lea.sflag [#allocation3], %s751
        %s753 = sand.u32 %s577, 1
        %s754 = scalar_lea.vmem [#allocation2], %s753
        %p755 = scmp.lt.s32.totalorder %s39, 1
        %s756 = scalar_select %p755, %s39, 1
        %s757 = smul.addr %s756, 8
        %s758 = scalar_lea.vmem %s0, %s757
        %v760 = vld [vmem:[%s758] sm:$0xff]
        %v761 = vpack.c.bf16 %v760, %v760
        %v762 = vld [vmem:[%s1] sm:$0xf]
        %v763 = vld [vmem:[%s1 + $0x4] sm:$0xf]
        %v764 = vld [vmem:[%s1 + $0x8] sm:$0xf]
        %v765 = vld [vmem:[%s1 + $0xc] sm:$0xf]
        %v766 = vld [vmem:[%s2] sm:$0x1]
        %v768 = vlaneseq
        %v769 = vshrl.u32 %v768, 7
        %v770 = vsub.s32 0, %v769
        %v771 = vrot.slane %v766, %v770
        %v777 = vunpack.c.l.b16 %v762
        %v778 = vunpack.c.l.b16 %v763
        %v779 = vunpack.c.l.b16 %v764
        %v780 = vunpack.c.l.b16 %v765
        %v781 = vpack.c.b16 %v778, %v777
        %v782 = vpack.c.b16 %v780, %v779
        %vm785 = vcmask 261120
        %v787 = vsel %vm785, %v761, 0
        %789 = vmatprep.subr.bf16.mxu0 0
        %790 = vmatpush1.bf16.msra.mxu0 %v781
        %791 = vmatprep.subr.bf16.mxu0 0
        %792 = vmatpush1.bf16.msra.mxu0 %v782
        %793 = vmatprep.subr.bf16.mxu0 0
        %794 = vmatpush1.bf16.msra.mxu0 0
        %795 = vmatprep.subr.bf16.mxu0 0
        %796 = vmatpush1.bf16.msra.mxu0 0
        %797 = vmatprep.subr.bf16.mxu0 0
        %798 = vmatpush1.bf16.msra.mxu0 0
        %799 = vmatprep.subr.bf16.mxu0 0
        %800 = vmatpush1.bf16.msra.mxu0 0
        %801 = vmatprep.subr.bf16.mxu0 0
        %802 = vmatpush1.bf16.msra.mxu0 0
        %803 = vmatprep.subr.bf16.mxu0 0
        %804 = vmatpush1.bf16.msra.mxu0 0
        %805 = vmatprep.subr.bf16.mxu0 0
        %806 = vmatpush1.bf16.msra.mxu0 0
        %807 = vmatprep.subr.bf16.mxu0 0
        %808 = vmatpush1.bf16.msra.mxu0 0
        %809 = vmatprep.subr.bf16.mxu0 0
        %810 = vmatpush1.bf16.msra.mxu0 0
        %811 = vmatprep.subr.bf16.mxu0 0
        %812 = vmatpush1.bf16.msra.mxu0 0
        %813 = vmatprep.subr.bf16.mxu0 0
        %814 = vmatpush1.bf16.msra.mxu0 0
        %815 = vmatprep.subr.bf16.mxu0 0
        %816 = vmatpush1.bf16.msra.mxu0 0
        %817 = vmatprep.subr.bf16.mxu0 0
        %818 = vmatpush1.bf16.msra.mxu0 0
        %819 = vmatprep.subr.bf16.mxu0 0
        %820 = vmatpush1.bf16.msra.mxu0 0
        %821 = vmatprep.mubr.bf16.mxu0 0
        %822 = vmatmul.mubr.bf16.gmra.mrb[0].mxu0 %v787
        %v823 = vpop.f32.mrb[0].mxu0
        %v824 = vadd.f32 %v771, %v823
        %v825 = vpop.f32.mrb[0].mxu0
        %v826 = vpop.f32.mrb[0].mxu0
        %v827 = vpop.f32.mrb[0].mxu0
        %828 = vdwg.mxu0
        %830 = vrot.lane.b32.xlu0 %v824, 120
        %v831 = vpop.permute.xlu0 %830
        %833 = vrot.lane.b32.xlu0 %v824, 112
        %v834 = vpop.permute.xlu0 %833
        %836 = vrot.lane.b32.xlu0 %v824, 104
        %v837 = vpop.permute.xlu0 %836
        %v839 = vpack.c.bf16 %v824, %v824
        %v840 = vpack.c.bf16 %v831, %v831
        %v841 = vpack.c.bf16 %v834, %v834
        %v842 = vpack.c.bf16 %v837, %v837
        %844 = vrot.lane.b32.xlu0 %v839, 96
        %v845 = vpop.permute.xlu0 %844
        %vm846 = vcmask 64512
        %v848 = vsel %vm846, %v839, 0
        %v851 = vsel %vm846, %v845, 0
        %853 = vmatprep.subr.bf16.mxu0 0
        %854 = vmatpush1.bf16.xpose.msra.mxu0 %v851
        %855 = vmatprep.subr.bf16.mxu0 0
        %856 = vmatpush1.bf16.xpose.msra.mxu0 0
        %857 = vmatprep.subr.bf16.mxu0 0
        %858 = vmatpush1.bf16.xpose.msra.mxu0 0
        %859 = vmatprep.subr.bf16.mxu0 0
        %860 = vmatpush1.bf16.xpose.msra.mxu0 0
        %861 = vmatprep.subr.bf16.mxu0 0
        %862 = vmatpush1.bf16.xpose.msra.mxu0 0
        %863 = vmatprep.subr.bf16.mxu0 0
        %864 = vmatpush1.bf16.xpose.msra.mxu0 0
        %865 = vmatprep.subr.bf16.mxu0 0
        %866 = vmatpush1.bf16.xpose.msra.mxu0 0
        %867 = vmatprep.subr.bf16.mxu0 0
        %868 = vmatpush1.bf16.xpose.msra.mxu0 0
        %869 = vmatprep.subr.bf16.mxu0 0
        %870 = vmatpush1.bf16.xpose.msra.mxu0 0
        %871 = vmatprep.subr.bf16.mxu0 0
        %872 = vmatpush1.bf16.xpose.msra.mxu0 0
        %873 = vmatprep.subr.bf16.mxu0 0
        %874 = vmatpush1.bf16.xpose.msra.mxu0 0
        %875 = vmatprep.subr.bf16.mxu0 0
        %876 = vmatpush1.bf16.xpose.msra.mxu0 0
        %877 = vmatprep.subr.bf16.mxu0 0
        %878 = vmatpush1.bf16.xpose.msra.mxu0 0
        %879 = vmatprep.subr.bf16.mxu0 0
        %880 = vmatpush1.bf16.xpose.msra.mxu0 0
        %881 = vmatprep.subr.bf16.mxu0 0
        %882 = vmatpush1.bf16.xpose.msra.mxu0 0
        %883 = vmatprep.subr.bf16.mxu0 0
        %884 = vmatpush1.bf16.xpose.msra.mxu0 0
        %885 = vmatprep.mubr.bf16.mxu0 0
        %886 = vmatmul.mubr.bf16.gmra.mrb[0].mxu0 %v848
        %v887 = vpop.f32.mrb[0].mxu0
        %v888 = vadd.f32 0.0, %v887
        %v889 = vpop.f32.mrb[0].mxu0
        %v890 = vpop.f32.mrb[0].mxu0
        %v891 = vpop.f32.mrb[0].mxu0
        %892 = vdwg.mxu0
        %894 = vrot.lane.b32.xlu0 %v840, 96
        %v895 = vpop.permute.xlu0 %894
        %v897 = vsel %vm846, %v840, 0
        %v900 = vsel %vm846, %v895, 0
        %902 = vmatprep.subr.bf16.mxu0 0
        %903 = vmatpush1.bf16.xpose.msra.mxu0 %v900
        %904 = vmatprep.subr.bf16.mxu0 0
        %905 = vmatpush1.bf16.xpose.msra.mxu0 0
        %906 = vmatprep.subr.bf16.mxu0 0
        %907 = vmatpush1.bf16.xpose.msra.mxu0 0
        %908 = vmatprep.subr.bf16.mxu0 0
        %909 = vmatpush1.bf16.xpose.msra.mxu0 0
        %910 = vmatprep.subr.bf16.mxu0 0
        %911 = vmatpush1.bf16.xpose.msra.mxu0 0
        %912 = vmatprep.subr.bf16.mxu0 0
        %913 = vmatpush1.bf16.xpose.msra.mxu0 0
        %914 = vmatprep.subr.bf16.mxu0 0
        %915 = vmatpush1.bf16.xpose.msra.mxu0 0
        %916 = vmatprep.subr.bf16.mxu0 0
        %917 = vmatpush1.bf16.xpose.msra.mxu0 0
        %918 = vmatprep.subr.bf16.mxu0 0
        %919 = vmatpush1.bf16.xpose.msra.mxu0 0
        %920 = vmatprep.subr.bf16.mxu0 0
        %921 = vmatpush1.bf16.xpose.msra.mxu0 0
        %922 = vmatprep.subr.bf16.mxu0 0
        %923 = vmatpush1.bf16.xpose.msra.mxu0 0
        %924 = vmatprep.subr.bf16.mxu0 0
        %925 = vmatpush1.bf16.xpose.msra.mxu0 0
        %926 = vmatprep.subr.bf16.mxu0 0
        %927 = vmatpush1.bf16.xpose.msra.mxu0 0
        %928 = vmatprep.subr.bf16.mxu0 0
        %929 = vmatpush1.bf16.xpose.msra.mxu0 0
        %930 = vmatprep.subr.bf16.mxu0 0
        %931 = vmatpush1.bf16.xpose.msra.mxu0 0
        %932 = vmatprep.subr.bf16.mxu0 0
        %933 = vmatpush1.bf16.xpose.msra.mxu0 0
        %934 = vmatprep.mubr.bf16.mxu0 0
        %935 = vmatmul.mubr.bf16.gmra.mrb[0].mxu0 %v897
        %v936 = vpop.f32.mrb[0].mxu0
        %v937 = vadd.f32 0.0, %v936
        %v938 = vpop.f32.mrb[0].mxu0
        %v939 = vpop.f32.mrb[0].mxu0
        %v940 = vpop.f32.mrb[0].mxu0
        %941 = vdwg.mxu0
        %943 = vrot.lane.b32.xlu0 %v841, 96
        %v944 = vpop.permute.xlu0 %943
        %v946 = vsel %vm846, %v841, 0
        %v949 = vsel %vm846, %v944, 0
        %951 = vmatprep.subr.bf16.mxu0 0
        %952 = vmatpush1.bf16.xpose.msra.mxu0 %v949
        %953 = vmatprep.subr.bf16.mxu0 0
        %954 = vmatpush1.bf16.xpose.msra.mxu0 0
        %955 = vmatprep.subr.bf16.mxu0 0
        %956 = vmatpush1.bf16.xpose.msra.mxu0 0
        %957 = vmatprep.subr.bf16.mxu0 0
        %958 = vmatpush1.bf16.xpose.msra.mxu0 0
        %959 = vmatprep.subr.bf16.mxu0 0
        %960 = vmatpush1.bf16.xpose.msra.mxu0 0
        %961 = vmatprep.subr.bf16.mxu0 0
        %962 = vmatpush1.bf16.xpose.msra.mxu0 0
        %963 = vmatprep.subr.bf16.mxu0 0
        %964 = vmatpush1.bf16.xpose.msra.mxu0 0
        %965 = vmatprep.subr.bf16.mxu0 0
        %966 = vmatpush1.bf16.xpose.msra.mxu0 0
        %967 = vmatprep.subr.bf16.mxu0 0
        %968 = vmatpush1.bf16.xpose.msra.mxu0 0
        %969 = vmatprep.subr.bf16.mxu0 0
        %970 = vmatpush1.bf16.xpose.msra.mxu0 0
        %971 = vmatprep.subr.bf16.mxu0 0
        %972 = vmatpush1.bf16.xpose.msra.mxu0 0
        %973 = vmatprep.subr.bf16.mxu0 0
        %974 = vmatpush1.bf16.xpose.msra.mxu0 0
        %975 = vmatprep.subr.bf16.mxu0 0
        %976 = vmatpush1.bf16.xpose.msra.mxu0 0
        %977 = vmatprep.subr.bf16.mxu0 0
        %978 = vmatpush1.bf16.xpose.msra.mxu0 0
        %979 = vmatprep.subr.bf16.mxu0 0
        %980 = vmatpush1.bf16.xpose.msra.mxu0 0
        %981 = vmatprep.subr.bf16.mxu0 0
        %982 = vmatpush1.bf16.xpose.msra.mxu0 0
        %983 = vmatprep.mubr.bf16.mxu0 0
        %984 = vmatmul.mubr.bf16.gmra.mrb[0].mxu0 %v946
        %v985 = vpop.f32.mrb[0].mxu0
        %v986 = vadd.f32 0.0, %v985
        %v987 = vpop.f32.mrb[0].mxu0
        %v988 = vpop.f32.mrb[0].mxu0
        %v989 = vpop.f32.mrb[0].mxu0
        %990 = vdwg.mxu0
        %992 = vrot.lane.b32.xlu0 %v842, 96
        %v993 = vpop.permute.xlu0 %992
        %v995 = vsel %vm846, %v842, 0
        %v998 = vsel %vm846, %v993, 0
        %1000 = vmatprep.subr.bf16.mxu0 0
        %1001 = vmatpush1.bf16.xpose.msra.mxu0 %v998
        %1002 = vmatprep.subr.bf16.mxu0 0
        %1003 = vmatpush1.bf16.xpose.msra.mxu0 0
        %1004 = vmatprep.subr.bf16.mxu0 0
        %1005 = vmatpush1.bf16.xpose.msra.mxu0 0
        %1006 = vmatprep.subr.bf16.mxu0 0
        %1007 = vmatpush1.bf16.xpose.msra.mxu0 0
        %1008 = vmatprep.subr.bf16.mxu0 0
        %1009 = vmatpush1.bf16.xpose.msra.mxu0 0
        %1010 = vmatprep.subr.bf16.mxu0 0
        %1011 = vmatpush1.bf16.xpose.msra.mxu0 0
        %1012 = vmatprep.subr.bf16.mxu0 0
        %1013 = vmatpush1.bf16.xpose.msra.mxu0 0
        %1014 = vmatprep.subr.bf16.mxu0 0
        %1015 = vmatpush1.bf16.xpose.msra.mxu0 0
        %1016 = vmatprep.subr.bf16.mxu0 0
        %1017 = vmatpush1.bf16.xpose.msra.mxu0 0
        %1018 = vmatprep.subr.bf16.mxu0 0
        %1019 = vmatpush1.bf16.xpose.msra.mxu0 0
        %1020 = vmatprep.subr.bf16.mxu0 0
        %1021 = vmatpush1.bf16.xpose.msra.mxu0 0
        %1022 = vmatprep.subr.bf16.mxu0 0
        %1023 = vmatpush1.bf16.xpose.msra.mxu0 0
        %1024 = vmatprep.subr.bf16.mxu0 0
        %1025 = vmatpush1.bf16.xpose.msra.mxu0 0
        %1026 = vmatprep.subr.bf16.mxu0 0
        %1027 = vmatpush1.bf16.xpose.msra.mxu0 0
        %1028 = vmatprep.subr.bf16.mxu0 0
        %1029 = vmatpush1.bf16.xpose.msra.mxu0 0
        %1030 = vmatprep.subr.bf16.mxu0 0
        %1031 = vmatpush1.bf16.xpose.msra.mxu0 0
        %1032 = vmatprep.mubr.bf16.mxu0 0
        %1033 = vmatmul.mubr.bf16.gmra.mrb[0].mxu0 %v995
        %v1034 = vpop.f32.mrb[0].mxu0
        %v1035 = vadd.f32 0.0, %v1034
        %v1036 = vpop.f32.mrb[0].mxu0
        %v1037 = vpop.f32.mrb[0].mxu0
        %v1038 = vpop.f32.mrb[0].mxu0
        %1039 = vdwg.mxu0
        %v1040 = vmul.f32 %v888, 0.35355338
        %v1041 = vmul.f32 %v937, 0.35355338
        %v1042 = vmul.f32 %v986, 0.35355338
        %v1043 = vmul.f32 %v1035, 0.35355338
        %v1044 = vsel %vm846, %v1040, -inf
        %1045 = vmax.xlane.f32.xlu0 %v1044
        %v1046 = vpop.xlane.xlu0 %1045
        %v1047 = vsel %vm846, %v1041, -inf
        %1048 = vmax.xlane.f32.xlu0 %v1047
        %v1049 = vpop.xlane.xlu0 %1048
        %v1050 = vsel %vm846, %v1042, -inf
        %1051 = vmax.xlane.f32.xlu0 %v1050
        %v1052 = vpop.xlane.xlu0 %1051
        %v1053 = vsel %vm846, %v1043, -inf
        %1054 = vmax.xlane.f32.xlu0 %v1053
        %v1055 = vpop.xlane.xlu0 %1054
        %v1056 = vsub.f32 %v1040, %v1046
        %v1057 = vsub.f32 %v1041, %v1049
        %v1058 = vsub.f32 %v1042, %v1052
        %v1059 = vsub.f32 %v1043, %v1055
        %v1060 = vmul.f32 %v1056, 1.442695
        %v1061 = vpow.pop %v1060
        %v1062 = vmul.f32 %v1057, 1.442695
        %v1063 = vpow.pop %v1062
        %v1064 = vmul.f32 %v1058, 1.442695
        %v1065 = vpow.pop %v1064
        %v1066 = vmul.f32 %v1059, 1.442695
        %v1067 = vpow.pop %v1066
        %v1068 = vsel %vm846, %v1061, 0.0
        %1069 = vadd.xlane.f32.xlu0 %v1068
        %v1070 = vpop.xlane.xlu0 %1069
        %v1071 = vsel %vm846, %v1063, 0.0
        %1072 = vadd.xlane.f32.xlu0 %v1071
        %v1073 = vpop.xlane.xlu0 %1072
        %v1074 = vsel %vm846, %v1065, 0.0
        %1075 = vadd.xlane.f32.xlu0 %v1074
        %v1076 = vpop.xlane.xlu0 %1075
        %v1077 = vsel %vm846, %v1067, 0.0
        %1078 = vadd.xlane.f32.xlu0 %v1077
        %v1079 = vpop.xlane.xlu0 %1078
        %v1080 = vrcp.pop %v1070
        %v1081 = vrcp.pop %v1073
        %v1082 = vrcp.pop %v1076
        %v1083 = vrcp.pop %v1079
        %v1084 = vmul.f32 %v1061, %v1080
        %v1085 = vmul.f32 %v1063, %v1081
        %v1086 = vmul.f32 %v1065, %v1082
        %v1087 = vmul.f32 %v1067, %v1083
        %v1088 = vpack.c.bf16 %v1084, %v1084
        %v1089 = vpack.c.bf16 %v1085, %v1085
        %v1090 = vpack.c.bf16 %v1086, %v1086
        %v1091 = vpack.c.bf16 %v1087, %v1087
        %1092 = vrot.lane.b32.xlu0 %v839, 64
        %v1093 = vpop.permute.xlu0 %1092
        %v1095 = vsel %vm846, %v1088, 0
        %vm1097 = vcmask 1043456
        %v1099 = vsel %vm1097, %v1093, 0
        %1101 = vmatprep.subr.bf16.mxu0 0
        %1102 = vmatpush1.bf16.msra.mxu0 %v1099
        %1103 = vmatprep.subr.bf16.mxu0 0
        %1104 = vmatpush1.bf16.msra.mxu0 0
        %1105 = vmatprep.subr.bf16.mxu0 0
        %1106 = vmatpush1.bf16.msra.mxu0 0
        %1107 = vmatprep.subr.bf16.mxu0 0
        %1108 = vmatpush1.bf16.msra.mxu0 0
        %1109 = vmatprep.subr.bf16.mxu0 0
        %1110 = vmatpush1.bf16.msra.mxu0 0
        %1111 = vmatprep.subr.bf16.mxu0 0
        %1112 = vmatpush1.bf16.msra.mxu0 0
        %1113 = vmatprep.subr.bf16.mxu0 0
        %1114 = vmatpush1.bf16.msra.mxu0 0
        %1115 = vmatprep.subr.bf16.mxu0 0
        %1116 = vmatpush1.bf16.msra.mxu0 0
        %1117 = vmatprep.subr.bf16.mxu0 0
        %1118 = vmatpush1.bf16.msra.mxu0 0
        %1119 = vmatprep.subr.bf16.mxu0 0
        %1120 = vmatpush1.bf16.msra.mxu0 0
        %1121 = vmatprep.subr.bf16.mxu0 0
        %1122 = vmatpush1.bf16.msra.mxu0 0
        %1123 = vmatprep.subr.bf16.mxu0 0
        %1124 = vmatpush1.bf16.msra.mxu0 0
        %1125 = vmatprep.subr.bf16.mxu0 0
        %1126 = vmatpush1.bf16.msra.mxu0 0
        %1127 = vmatprep.subr.bf16.mxu0 0
        %1128 = vmatpush1.bf16.msra.mxu0 0
        %1129 = vmatprep.subr.bf16.mxu0 0
        %1130 = vmatpush1.bf16.msra.mxu0 0
        %1131 = vmatprep.subr.bf16.mxu0 0
        %1132 = vmatpush1.bf16.msra.mxu0 0
        %1133 = vmatprep.mubr.bf16.mxu0 0
        %1134 = vmatmul.mubr.bf16.gmra.mrb[0].mxu0 %v1095
        %v1135 = vpop.f32.mrb[0].mxu0
        %v1136 = vadd.f32 0.0, %v1135
        %v1137 = vpop.f32.mrb[0].mxu0
        %v1138 = vpop.f32.mrb[0].mxu0
        %v1139 = vpop.f32.mrb[0].mxu0
        %1140 = vdwg.mxu0
        %1141 = vrot.lane.b32.xlu0 %v840, 64
        %v1142 = vpop.permute.xlu0 %1141
        %v1144 = vsel %vm846, %v1089, 0
        %v1147 = vsel %vm1097, %v1142, 0
        %1149 = vmatprep.subr.bf16.mxu0 0
        %1150 = vmatpush1.bf16.msra.mxu0 %v1147
        %1151 = vmatprep.subr.bf16.mxu0 0
        %1152 = vmatpush1.bf16.msra.mxu0 0
        %1153 = vmatprep.subr.bf16.mxu0 0
        %1154 = vmatpush1.bf16.msra.mxu0 0
        %1155 = vmatprep.subr.bf16.mxu0 0
        %1156 = vmatpush1.bf16.msra.mxu0 0
        %1157 = vmatprep.subr.bf16.mxu0 0
        %1158 = vmatpush1.bf16.msra.mxu0 0
        %1159 = vmatprep.subr.bf16.mxu0 0
        %1160 = vmatpush1.bf16.msra.mxu0 0
        %1161 = vmatprep.subr.bf16.mxu0 0
        %1162 = vmatpush1.bf16.msra.mxu0 0
        %1163 = vmatprep.subr.bf16.mxu0 0
        %1164 = vmatpush1.bf16.msra.mxu0 0
        %1165 = vmatprep.subr.bf16.mxu0 0
        %1166 = vmatpush1.bf16.msra.mxu0 0
        %1167 = vmatprep.subr.bf16.mxu0 0
        %1168 = vmatpush1.bf16.msra.mxu0 0
        %1169 = vmatprep.subr.bf16.mxu0 0
        %1170 = vmatpush1.bf16.msra.mxu0 0
        %1171 = vmatprep.subr.bf16.mxu0 0
        %1172 = vmatpush1.bf16.msra.mxu0 0
        %1173 = vmatprep.subr.bf16.mxu0 0
        %1174 = vmatpush1.bf16.msra.mxu0 0
        %1175 = vmatprep.subr.bf16.mxu0 0
        %1176 = vmatpush1.bf16.msra.mxu0 0
        %1177 = vmatprep.subr.bf16.mxu0 0
        %1178 = vmatpush1.bf16.msra.mxu0 0
        %1179 = vmatprep.subr.bf16.mxu0 0
        %1180 = vmatpush1.bf16.msra.mxu0 0
        %1181 = vmatprep.mubr.bf16.mxu0 0
        %1182 = vmatmul.mubr.bf16.gmra.mrb[0].mxu0 %v1144
        %v1183 = vpop.f32.mrb[0].mxu0
        %v1184 = vadd.f32 0.0, %v1183
        %v1185 = vpop.f32.mrb[0].mxu0
        %v1186 = vpop.f32.mrb[0].mxu0
        %v1187 = vpop.f32.mrb[0].mxu0
        %1188 = vdwg.mxu0
        %1189 = vrot.lane.b32.xlu0 %v841, 64
        %v1190 = vpop.permute.xlu0 %1189
        %v1192 = vsel %vm846, %v1090, 0
        %v1195 = vsel %vm1097, %v1190, 0
        %1197 = vmatprep.subr.bf16.mxu0 0
        %1198 = vmatpush1.bf16.msra.mxu0 %v1195
        %1199 = vmatprep.subr.bf16.mxu0 0
        %1200 = vmatpush1.bf16.msra.mxu0 0
        %1201 = vmatprep.subr.bf16.mxu0 0
        %1202 = vmatpush1.bf16.msra.mxu0 0
        %1203 = vmatprep.subr.bf16.mxu0 0
        %1204 = vmatpush1.bf16.msra.mxu0 0
        %1205 = vmatprep.subr.bf16.mxu0 0
        %1206 = vmatpush1.bf16.msra.mxu0 0
        %1207 = vmatprep.subr.bf16.mxu0 0
        %1208 = vmatpush1.bf16.msra.mxu0 0
        %1209 = vmatprep.subr.bf16.mxu0 0
        %1210 = vmatpush1.bf16.msra.mxu0 0
        %1211 = vmatprep.subr.bf16.mxu0 0
        %1212 = vmatpush1.bf16.msra.mxu0 0
        %1213 = vmatprep.subr.bf16.mxu0 0
        %1214 = vmatpush1.bf16.msra.mxu0 0
        %1215 = vmatprep.subr.bf16.mxu0 0
        %1216 = vmatpush1.bf16.msra.mxu0 0
        %1217 = vmatprep.subr.bf16.mxu0 0
        %1218 = vmatpush1.bf16.msra.mxu0 0
        %1219 = vmatprep.subr.bf16.mxu0 0
        %1220 = vmatpush1.bf16.msra.mxu0 0
        %1221 = vmatprep.subr.bf16.mxu0 0
        %1222 = vmatpush1.bf16.msra.mxu0 0
        %1223 = vmatprep.subr.bf16.mxu0 0
        %1224 = vmatpush1.bf16.msra.mxu0 0
        %1225 = vmatprep.subr.bf16.mxu0 0
        %1226 = vmatpush1.bf16.msra.mxu0 0
        %1227 = vmatprep.subr.bf16.mxu0 0
        %1228 = vmatpush1.bf16.msra.mxu0 0
        %1229 = vmatprep.mubr.bf16.mxu0 0
        %1230 = vmatmul.mubr.bf16.gmra.mrb[0].mxu0 %v1192
        %v1231 = vpop.f32.mrb[0].mxu0
        %v1232 = vadd.f32 0.0, %v1231
        %v1233 = vpop.f32.mrb[0].mxu0
        %v1234 = vpop.f32.mrb[0].mxu0
        %v1235 = vpop.f32.mrb[0].mxu0
        %1236 = vdwg.mxu0
        %1237 = vrot.lane.b32.xlu0 %v842, 64
        %v1238 = vpop.permute.xlu0 %1237
        %v1240 = vsel %vm846, %v1091, 0
        %v1243 = vsel %vm1097, %v1238, 0
        %1245 = vmatprep.subr.bf16.mxu0 0
        %1246 = vmatpush1.bf16.msra.mxu0 %v1243
        %1247 = vmatprep.subr.bf16.mxu0 0
        %1248 = vmatpush1.bf16.msra.mxu0 0
        %1249 = vmatprep.subr.bf16.mxu0 0
        %1250 = vmatpush1.bf16.msra.mxu0 0
        %1251 = vmatprep.subr.bf16.mxu0 0
        %1252 = vmatpush1.bf16.msra.mxu0 0
        %1253 = vmatprep.subr.bf16.mxu0 0
        %1254 = vmatpush1.bf16.msra.mxu0 0
        %1255 = vmatprep.subr.bf16.mxu0 0
        %1256 = vmatpush1.bf16.msra.mxu0 0
        %1257 = vmatprep.subr.bf16.mxu0 0
        %1258 = vmatpush1.bf16.msra.mxu0 0
        %1259 = vmatprep.subr.bf16.mxu0 0
        %1260 = vmatpush1.bf16.msra.mxu0 0
        %1261 = vmatprep.subr.bf16.mxu0 0
        %1262 = vmatpush1.bf16.msra.mxu0 0
        %1263 = vmatprep.subr.bf16.mxu0 0
        %1264 = vmatpush1.bf16.msra.mxu0 0
        %1265 = vmatprep.subr.bf16.mxu0 0
        %1266 = vmatpush1.bf16.msra.mxu0 0
        %1267 = vmatprep.subr.bf16.mxu0 0
        %1268 = vmatpush1.bf16.msra.mxu0 0
        %1269 = vmatprep.subr.bf16.mxu0 0
        %1270 = vmatpush1.bf16.msra.mxu0 0
        %1271 = vmatprep.subr.bf16.mxu0 0
        %1272 = vmatpush1.bf16.msra.mxu0 0
        %1273 = vmatprep.subr.bf16.mxu0 0
        %1274 = vmatpush1.bf16.msra.mxu0 0
        %1275 = vmatprep.subr.bf16.mxu0 0
        %1276 = vmatpush1.bf16.msra.mxu0 0
        %1277 = vmatprep.mubr.bf16.mxu0 0
        %1278 = vmatmul.mubr.bf16.gmra.mrb[0].mxu0 %v1240
        %v1279 = vpop.f32.mrb[0].mxu0
        %v1280 = vadd.f32 0.0, %v1279
        %v1281 = vpop.f32.mrb[0].mxu0
        %v1282 = vpop.f32.mrb[0].mxu0
        %v1283 = vpop.f32.mrb[0].mxu0
        %1284 = vdwg.mxu0
        %v1285 = vpack.c.bf16 %v1136, %v1136
        %v1286 = vpack.c.bf16 %v1184, %v1184
        %v1287 = vpack.c.bf16 %v1232, %v1232
        %v1288 = vpack.c.bf16 %v1280, %v1280
        %v1289 = vld [vmem:[%s3] sm:$0xf]
        %v1290 = vld [vmem:[%s3 + $0x4] sm:$0xf]
        %v1291 = vld [vmem:[%s3 + $0x8] sm:$0xf]
        %v1292 = vld [vmem:[%s3 + $0xc] sm:$0xf]
        %v1294 = vsel %vm846, %v1285, 0
        %v1297 = vsel %vm1097, %v1289, 0
        %1299 = vmatprep.subr.bf16.mxu0 0
        %1300 = vmatpush1.bf16.msra.mxu0 %v1297
        %1301 = vmatprep.subr.bf16.mxu0 0
        %1302 = vmatpush1.bf16.msra.mxu0 0
        %1303 = vmatprep.subr.bf16.mxu0 0
        %1304 = vmatpush1.bf16.msra.mxu0 0
        %1305 = vmatprep.subr.bf16.mxu0 0
        %1306 = vmatpush1.bf16.msra.mxu0 0
        %1307 = vmatprep.subr.bf16.mxu0 0
        %1308 = vmatpush1.bf16.msra.mxu0 0
        %1309 = vmatprep.subr.bf16.mxu0 0
        %1310 = vmatpush1.bf16.msra.mxu0 0
        %1311 = vmatprep.subr.bf16.mxu0 0
        %1312 = vmatpush1.bf16.msra.mxu0 0
        %1313 = vmatprep.subr.bf16.mxu0 0
        %1314 = vmatpush1.bf16.msra.mxu0 0
        %1315 = vmatprep.subr.bf16.mxu0 0
        %1316 = vmatpush1.bf16.msra.mxu0 0
        %1317 = vmatprep.subr.bf16.mxu0 0
        %1318 = vmatpush1.bf16.msra.mxu0 0
        %1319 = vmatprep.subr.bf16.mxu0 0
        %1320 = vmatpush1.bf16.msra.mxu0 0
        %1321 = vmatprep.subr.bf16.mxu0 0
        %1322 = vmatpush1.bf16.msra.mxu0 0
        %1323 = vmatprep.subr.bf16.mxu0 0
        %1324 = vmatpush1.bf16.msra.mxu0 0
        %1325 = vmatprep.subr.bf16.mxu0 0
        %1326 = vmatpush1.bf16.msra.mxu0 0
        %1327 = vmatprep.subr.bf16.mxu0 0
        %1328 = vmatpush1.bf16.msra.mxu0 0
        %1329 = vmatprep.subr.bf16.mxu0 0
        %1330 = vmatpush1.bf16.msra.mxu0 0
        %1331 = vmatprep.mubr.bf16.mxu0 0
        %1332 = vmatmul.mubr.bf16.gmra.mrb[0].mxu0 %v1294
        %v1333 = vpop.f32.mrb[0].mxu0
        %v1334 = vadd.f32 0.0, %v1333
        %v1335 = vpop.f32.mrb[0].mxu0
        %v1336 = vpop.f32.mrb[0].mxu0
        %v1337 = vpop.f32.mrb[0].mxu0
        %1338 = vdwg.mxu0
        %v1340 = vsel %vm846, %v1286, 0
        %v1343 = vsel %vm1097, %v1290, 0
        %1345 = vmatprep.subr.bf16.mxu0 0
        %1346 = vmatpush1.bf16.msra.mxu0 %v1343
        %1347 = vmatprep.subr.bf16.mxu0 0
        %1348 = vmatpush1.bf16.msra.mxu0 0
        %1349 = vmatprep.subr.bf16.mxu0 0
        %1350 = vmatpush1.bf16.msra.mxu0 0
        %1351 = vmatprep.subr.bf16.mxu0 0
        %1352 = vmatpush1.bf16.msra.mxu0 0
        %1353 = vmatprep.subr.bf16.mxu0 0
        %1354 = vmatpush1.bf16.msra.mxu0 0
        %1355 = vmatprep.subr.bf16.mxu0 0
        %1356 = vmatpush1.bf16.msra.mxu0 0
        %1357 = vmatprep.subr.bf16.mxu0 0
        %1358 = vmatpush1.bf16.msra.mxu0 0
        %1359 = vmatprep.subr.bf16.mxu0 0
        %1360 = vmatpush1.bf16.msra.mxu0 0
        %1361 = vmatprep.subr.bf16.mxu0 0
        %1362 = vmatpush1.bf16.msra.mxu0 0
        %1363 = vmatprep.subr.bf16.mxu0 0
        %1364 = vmatpush1.bf16.msra.mxu0 0
        %1365 = vmatprep.subr.bf16.mxu0 0
        %1366 = vmatpush1.bf16.msra.mxu0 0
        %1367 = vmatprep.subr.bf16.mxu0 0
        %1368 = vmatpush1.bf16.msra.mxu0 0
        %1369 = vmatprep.subr.bf16.mxu0 0
        %1370 = vmatpush1.bf16.msra.mxu0 0
        %1371 = vmatprep.subr.bf16.mxu0 0
        %1372 = vmatpush1.bf16.msra.mxu0 0
        %1373 = vmatprep.subr.bf16.mxu0 0
        %1374 = vmatpush1.bf16.msra.mxu0 0
        %1375 = vmatprep.subr.bf16.mxu0 0
        %1376 = vmatpush1.bf16.msra.mxu0 0
        %1377 = vmatprep.mubr.bf16.mxu0 0
        %1378 = vmatmul.mubr.bf16.gmra.mrb[0].mxu0 %v1340
        %v1379 = vpop.f32.mrb[0].mxu0
        %v1380 = vadd.f32 0.0, %v1379
        %v1381 = vpop.f32.mrb[0].mxu0
        %v1382 = vpop.f32.mrb[0].mxu0
        %v1383 = vpop.f32.mrb[0].mxu0
        %1384 = vdwg.mxu0
        %v1386 = vsel %vm846, %v1287, 0
        %v1389 = vsel %vm1097, %v1291, 0
        %1391 = vmatprep.subr.bf16.mxu0 0
        %1392 = vmatpush1.bf16.msra.mxu0 %v1389
        %1393 = vmatprep.subr.bf16.mxu0 0
        %1394 = vmatpush1.bf16.msra.mxu0 0
        %1395 = vmatprep.subr.bf16.mxu0 0
        %1396 = vmatpush1.bf16.msra.mxu0 0
        %1397 = vmatprep.subr.bf16.mxu0 0
        %1398 = vmatpush1.bf16.msra.mxu0 0
        %1399 = vmatprep.subr.bf16.mxu0 0
        %1400 = vmatpush1.bf16.msra.mxu0 0
        %1401 = vmatprep.subr.bf16.mxu0 0
        %1402 = vmatpush1.bf16.msra.mxu0 0
        %1403 = vmatprep.subr.bf16.mxu0 0
        %1404 = vmatpush1.bf16.msra.mxu0 0
        %1405 = vmatprep.subr.bf16.mxu0 0
        %1406 = vmatpush1.bf16.msra.mxu0 0
        %1407 = vmatprep.subr.bf16.mxu0 0
        %1408 = vmatpush1.bf16.msra.mxu0 0
        %1409 = vmatprep.subr.bf16.mxu0 0
        %1410 = vmatpush1.bf16.msra.mxu0 0
        %1411 = vmatprep.subr.bf16.mxu0 0
        %1412 = vmatpush1.bf16.msra.mxu0 0
        %1413 = vmatprep.subr.bf16.mxu0 0
        %1414 = vmatpush1.bf16.msra.mxu0 0
        %1415 = vmatprep.subr.bf16.mxu0 0
        %1416 = vmatpush1.bf16.msra.mxu0 0
        %1417 = vmatprep.subr.bf16.mxu0 0
        %1418 = vmatpush1.bf16.msra.mxu0 0
        %1419 = vmatprep.subr.bf16.mxu0 0
        %1420 = vmatpush1.bf16.msra.mxu0 0
        %1421 = vmatprep.subr.bf16.mxu0 0
        %1422 = vmatpush1.bf16.msra.mxu0 0
        %1423 = vmatprep.mubr.bf16.mxu0 0
        %1424 = vmatmul.mubr.bf16.gmra.mrb[0].mxu0 %v1386
        %v1425 = vpop.f32.mrb[0].mxu0
        %v1426 = vadd.f32 0.0, %v1425
        %v1427 = vpop.f32.mrb[0].mxu0
        %v1428 = vpop.f32.mrb[0].mxu0
        %v1429 = vpop.f32.mrb[0].mxu0
        %1430 = vdwg.mxu0
        %v1432 = vsel %vm846, %v1288, 0
        %v1435 = vsel %vm1097, %v1292, 0
        %1437 = vmatprep.subr.bf16.mxu0 0
        %1438 = vmatpush1.bf16.msra.mxu0 %v1435
        %1439 = vmatprep.subr.bf16.mxu0 0
        %1440 = vmatpush1.bf16.msra.mxu0 0
        %1441 = vmatprep.subr.bf16.mxu0 0
        %1442 = vmatpush1.bf16.msra.mxu0 0
        %1443 = vmatprep.subr.bf16.mxu0 0
        %1444 = vmatpush1.bf16.msra.mxu0 0
        %1445 = vmatprep.subr.bf16.mxu0 0
        %1446 = vmatpush1.bf16.msra.mxu0 0
        %1447 = vmatprep.subr.bf16.mxu0 0
        %1448 = vmatpush1.bf16.msra.mxu0 0
        %1449 = vmatprep.subr.bf16.mxu0 0
        %1450 = vmatpush1.bf16.msra.mxu0 0
        %1451 = vmatprep.subr.bf16.mxu0 0
        %1452 = vmatpush1.bf16.msra.mxu0 0
        %1453 = vmatprep.subr.bf16.mxu0 0
        %1454 = vmatpush1.bf16.msra.mxu0 0
        %1455 = vmatprep.subr.bf16.mxu0 0
        %1456 = vmatpush1.bf16.msra.mxu0 0
        %1457 = vmatprep.subr.bf16.mxu0 0
        %1458 = vmatpush1.bf16.msra.mxu0 0
        %1459 = vmatprep.subr.bf16.mxu0 0
        %1460 = vmatpush1.bf16.msra.mxu0 0
        %1461 = vmatprep.subr.bf16.mxu0 0
        %1462 = vmatpush1.bf16.msra.mxu0 0
        %1463 = vmatprep.subr.bf16.mxu0 0
        %1464 = vmatpush1.bf16.msra.mxu0 0
        %1465 = vmatprep.subr.bf16.mxu0 0
        %1466 = vmatpush1.bf16.msra.mxu0 0
        %1467 = vmatprep.subr.bf16.mxu0 0
        %1468 = vmatpush1.bf16.msra.mxu0 0
        %1469 = vmatprep.mubr.bf16.mxu0 0
        %1470 = vmatmul.mubr.bf16.gmra.mrb[0].mxu0 %v1432
        %v1471 = vpop.f32.mrb[0].mxu0
        %v1472 = vadd.f32 0.0, %v1471
        %v1473 = vpop.f32.mrb[0].mxu0
        %v1474 = vpop.f32.mrb[0].mxu0
        %v1475 = vpop.f32.mrb[0].mxu0
        %1476 = vdwg.mxu0
        %v1477 = vsel %vm785, %v1334, 0.0
        %v1478 = vsel %vm785, %v1380, 0.0
        %v1479 = vadd.f32 %v1477, %v1478
        %v1480 = vsel %vm785, %v1426, 0.0
        %v1481 = vadd.f32 %v1479, %v1480
        %v1482 = vsel %vm785, %v1472, 0.0
        %v1483 = vadd.f32 %v1481, %v1482
        %v1484 = vld [vmem:[%s4] sm:$0x1]
        %v1486 = vlaneseq
        %v1487 = vshrl.u32 %v1486, 7
        %v1488 = vsub.s32 0, %v1487
        %v1489 = vrot.slane %v1484, %v1488
        %v1491 = vadd.f32 %v1483, %v1489
        %v1492 = vadd.f32 %v760, %v1491
        %v1493 = vsel %vm785, %v1492, 0.0
        %1494 = vadd.xlane.f32.xlu0 %v1493
        %v1495 = vpop.xlane.xlu0 %1494
        %v1496 = vrcp.pop 32.0
        %v1497 = vmul.f32 %v1495, %v1496
        %v1498 = vsub.f32 %v1492, %v1497
        %v1499 = vmul.f32 %v1498, %v1498
        %v1500 = vsel %vm785, %v1499, 0.0
        %1501 = vadd.xlane.f32.xlu0 %v1500
        %v1502 = vpop.xlane.xlu0 %1501
        %v1503 = vmul.f32 %v1502, %v1496
        %v1504 = vadd.f32 %v1503, 1e-05
        %v1505 = vrsqrt.pop %v1504
        %v1506 = vmul.f32 %v1498, %v1505
        %v1507 = vld [vmem:[%s5] sm:$0x1]
        %v1509 = vlaneseq
        %v1510 = vshrl.u32 %v1509, 7
        %v1511 = vsub.s32 0, %v1510
        %v1512 = vrot.slane %v1507, %v1511
        %v1514 = vmul.f32 %v1506, %v1512
        %v1515 = vld [vmem:[%s6] sm:$0x1]
        %v1517 = vlaneseq
        %v1518 = vshrl.u32 %v1517, 7
        %v1519 = vsub.s32 0, %v1518
        %v1520 = vrot.slane %v1515, %v1519
        %v1522 = vadd.f32 %v1514, %v1520
        %v1523 = vpack.c.bf16 %v1522, %v1522
        %v1524 = vld [vmem:[%s9] sm:$0xff]
        %v1525 = vld [vmem:[%s9 + $0x8] sm:$0xff]
        %v1526 = vld [vmem:[%s9 + $0x10] sm:$0xff]
        %v1527 = vld [vmem:[%s9 + $0x18] sm:$0xff]
        %v1528 = vld [vmem:[%s9 + $0x20] sm:$0xff]
        %v1529 = vld [vmem:[%s9 + $0x28] sm:$0xff]
        %v1530 = vld [vmem:[%s9 + $0x30] sm:$0xff]
        %v1531 = vld [vmem:[%s9 + $0x38] sm:$0xff]
        %v1532 = vld [vmem:[%s9 + $0x40] sm:$0xff]
        %v1533 = vld [vmem:[%s9 + $0x48] sm:$0xff]
        %v1534 = vld [vmem:[%s9 + $0x50] sm:$0xff]
        %v1535 = vld [vmem:[%s9 + $0x58] sm:$0xff]
        %v1536 = vld [vmem:[%s9 + $0x60] sm:$0xff]
        %v1537 = vld [vmem:[%s9 + $0x68] sm:$0xff]
        %v1538 = vld [vmem:[%s9 + $0x70] sm:$0xff]
        %v1539 = vld [vmem:[%s9 + $0x78] sm:$0xff]
        %v1540 = vld [vmem:[%s9 + $0x80] sm:$0xff]
        %v1541 = vld [vmem:[%s9 + $0x88] sm:$0xff]
        %v1542 = vld [vmem:[%s9 + $0x90] sm:$0xff]
        %v1543 = vld [vmem:[%s9 + $0x98] sm:$0xff]
        %v1544 = vld [vmem:[%s9 + $0xa0] sm:$0xff]
        %v1545 = vld [vmem:[%s9 + $0xa8] sm:$0xff]
        %v1546 = vld [vmem:[%s9 + $0xb0] sm:$0xff]
        %v1547 = vld [vmem:[%s9 + $0xb8] sm:$0xff]
        %v1548 = vld [vmem:[%s9 + $0xc0] sm:$0xff]
        %v1549 = vld [vmem:[%s9 + $0xc8] sm:$0xff]
        %v1550 = vld [vmem:[%s9 + $0xd0] sm:$0xff]
        %v1551 = vld [vmem:[%s9 + $0xd8] sm:$0xff]
        %v1552 = vld [vmem:[%s9 + $0xe0] sm:$0xff]
        %v1553 = vld [vmem:[%s9 + $0xe8] sm:$0xff]
        %v1554 = vld [vmem:[%s9 + $0xf0] sm:$0xff]
        %v1555 = vld [vmem:[%s9 + $0xf8] sm:$0xff]
        %v1556 = vld [vmem:[%s10] sm:$0xff]
        %v1557 = vld [vmem:[%s10 + $0x8] sm:$0xff]
        %v1560 = vlaneseq
        %v1561 = vshrl.u32 %v1560, 7
        %v1562 = vsub.s32 0, %v1561
        %v1563 = vrot.slane %v1556, %v1562
        %v1564 = vlaneseq
        %v1565 = vshrl.u32 %v1564, 7
        %v1566 = vsub.s32 1, %v1565
        %v1567 = vrot.slane %v1556, %v1566
        %v1568 = vlaneseq
        %v1569 = vshrl.u32 %v1568, 7
        %v1570 = vsub.s32 2, %v1569
        %v1571 = vrot.slane %v1556, %v1570
        %v1572 = vlaneseq
        %v1573 = vshrl.u32 %v1572, 7
        %v1574 = vsub.s32 3, %v1573
        %v1575 = vrot.slane %v1556, %v1574
        %v1576 = vlaneseq
        %v1577 = vshrl.u32 %v1576, 7
        %v1578 = vsub.s32 4, %v1577
        %v1579 = vrot.slane %v1556, %v1578
        %v1580 = vlaneseq
        %v1581 = vshrl.u32 %v1580, 7
        %v1582 = vsub.s32 5, %v1581
        %v1583 = vrot.slane %v1556, %v1582
        %v1584 = vlaneseq
        %v1585 = vshrl.u32 %v1584, 7
        %v1586 = vsub.s32 6, %v1585
        %v1587 = vrot.slane %v1556, %v1586
        %v1588 = vlaneseq
        %v1589 = vshrl.u32 %v1588, 7
        %v1590 = vsub.s32 7, %v1589
        %v1591 = vrot.slane %v1556, %v1590
        %v1592 = vlaneseq
        %v1593 = vshrl.u32 %v1592, 7
        %v1594 = vsub.s32 0, %v1593
        %v1595 = vrot.slane %v1557, %v1594
        %v1596 = vlaneseq
        %v1597 = vshrl.u32 %v1596, 7
        %v1598 = vsub.s32 1, %v1597
        %v1599 = vrot.slane %v1557, %v1598
        %v1600 = vlaneseq
        %v1601 = vshrl.u32 %v1600, 7
        %v1602 = vsub.s32 2, %v1601
        %v1603 = vrot.slane %v1557, %v1602
        %v1604 = vlaneseq
        %v1605 = vshrl.u32 %v1604, 7
        %v1606 = vsub.s32 3, %v1605
        %v1607 = vrot.slane %v1557, %v1606
        %v1608 = vlaneseq
        %v1609 = vshrl.u32 %v1608, 7
        %v1610 = vsub.s32 4, %v1609
        %v1611 = vrot.slane %v1557, %v1610
        %v1612 = vlaneseq
        %v1613 = vshrl.u32 %v1612, 7
        %v1614 = vsub.s32 5, %v1613
        %v1615 = vrot.slane %v1557, %v1614
        %v1616 = vlaneseq
        %v1617 = vshrl.u32 %v1616, 7
        %v1618 = vsub.s32 6, %v1617
        %v1619 = vrot.slane %v1557, %v1618
        %v1620 = vlaneseq
        %v1621 = vshrl.u32 %v1620, 7
        %v1622 = vsub.s32 7, %v1621
        %v1623 = vrot.slane %v1557, %v1622
        %v1672 = vunpack.c.l.b16 %v1524
        %v1673 = vunpack.c.h.b16 %v1524
        %v1674 = vunpack.c.l.b16 %v1525
        %v1675 = vunpack.c.h.b16 %v1525
        %v1676 = vunpack.c.l.b16 %v1526
        %v1677 = vunpack.c.h.b16 %v1526
        %v1678 = vunpack.c.l.b16 %v1527
        %v1679 = vunpack.c.h.b16 %v1527
        %v1680 = vunpack.c.l.b16 %v1528
        %v1681 = vunpack.c.h.b16 %v1528
        %v1682 = vunpack.c.l.b16 %v1529
        %v1683 = vunpack.c.h.b16 %v1529
        %v1684 = vunpack.c.l.b16 %v1530
        %v1685 = vunpack.c.h.b16 %v1530
        %v1686 = vunpack.c.l.b16 %v1531
        %v1687 = vunpack.c.h.b16 %v1531
        %v1688 = vunpack.c.l.b16 %v1532
        %v1689 = vunpack.c.h.b16 %v1532
        %v1690 = vunpack.c.l.b16 %v1533
        %v1691 = vunpack.c.h.b16 %v1533
        %v1692 = vunpack.c.l.b16 %v1534
        %v1693 = vunpack.c.h.b16 %v1534
        %v1694 = vunpack.c.l.b16 %v1535
        %v1695 = vunpack.c.h.b16 %v1535
        %v1696 = vunpack.c.l.b16 %v1536
        %v1697 = vunpack.c.h.b16 %v1536
        %v1698 = vunpack.c.l.b16 %v1537
        %v1699 = vunpack.c.h.b16 %v1537
        %v1700 = vunpack.c.l.b16 %v1538
        %v1701 = vunpack.c.h.b16 %v1538
        %v1702 = vunpack.c.l.b16 %v1539
        %v1703 = vunpack.c.h.b16 %v1539
        %v1704 = vunpack.c.l.b16 %v1540
        %v1705 = vunpack.c.h.b16 %v1540
        %v1706 = vunpack.c.l.b16 %v1541
        %v1707 = vunpack.c.h.b16 %v1541
        %v1708 = vunpack.c.l.b16 %v1542
        %v1709 = vunpack.c.h.b16 %v1542
        %v1710 = vunpack.c.l.b16 %v1543
        %v1711 = vunpack.c.h.b16 %v1543
        %v1712 = vunpack.c.l.b16 %v1544
        %v1713 = vunpack.c.h.b16 %v1544
        %v1714 = vunpack.c.l.b16 %v1545
        %v1715 = vunpack.c.h.b16 %v1545
        %v1716 = vunpack.c.l.b16 %v1546
        %v1717 = vunpack.c.h.b16 %v1546
        %v1718 = vunpack.c.l.b16 %v1547
        %v1719 = vunpack.c.h.b16 %v1547
        %v1720 = vunpack.c.l.b16 %v1548
        %v1721 = vunpack.c.h.b16 %v1548
        %v1722 = vunpack.c.l.b16 %v1549
        %v1723 = vunpack.c.h.b16 %v1549
        %v1724 = vunpack.c.l.b16 %v1550
        %v1725 = vunpack.c.h.b16 %v1550
        %v1726 = vunpack.c.l.b16 %v1551
        %v1727 = vunpack.c.h.b16 %v1551
        %v1728 = vunpack.c.l.b16 %v1552
        %v1729 = vunpack.c.h.b16 %v1552
        %v1730 = vunpack.c.l.b16 %v1553
        %v1731 = vunpack.c.h.b16 %v1553
        %v1732 = vunpack.c.l.b16 %v1554
        %v1733 = vunpack.c.h.b16 %v1554
        %v1734 = vunpack.c.l.b16 %v1555
        %v1735 = vunpack.c.h.b16 %v1555
        %v1736 = vpack.c.b16 %v1688, %v1672
        %v1737 = vpack.c.b16 %v1689, %v1673
        %v1738 = vpack.c.b16 %v1690, %v1674
        %v1739 = vpack.c.b16 %v1691, %v1675
        %v1740 = vpack.c.b16 %v1692, %v1676
        %v1741 = vpack.c.b16 %v1693, %v1677
        %v1742 = vpack.c.b16 %v1694, %v1678
        %v1743 = vpack.c.b16 %v1695, %v1679
        %v1744 = vpack.c.b16 %v1696, %v1680
        %v1745 = vpack.c.b16 %v1697, %v1681
        %v1746 = vpack.c.b16 %v1698, %v1682
        %v1747 = vpack.c.b16 %v1699, %v1683
        %v1748 = vpack.c.b16 %v1700, %v1684
        %v1749 = vpack.c.b16 %v1701, %v1685
        %v1750 = vpack.c.b16 %v1702, %v1686
        %v1751 = vpack.c.b16 %v1703, %v1687
        %v1752 = vpack.c.b16 %v1720, %v1704
        %v1753 = vpack.c.b16 %v1721, %v1705
        %v1754 = vpack.c.b16 %v1722, %v1706
        %v1755 = vpack.c.b16 %v1723, %v1707
        %v1756 = vpack.c.b16 %v1724, %v1708
        %v1757 = vpack.c.b16 %v1725, %v1709
        %v1758 = vpack.c.b16 %v1726, %v1710
        %v1759 = vpack.c.b16 %v1727, %v1711
        %v1760 = vpack.c.b16 %v1728, %v1712
        %v1761 = vpack.c.b16 %v1729, %v1713
        %v1762 = vpack.c.b16 %v1730, %v1714
        %v1763 = vpack.c.b16 %v1731, %v1715
        %v1764 = vpack.c.b16 %v1732, %v1716
        %v1765 = vpack.c.b16 %v1733, %v1717
        %v1766 = vpack.c.b16 %v1734, %v1718
        %v1767 = vpack.c.b16 %v1735, %v1719
        %v1801 = vsel %vm785, %v1523, 0
        %1803 = vmatprep.subr.bf16.mxu0 %v1737
        %1804 = vmatpush1.bf16.msra.mxu0 %v1736
        %1805 = vmatprep.subr.bf16.mxu0 %v1753
        %1806 = vmatpush1.bf16.msra.mxu0 %v1752
        %1807 = vmatprep.subr.bf16.mxu0 0
        %1808 = vmatpush1.bf16.msra.mxu0 0
        %1809 = vmatprep.subr.bf16.mxu0 0
        %1810 = vmatpush1.bf16.msra.mxu0 0
        %1811 = vmatprep.subr.bf16.mxu0 0
        %1812 = vmatpush1.bf16.msra.mxu0 0
        %1813 = vmatprep.subr.bf16.mxu0 0
        %1814 = vmatpush1.bf16.msra.mxu0 0
        %1815 = vmatprep.subr.bf16.mxu0 0
        %1816 = vmatpush1.bf16.msra.mxu0 0
        %1817 = vmatprep.subr.bf16.mxu0 0
        %1818 = vmatpush1.bf16.msra.mxu0 0
        %1819 = vmatprep.subr.bf16.mxu0 0
        %1820 = vmatpush1.bf16.msra.mxu0 0
        %1821 = vmatprep.subr.bf16.mxu0 0
        %1822 = vmatpush1.bf16.msra.mxu0 0
        %1823 = vmatprep.subr.bf16.mxu0 0
        %1824 = vmatpush1.bf16.msra.mxu0 0
        %1825 = vmatprep.subr.bf16.mxu0 0
        %1826 = vmatpush1.bf16.msra.mxu0 0
        %1827 = vmatprep.subr.bf16.mxu0 0
        %1828 = vmatpush1.bf16.msra.mxu0 0
        %1829 = vmatprep.subr.bf16.mxu0 0
        %1830 = vmatpush1.bf16.msra.mxu0 0
        %1831 = vmatprep.subr.bf16.mxu0 0
        %1832 = vmatpush1.bf16.msra.mxu0 0
        %1833 = vmatprep.subr.bf16.mxu0 0
        %1834 = vmatpush1.bf16.msra.mxu0 0
        %1835 = vmatprep.mubr.bf16.mxu0 0
        %1836 = vmatmul.mubr.bf16.gmra.mrb[0].mxu0 %v1801
        %v1837 = vpop.f32.mrb[0].mxu0
        %v1838 = vadd.f32 %v1563, %v1837
        %v1839 = vpop.f32.mrb[0].mxu0
        %v1840 = vadd.f32 %v1567, %v1839
        %v1841 = vpop.f32.mrb[0].mxu0
        %v1842 = vpop.f32.mrb[0].mxu0
        %1843 = vdwg.mxu0
        %1844 = vmatprep.subr.bf16.mxu0 %v1739
        %1845 = vmatpush1.bf16.msra.mxu0 %v1738
        %1846 = vmatprep.subr.bf16.mxu0 %v1755
        %1847 = vmatpush1.bf16.msra.mxu0 %v1754
        %1848 = vmatprep.subr.bf16.mxu0 0
        %1849 = vmatpush1.bf16.msra.mxu0 0
        %1850 = vmatprep.subr.bf16.mxu0 0
        %1851 = vmatpush1.bf16.msra.mxu0 0
        %1852 = vmatprep.subr.bf16.mxu0 0
        %1853 = vmatpush1.bf16.msra.mxu0 0
        %1854 = vmatprep.subr.bf16.mxu0 0
        %1855 = vmatpush1.bf16.msra.mxu0 0
        %1856 = vmatprep.subr.bf16.mxu0 0
        %1857 = vmatpush1.bf16.msra.mxu0 0
        %1858 = vmatprep.subr.bf16.mxu0 0
        %1859 = vmatpush1.bf16.msra.mxu0 0
        %1860 = vmatprep.subr.bf16.mxu0 0
        %1861 = vmatpush1.bf16.msra.mxu0 0
        %1862 = vmatprep.subr.bf16.mxu0 0
        %1863 = vmatpush1.bf16.msra.mxu0 0
        %1864 = vmatprep.subr.bf16.mxu0 0
        %1865 = vmatpush1.bf16.msra.mxu0 0
        %1866 = vmatprep.subr.bf16.mxu0 0
        %1867 = vmatpush1.bf16.msra.mxu0 0
        %1868 = vmatprep.subr.bf16.mxu0 0
        %1869 = vmatpush1.bf16.msra.mxu0 0
        %1870 = vmatprep.subr.bf16.mxu0 0
        %1871 = vmatpush1.bf16.msra.mxu0 0
        %1872 = vmatprep.subr.bf16.mxu0 0
        %1873 = vmatpush1.bf16.msra.mxu0 0
        %1874 = vmatprep.subr.bf16.mxu0 0
        %1875 = vmatpush1.bf16.msra.mxu0 0
        %1876 = vmatprep.mubr.bf16.mxu0 0
        %1877 = vmatmul.mubr.bf16.gmra.mrb[0].mxu0 %v1801
        %v1878 = vpop.f32.mrb[0].mxu0
        %v1879 = vadd.f32 %v1571, %v1878
        %v1880 = vpop.f32.mrb[0].mxu0
        %v1881 = vadd.f32 %v1575, %v1880
        %v1882 = vpop.f32.mrb[0].mxu0
        %v1883 = vpop.f32.mrb[0].mxu0
        %1884 = vdwg.mxu0
        %1885 = vmatprep.subr.bf16.mxu0 %v1741
        %1886 = vmatpush1.bf16.msra.mxu0 %v1740
        %1887 = vmatprep.subr.bf16.mxu0 %v1757
        %1888 = vmatpush1.bf16.msra.mxu0 %v1756
        %1889 = vmatprep.subr.bf16.mxu0 0
        %1890 = vmatpush1.bf16.msra.mxu0 0
        %1891 = vmatprep.subr.bf16.mxu0 0
        %1892 = vmatpush1.bf16.msra.mxu0 0
        %1893 = vmatprep.subr.bf16.mxu0 0
        %1894 = vmatpush1.bf16.msra.mxu0 0
        %1895 = vmatprep.subr.bf16.mxu0 0
        %1896 = vmatpush1.bf16.msra.mxu0 0
        %1897 = vmatprep.subr.bf16.mxu0 0
        %1898 = vmatpush1.bf16.msra.mxu0 0
        %1899 = vmatprep.subr.bf16.mxu0 0
        %1900 = vmatpush1.bf16.msra.mxu0 0
        %1901 = vmatprep.subr.bf16.mxu0 0
        %1902 = vmatpush1.bf16.msra.mxu0 0
        %1903 = vmatprep.subr.bf16.mxu0 0
        %1904 = vmatpush1.bf16.msra.mxu0 0
        %1905 = vmatprep.subr.bf16.mxu0 0
        %1906 = vmatpush1.bf16.msra.mxu0 0
        %1907 = vmatprep.subr.bf16.mxu0 0
        %1908 = vmatpush1.bf16.msra.mxu0 0
        %1909 = vmatprep.subr.bf16.mxu0 0
        %1910 = vmatpush1.bf16.msra.mxu0 0
        %1911 = vmatprep.subr.bf16.mxu0 0
        %1912 = vmatpush1.bf16.msra.mxu0 0
        %1913 = vmatprep.subr.bf16.mxu0 0
        %1914 = vmatpush1.bf16.msra.mxu0 0
        %1915 = vmatprep.subr.bf16.mxu0 0
        %1916 = vmatpush1.bf16.msra.mxu0 0
        %1917 = vmatprep.mubr.bf16.mxu0 0
        %1918 = vmatmul.mubr.bf16.gmra.mrb[0].mxu0 %v1801
        %v1919 = vpop.f32.mrb[0].mxu0
        %v1920 = vadd.f32 %v1579, %v1919
        %v1921 = vpop.f32.mrb[0].mxu0
        %v1922 = vadd.f32 %v1583, %v1921
        %v1923 = vpop.f32.mrb[0].mxu0
        %v1924 = vpop.f32.mrb[0].mxu0
        %1925 = vdwg.mxu0
        %1926 = vmatprep.subr.bf16.mxu0 %v1743
        %1927 = vmatpush1.bf16.msra.mxu0 %v1742
        %1928 = vmatprep.subr.bf16.mxu0 %v1759
        %1929 = vmatpush1.bf16.msra.mxu0 %v1758
        %1930 = vmatprep.subr.bf16.mxu0 0
        %1931 = vmatpush1.bf16.msra.mxu0 0
        %1932 = vmatprep.subr.bf16.mxu0 0
        %1933 = vmatpush1.bf16.msra.mxu0 0
        %1934 = vmatprep.subr.bf16.mxu0 0
        %1935 = vmatpush1.bf16.msra.mxu0 0
        %1936 = vmatprep.subr.bf16.mxu0 0
        %1937 = vmatpush1.bf16.msra.mxu0 0
        %1938 = vmatprep.subr.bf16.mxu0 0
        %1939 = vmatpush1.bf16.msra.mxu0 0
        %1940 = vmatprep.subr.bf16.mxu0 0
        %1941 = vmatpush1.bf16.msra.mxu0 0
        %1942 = vmatprep.subr.bf16.mxu0 0
        %1943 = vmatpush1.bf16.msra.mxu0 0
        %1944 = vmatprep.subr.bf16.mxu0 0
        %1945 = vmatpush1.bf16.msra.mxu0 0
        %1946 = vmatprep.subr.bf16.mxu0 0
        %1947 = vmatpush1.bf16.msra.mxu0 0
        %1948 = vmatprep.subr.bf16.mxu0 0
        %1949 = vmatpush1.bf16.msra.mxu0 0
        %1950 = vmatprep.subr.bf16.mxu0 0
        %1951 = vmatpush1.bf16.msra.mxu0 0
        %1952 = vmatprep.subr.bf16.mxu0 0
        %1953 = vmatpush1.bf16.msra.mxu0 0
        %1954 = vmatprep.subr.bf16.mxu0 0
        %1955 = vmatpush1.bf16.msra.mxu0 0
        %1956 = vmatprep.subr.bf16.mxu0 0
        %1957 = vmatpush1.bf16.msra.mxu0 0
        %1958 = vmatprep.mubr.bf16.mxu0 0
        %1959 = vmatmul.mubr.bf16.gmra.mrb[0].mxu0 %v1801
        %v1960 = vpop.f32.mrb[0].mxu0
        %v1961 = vadd.f32 %v1587, %v1960
        %v1962 = vpop.f32.mrb[0].mxu0
        %v1963 = vadd.f32 %v1591, %v1962
        %v1964 = vpop.f32.mrb[0].mxu0
        %v1965 = vpop.f32.mrb[0].mxu0
        %1966 = vdwg.mxu0
        %1967 = vmatprep.subr.bf16.mxu0 %v1745
        %1968 = vmatpush1.bf16.msra.mxu0 %v1744
        %1969 = vmatprep.subr.bf16.mxu0 %v1761
        %1970 = vmatpush1.bf16.msra.mxu0 %v1760
        %1971 = vmatprep.subr.bf16.mxu0 0
        %1972 = vmatpush1.bf16.msra.mxu0 0
        %1973 = vmatprep.subr.bf16.mxu0 0
        %1974 = vmatpush1.bf16.msra.mxu0 0
        %1975 = vmatprep.subr.bf16.mxu0 0
        %1976 = vmatpush1.bf16.msra.mxu0 0
        %1977 = vmatprep.subr.bf16.mxu0 0
        %1978 = vmatpush1.bf16.msra.mxu0 0
        %1979 = vmatprep.subr.bf16.mxu0 0
        %1980 = vmatpush1.bf16.msra.mxu0 0
        %1981 = vmatprep.subr.bf16.mxu0 0
        %1982 = vmatpush1.bf16.msra.mxu0 0
        %1983 = vmatprep.subr.bf16.mxu0 0
        %1984 = vmatpush1.bf16.msra.mxu0 0
        %1985 = vmatprep.subr.bf16.mxu0 0
        %1986 = vmatpush1.bf16.msra.mxu0 0
        %1987 = vmatprep.subr.bf16.mxu0 0
        %1988 = vmatpush1.bf16.msra.mxu0 0
        %1989 = vmatprep.subr.bf16.mxu0 0
        %1990 = vmatpush1.bf16.msra.mxu0 0
        %1991 = vmatprep.subr.bf16.mxu0 0
        %1992 = vmatpush1.bf16.msra.mxu0 0
        %1993 = vmatprep.subr.bf16.mxu0 0
        %1994 = vmatpush1.bf16.msra.mxu0 0
        %1995 = vmatprep.subr.bf16.mxu0 0
        %1996 = vmatpush1.bf16.msra.mxu0 0
        %1997 = vmatprep.subr.bf16.mxu0 0
        %1998 = vmatpush1.bf16.msra.mxu0 0
        %1999 = vmatprep.mubr.bf16.mxu0 0
        %2000 = vmatmul.mubr.bf16.gmra.mrb[0].mxu0 %v1801
        %v2001 = vpop.f32.mrb[0].mxu0
        %v2002 = vadd.f32 %v1595, %v2001
        %v2003 = vpop.f32.mrb[0].mxu0
        %v2004 = vadd.f32 %v1599, %v2003
        %v2005 = vpop.f32.mrb[0].mxu0
        %v2006 = vpop.f32.mrb[0].mxu0
        %2007 = vdwg.mxu0
        %2008 = vmatprep.subr.bf16.mxu0 %v1747
        %2009 = vmatpush1.bf16.msra.mxu0 %v1746
        %2010 = vmatprep.subr.bf16.mxu0 %v1763
        %2011 = vmatpush1.bf16.msra.mxu0 %v1762
        %2012 = vmatprep.subr.bf16.mxu0 0
        %2013 = vmatpush1.bf16.msra.mxu0 0
        %2014 = vmatprep.subr.bf16.mxu0 0
        %2015 = vmatpush1.bf16.msra.mxu0 0
        %2016 = vmatprep.subr.bf16.mxu0 0
        %2017 = vmatpush1.bf16.msra.mxu0 0
        %2018 = vmatprep.subr.bf16.mxu0 0
        %2019 = vmatpush1.bf16.msra.mxu0 0
        %2020 = vmatprep.subr.bf16.mxu0 0
        %2021 = vmatpush1.bf16.msra.mxu0 0
        %2022 = vmatprep.subr.bf16.mxu0 0
        %2023 = vmatpush1.bf16.msra.mxu0 0
        %2024 = vmatprep.subr.bf16.mxu0 0
        %2025 = vmatpush1.bf16.msra.mxu0 0
        %2026 = vmatprep.subr.bf16.mxu0 0
        %2027 = vmatpush1.bf16.msra.mxu0 0
        %2028 = vmatprep.subr.bf16.mxu0 0
        %2029 = vmatpush1.bf16.msra.mxu0 0
        %2030 = vmatprep.subr.bf16.mxu0 0
        %2031 = vmatpush1.bf16.msra.mxu0 0
        %2032 = vmatprep.subr.bf16.mxu0 0
        %2033 = vmatpush1.bf16.msra.mxu0 0
        %2034 = vmatprep.subr.bf16.mxu0 0
        %2035 = vmatpush1.bf16.msra.mxu0 0
        %2036 = vmatprep.subr.bf16.mxu0 0
        %2037 = vmatpush1.bf16.msra.mxu0 0
        %2038 = vmatprep.subr.bf16.mxu0 0
        %2039 = vmatpush1.bf16.msra.mxu0 0
        %2040 = vmatprep.mubr.bf16.mxu0 0
        %2041 = vmatmul.mubr.bf16.gmra.mrb[0].mxu0 %v1801
        %v2042 = vpop.f32.mrb[0].mxu0
        %v2043 = vadd.f32 %v1603, %v2042
        %v2044 = vpop.f32.mrb[0].mxu0
        %v2045 = vadd.f32 %v1607, %v2044
        %v2046 = vpop.f32.mrb[0].mxu0
        %v2047 = vpop.f32.mrb[0].mxu0
        %2048 = vdwg.mxu0
        %2049 = vmatprep.subr.bf16.mxu0 %v1749
        %2050 = vmatpush1.bf16.msra.mxu0 %v1748
        %2051 = vmatprep.subr.bf16.mxu0 %v1765
        %2052 = vmatpush1.bf16.msra.mxu0 %v1764
        %2053 = vmatprep.subr.bf16.mxu0 0
        %2054 = vmatpush1.bf16.msra.mxu0 0
        %2055 = vmatprep.subr.bf16.mxu0 0
        %2056 = vmatpush1.bf16.msra.mxu0 0
        %2057 = vmatprep.subr.bf16.mxu0 0
        %2058 = vmatpush1.bf16.msra.mxu0 0
        %2059 = vmatprep.subr.bf16.mxu0 0
        %2060 = vmatpush1.bf16.msra.mxu0 0
        %2061 = vmatprep.subr.bf16.mxu0 0
        %2062 = vmatpush1.bf16.msra.mxu0 0
        %2063 = vmatprep.subr.bf16.mxu0 0
        %2064 = vmatpush1.bf16.msra.mxu0 0
        %2065 = vmatprep.subr.bf16.mxu0 0
        %2066 = vmatpush1.bf16.msra.mxu0 0
        %2067 = vmatprep.subr.bf16.mxu0 0
        %2068 = vmatpush1.bf16.msra.mxu0 0
        %2069 = vmatprep.subr.bf16.mxu0 0
        %2070 = vmatpush1.bf16.msra.mxu0 0
        %2071 = vmatprep.subr.bf16.mxu0 0
        %2072 = vmatpush1.bf16.msra.mxu0 0
        %2073 = vmatprep.subr.bf16.mxu0 0
        %2074 = vmatpush1.bf16.msra.mxu0 0
        %2075 = vmatprep.subr.bf16.mxu0 0
        %2076 = vmatpush1.bf16.msra.mxu0 0
        %2077 = vmatprep.subr.bf16.mxu0 0
        %2078 = vmatpush1.bf16.msra.mxu0 0
        %2079 = vmatprep.subr.bf16.mxu0 0
        %2080 = vmatpush1.bf16.msra.mxu0 0
        %2081 = vmatprep.mubr.bf16.mxu0 0
        %2082 = vmatmul.mubr.bf16.gmra.mrb[0].mxu0 %v1801
        %v2083 = vpop.f32.mrb[0].mxu0
        %v2084 = vadd.f32 %v1611, %v2083
        %v2085 = vpop.f32.mrb[0].mxu0
        %v2086 = vadd.f32 %v1615, %v2085
        %v2087 = vpop.f32.mrb[0].mxu0
        %v2088 = vpop.f32.mrb[0].mxu0
        %2089 = vdwg.mxu0
        %2090 = vmatprep.subr.bf16.mxu0 %v1751
        %2091 = vmatpush1.bf16.msra.mxu0 %v1750
        %2092 = vmatprep.subr.bf16.mxu0 %v1767
        %2093 = vmatpush1.bf16.msra.mxu0 %v1766
        %2094 = vmatprep.subr.bf16.mxu0 0
        %2095 = vmatpush1.bf16.msra.mxu0 0
        %2096 = vmatprep.subr.bf16.mxu0 0
        %2097 = vmatpush1.bf16.msra.mxu0 0
        %2098 = vmatprep.subr.bf16.mxu0 0
        %2099 = vmatpush1.bf16.msra.mxu0 0
        %2100 = vmatprep.subr.bf16.mxu0 0
        %2101 = vmatpush1.bf16.msra.mxu0 0
        %2102 = vmatprep.subr.bf16.mxu0 0
        %2103 = vmatpush1.bf16.msra.mxu0 0
        %2104 = vmatprep.subr.bf16.mxu0 0
        %2105 = vmatpush1.bf16.msra.mxu0 0
        %2106 = vmatprep.subr.bf16.mxu0 0
        %2107 = vmatpush1.bf16.msra.mxu0 0
        %2108 = vmatprep.subr.bf16.mxu0 0
        %2109 = vmatpush1.bf16.msra.mxu0 0
        %2110 = vmatprep.subr.bf16.mxu0 0
        %2111 = vmatpush1.bf16.msra.mxu0 0
        %2112 = vmatprep.subr.bf16.mxu0 0
        %2113 = vmatpush1.bf16.msra.mxu0 0
        %2114 = vmatprep.subr.bf16.mxu0 0
        %2115 = vmatpush1.bf16.msra.mxu0 0
        %2116 = vmatprep.subr.bf16.mxu0 0
        %2117 = vmatpush1.bf16.msra.mxu0 0
        %2118 = vmatprep.subr.bf16.mxu0 0
        %2119 = vmatpush1.bf16.msra.mxu0 0
        %2120 = vmatprep.subr.bf16.mxu0 0
        %2121 = vmatpush1.bf16.msra.mxu0 0
        %2122 = vmatprep.mubr.bf16.mxu0 0
        %2123 = vmatmul.mubr.bf16.gmra.mrb[0].mxu0 %v1801
        %v2124 = vpop.f32.mrb[0].mxu0
        %v2125 = vadd.f32 %v1619, %v2124
        %v2126 = vpop.f32.mrb[0].mxu0
        %v2127 = vadd.f32 %v1623, %v2126
        %v2128 = vpop.f32.mrb[0].mxu0
        %v2129 = vpop.f32.mrb[0].mxu0
        %2130 = vdwg.mxu0
        %v2131 = vmax.f32 %v1838, 0.0
        %v2132 = vmax.f32 %v1840, 0.0
        %v2133 = vmax.f32 %v1879, 0.0
        %v2134 = vmax.f32 %v1881, 0.0
        %v2135 = vmax.f32 %v1920, 0.0
        %v2136 = vmax.f32 %v1922, 0.0
        %v2137 = vmax.f32 %v1961, 0.0
        %v2138 = vmax.f32 %v1963, 0.0
        %v2139 = vmax.f32 %v2002, 0.0
        %v2140 = vmax.f32 %v2004, 0.0
        %v2141 = vmax.f32 %v2043, 0.0
        %v2142 = vmax.f32 %v2045, 0.0
        %v2143 = vmax.f32 %v2084, 0.0
        %v2144 = vmax.f32 %v2086, 0.0
        %v2145 = vmax.f32 %v2125, 0.0
        %v2146 = vmax.f32 %v2127, 0.0
        %v2147 = vpack.c.bf16 %v2131, %v2131
        %v2148 = vpack.c.bf16 %v2132, %v2132
        %v2149 = vpack.c.bf16 %v2133, %v2133
        %v2150 = vpack.c.bf16 %v2134, %v2134
        %v2151 = vpack.c.bf16 %v2135, %v2135
        %v2152 = vpack.c.bf16 %v2136, %v2136
        %v2153 = vpack.c.bf16 %v2137, %v2137
        %v2154 = vpack.c.bf16 %v2138, %v2138
        %v2155 = vpack.c.bf16 %v2139, %v2139
        %v2156 = vpack.c.bf16 %v2140, %v2140
        %v2157 = vpack.c.bf16 %v2141, %v2141
        %v2158 = vpack.c.bf16 %v2142, %v2142
        %v2159 = vpack.c.bf16 %v2143, %v2143
        %v2160 = vpack.c.bf16 %v2144, %v2144
        %v2161 = vpack.c.bf16 %v2145, %v2145
        %v2162 = vpack.c.bf16 %v2146, %v2146
        %v2163 = vld [vmem:[%s11] sm:$0xf]
        %v2164 = vld [vmem:[%s11 + $0x4] sm:$0xf]
        %v2165 = vld [vmem:[%s11 + $0x8] sm:$0xf]
        %v2166 = vld [vmem:[%s11 + $0xc] sm:$0xf]
        %v2167 = vld [vmem:[%s11 + $0x10] sm:$0xf]
        %v2168 = vld [vmem:[%s11 + $0x14] sm:$0xf]
        %v2169 = vld [vmem:[%s11 + $0x18] sm:$0xf]
        %v2170 = vld [vmem:[%s11 + $0x1c] sm:$0xf]
        %v2171 = vld [vmem:[%s11 + $0x20] sm:$0xf]
        %v2172 = vld [vmem:[%s11 + $0x24] sm:$0xf]
        %v2173 = vld [vmem:[%s11 + $0x28] sm:$0xf]
        %v2174 = vld [vmem:[%s11 + $0x2c] sm:$0xf]
        %v2175 = vld [vmem:[%s11 + $0x30] sm:$0xf]
        %v2176 = vld [vmem:[%s11 + $0x34] sm:$0xf]
        %v2177 = vld [vmem:[%s11 + $0x38] sm:$0xf]
        %v2178 = vld [vmem:[%s11 + $0x3c] sm:$0xf]
        %v2179 = vld [vmem:[%s11 + $0x40] sm:$0xf]
        %v2180 = vld [vmem:[%s11 + $0x44] sm:$0xf]
        %v2181 = vld [vmem:[%s11 + $0x48] sm:$0xf]
        %v2182 = vld [vmem:[%s11 + $0x4c] sm:$0xf]
        %v2183 = vld [vmem:[%s11 + $0x50] sm:$0xf]
        %v2184 = vld [vmem:[%s11 + $0x54] sm:$0xf]
        %v2185 = vld [vmem:[%s11 + $0x58] sm:$0xf]
        %v2186 = vld [vmem:[%s11 + $0x5c] sm:$0xf]
        %v2187 = vld [vmem:[%s11 + $0x60] sm:$0xf]
        %v2188 = vld [vmem:[%s11 + $0x64] sm:$0xf]
        %v2189 = vld [vmem:[%s11 + $0x68] sm:$0xf]
        %v2190 = vld [vmem:[%s11 + $0x6c] sm:$0xf]
        %v2191 = vld [vmem:[%s11 + $0x70] sm:$0xf]
        %v2192 = vld [vmem:[%s11 + $0x74] sm:$0xf]
        %v2193 = vld [vmem:[%s11 + $0x78] sm:$0xf]
        %v2194 = vld [vmem:[%s11 + $0x7c] sm:$0xf]
        %v2195 = vld [vmem:[%s11 + $0x80] sm:$0xf]
        %v2196 = vld [vmem:[%s11 + $0x84] sm:$0xf]
        %v2197 = vld [vmem:[%s11 + $0x88] sm:$0xf]
        %v2198 = vld [vmem:[%s11 + $0x8c] sm:$0xf]
        %v2199 = vld [vmem:[%s11 + $0x90] sm:$0xf]
        %v2200 = vld [vmem:[%s11 + $0x94] sm:$0xf]
        %v2201 = vld [vmem:[%s11 + $0x98] sm:$0xf]
        %v2202 = vld [vmem:[%s11 + $0x9c] sm:$0xf]
        %v2203 = vld [vmem:[%s11 + $0xa0] sm:$0xf]
        %v2204 = vld [vmem:[%s11 + $0xa4] sm:$0xf]
        %v2205 = vld [vmem:[%s11 + $0xa8] sm:$0xf]
        %v2206 = vld [vmem:[%s11 + $0xac] sm:$0xf]
        %v2207 = vld [vmem:[%s11 + $0xb0] sm:$0xf]
        %v2208 = vld [vmem:[%s11 + $0xb4] sm:$0xf]
        %v2209 = vld [vmem:[%s11 + $0xb8] sm:$0xf]
        %v2210 = vld [vmem:[%s11 + $0xbc] sm:$0xf]
        %v2211 = vld [vmem:[%s11 + $0xc0] sm:$0xf]
        %v2212 = vld [vmem:[%s11 + $0xc4] sm:$0xf]
        %v2213 = vld [vmem:[%s11 + $0xc8] sm:$0xf]
        %v2214 = vld [vmem:[%s11 + $0xcc] sm:$0xf]
        %v2215 = vld [vmem:[%s11 + $0xd0] sm:$0xf]
        %v2216 = vld [vmem:[%s11 + $0xd4] sm:$0xf]
        %v2217 = vld [vmem:[%s11 + $0xd8] sm:$0xf]
        %v2218 = vld [vmem:[%s11 + $0xdc] sm:$0xf]
        %v2219 = vld [vmem:[%s11 + $0xe0] sm:$0xf]
        %v2220 = vld [vmem:[%s11 + $0xe4] sm:$0xf]
        %v2221 = vld [vmem:[%s11 + $0xe8] sm:$0xf]
        %v2222 = vld [vmem:[%s11 + $0xec] sm:$0xf]
        %v2223 = vld [vmem:[%s11 + $0xf0] sm:$0xf]
        %v2224 = vld [vmem:[%s11 + $0xf4] sm:$0xf]
        %v2225 = vld [vmem:[%s11 + $0xf8] sm:$0xf]
        %v2226 = vld [vmem:[%s11 + $0xfc] sm:$0xf]
        %v2227 = vld [vmem:[%s11 + $0x100] sm:$0xf]
        %v2228 = vld [vmem:[%s11 + $0x104] sm:$0xf]
        %v2229 = vld [vmem:[%s11 + $0x108] sm:$0xf]
        %v2230 = vld [vmem:[%s11 + $0x10c] sm:$0xf]
        %v2231 = vld [vmem:[%s11 + $0x110] sm:$0xf]
        %v2232 = vld [vmem:[%s11 + $0x114] sm:$0xf]
        %v2233 = vld [vmem:[%s11 + $0x118] sm:$0xf]
        %v2234 = vld [vmem:[%s11 + $0x11c] sm:$0xf]
        %v2235 = vld [vmem:[%s11 + $0x120] sm:$0xf]
        %v2236 = vld [vmem:[%s11 + $0x124] sm:$0xf]
        %v2237 = vld [vmem:[%s11 + $0x128] sm:$0xf]
        %v2238 = vld [vmem:[%s11 + $0x12c] sm:$0xf]
        %v2239 = vld [vmem:[%s11 + $0x130] sm:$0xf]
        %v2240 = vld [vmem:[%s11 + $0x134] sm:$0xf]
        %v2241 = vld [vmem:[%s11 + $0x138] sm:$0xf]
        %v2242 = vld [vmem:[%s11 + $0x13c] sm:$0xf]
        %v2243 = vld [vmem:[%s11 + $0x140] sm:$0xf]
        %v2244 = vld [vmem:[%s11 + $0x144] sm:$0xf]
        %v2245 = vld [vmem:[%s11 + $0x148] sm:$0xf]
        %v2246 = vld [vmem:[%s11 + $0x14c] sm:$0xf]
        %v2247 = vld [vmem:[%s11 + $0x150] sm:$0xf]
        %v2248 = vld [vmem:[%s11 + $0x154] sm:$0xf]
        %v2249 = vld [vmem:[%s11 + $0x158] sm:$0xf]
        %v2250 = vld [vmem:[%s11 + $0x15c] sm:$0xf]
        %v2251 = vld [vmem:[%s11 + $0x160] sm:$0xf]
        %v2252 = vld [vmem:[%s11 + $0x164] sm:$0xf]
        %v2253 = vld [vmem:[%s11 + $0x168] sm:$0xf]
        %v2254 = vld [vmem:[%s11 + $0x16c] sm:$0xf]
        %v2255 = vld [vmem:[%s11 + $0x170] sm:$0xf]
        %v2256 = vld [vmem:[%s11 + $0x174] sm:$0xf]
        %v2257 = vld [vmem:[%s11 + $0x178] sm:$0xf]
        %v2258 = vld [vmem:[%s11 + $0x17c] sm:$0xf]
        %v2259 = vld [vmem:[%s11 + $0x180] sm:$0xf]
        %v2260 = vld [vmem:[%s11 + $0x184] sm:$0xf]
        %v2261 = vld [vmem:[%s11 + $0x188] sm:$0xf]
        %v2262 = vld [vmem:[%s11 + $0x18c] sm:$0xf]
        %v2263 = vld [vmem:[%s11 + $0x190] sm:$0xf]
        %v2264 = vld [vmem:[%s11 + $0x194] sm:$0xf]
        %v2265 = vld [vmem:[%s11 + $0x198] sm:$0xf]
        %v2266 = vld [vmem:[%s11 + $0x19c] sm:$0xf]
        %v2267 = vld [vmem:[%s11 + $0x1a0] sm:$0xf]
        %v2268 = vld [vmem:[%s11 + $0x1a4] sm:$0xf]
        %v2269 = vld [vmem:[%s11 + $0x1a8] sm:$0xf]
        %v2270 = vld [vmem:[%s11 + $0x1ac] sm:$0xf]
        %v2271 = vld [vmem:[%s11 + $0x1b0] sm:$0xf]
        %v2272 = vld [vmem:[%s11 + $0x1b4] sm:$0xf]
        %v2273 = vld [vmem:[%s11 + $0x1b8] sm:$0xf]
        %v2274 = vld [vmem:[%s11 + $0x1bc] sm:$0xf]
        %v2275 = vld [vmem:[%s11 + $0x1c0] sm:$0xf]
        %v2276 = vld [vmem:[%s11 + $0x1c4] sm:$0xf]
        %v2277 = vld [vmem:[%s11 + $0x1c8] sm:$0xf]
        %v2278 = vld [vmem:[%s11 + $0x1cc] sm:$0xf]
        %v2279 = vld [vmem:[%s11 + $0x1d0] sm:$0xf]
        %v2280 = vld [vmem:[%s11 + $0x1d4] sm:$0xf]
        %v2281 = vld [vmem:[%s11 + $0x1d8] sm:$0xf]
        %v2282 = vld [vmem:[%s11 + $0x1dc] sm:$0xf]
        %v2283 = vld [vmem:[%s11 + $0x1e0] sm:$0xf]
        %v2284 = vld [vmem:[%s11 + $0x1e4] sm:$0xf]
        %v2285 = vld [vmem:[%s11 + $0x1e8] sm:$0xf]
        %v2286 = vld [vmem:[%s11 + $0x1ec] sm:$0xf]
        %v2287 = vld [vmem:[%s11 + $0x1f0] sm:$0xf]
        %v2288 = vld [vmem:[%s11 + $0x1f4] sm:$0xf]
        %v2289 = vld [vmem:[%s11 + $0x1f8] sm:$0xf]
        %v2290 = vld [vmem:[%s11 + $0x1fc] sm:$0xf]
        %v2291 = vld [vmem:[%s11 + $0x200] sm:$0xf]
        %v2292 = vld [vmem:[%s11 + $0x204] sm:$0xf]
        %v2293 = vld [vmem:[%s11 + $0x208] sm:$0xf]
        %v2294 = vld [vmem:[%s11 + $0x20c] sm:$0xf]
        %v2295 = vld [vmem:[%s11 + $0x210] sm:$0xf]
        %v2296 = vld [vmem:[%s11 + $0x214] sm:$0xf]
        %v2297 = vld [vmem:[%s11 + $0x218] sm:$0xf]
        %v2298 = vld [vmem:[%s11 + $0x21c] sm:$0xf]
        %v2299 = vld [vmem:[%s11 + $0x220] sm:$0xf]
        %v2300 = vld [vmem:[%s11 + $0x224] sm:$0xf]
        %v2301 = vld [vmem:[%s11 + $0x228] sm:$0xf]
        %v2302 = vld [vmem:[%s11 + $0x22c] sm:$0xf]
        %v2303 = vld [vmem:[%s11 + $0x230] sm:$0xf]
        %v2304 = vld [vmem:[%s11 + $0x234] sm:$0xf]
        %v2305 = vld [vmem:[%s11 + $0x238] sm:$0xf]
        %v2306 = vld [vmem:[%s11 + $0x23c] sm:$0xf]
        %v2307 = vld [vmem:[%s11 + $0x240] sm:$0xf]
        %v2308 = vld [vmem:[%s11 + $0x244] sm:$0xf]
        %v2309 = vld [vmem:[%s11 + $0x248] sm:$0xf]
        %v2310 = vld [vmem:[%s11 + $0x24c] sm:$0xf]
        %v2311 = vld [vmem:[%s11 + $0x250] sm:$0xf]
        %v2312 = vld [vmem:[%s11 + $0x254] sm:$0xf]
        %v2313 = vld [vmem:[%s11 + $0x258] sm:$0xf]
        %v2314 = vld [vmem:[%s11 + $0x25c] sm:$0xf]
        %v2315 = vld [vmem:[%s11 + $0x260] sm:$0xf]
        %v2316 = vld [vmem:[%s11 + $0x264] sm:$0xf]
        %v2317 = vld [vmem:[%s11 + $0x268] sm:$0xf]
        %v2318 = vld [vmem:[%s11 + $0x26c] sm:$0xf]
        %v2319 = vld [vmem:[%s11 + $0x270] sm:$0xf]
        %v2320 = vld [vmem:[%s11 + $0x274] sm:$0xf]
        %v2321 = vld [vmem:[%s11 + $0x278] sm:$0xf]
        %v2322 = vld [vmem:[%s11 + $0x27c] sm:$0xf]
        %v2323 = vld [vmem:[%s11 + $0x280] sm:$0xf]
        %v2324 = vld [vmem:[%s11 + $0x284] sm:$0xf]
        %v2325 = vld [vmem:[%s11 + $0x288] sm:$0xf]
        %v2326 = vld [vmem:[%s11 + $0x28c] sm:$0xf]
        %v2327 = vld [vmem:[%s11 + $0x290] sm:$0xf]
        %v2328 = vld [vmem:[%s11 + $0x294] sm:$0xf]
        %v2329 = vld [vmem:[%s11 + $0x298] sm:$0xf]
        %v2330 = vld [vmem:[%s11 + $0x29c] sm:$0xf]
        %v2331 = vld [vmem:[%s11 + $0x2a0] sm:$0xf]
        %v2332 = vld [vmem:[%s11 + $0x2a4] sm:$0xf]
        %v2333 = vld [vmem:[%s11 + $0x2a8] sm:$0xf]
        %v2334 = vld [vmem:[%s11 + $0x2ac] sm:$0xf]
        %v2335 = vld [vmem:[%s11 + $0x2b0] sm:$0xf]
        %v2336 = vld [vmem:[%s11 + $0x2b4] sm:$0xf]
        %v2337 = vld [vmem:[%s11 + $0x2b8] sm:$0xf]
        %v2338 = vld [vmem:[%s11 + $0x2bc] sm:$0xf]
        %v2339 = vld [vmem:[%s11 + $0x2c0] sm:$0xf]
        %v2340 = vld [vmem:[%s11 + $0x2c4] sm:$0xf]
        %v2341 = vld [vmem:[%s11 + $0x2c8] sm:$0xf]
        %v2342 = vld [vmem:[%s11 + $0x2cc] sm:$0xf]
        %v2343 = vld [vmem:[%s11 + $0x2d0] sm:$0xf]
        %v2344 = vld [vmem:[%s11 + $0x2d4] sm:$0xf]
        %v2345 = vld [vmem:[%s11 + $0x2d8] sm:$0xf]
        %v2346 = vld [vmem:[%s11 + $0x2dc] sm:$0xf]
        %v2347 = vld [vmem:[%s11 + $0x2e0] sm:$0xf]
        %v2348 = vld [vmem:[%s11 + $0x2e4] sm:$0xf]
        %v2349 = vld [vmem:[%s11 + $0x2e8] sm:$0xf]
        %v2350 = vld [vmem:[%s11 + $0x2ec] sm:$0xf]
        %v2351 = vld [vmem:[%s11 + $0x2f0] sm:$0xf]
        %v2352 = vld [vmem:[%s11 + $0x2f4] sm:$0xf]
        %v2353 = vld [vmem:[%s11 + $0x2f8] sm:$0xf]
        %v2354 = vld [vmem:[%s11 + $0x2fc] sm:$0xf]
        %v2355 = vld [vmem:[%s11 + $0x300] sm:$0xf]
        %v2356 = vld [vmem:[%s11 + $0x304] sm:$0xf]
        %v2357 = vld [vmem:[%s11 + $0x308] sm:$0xf]
        %v2358 = vld [vmem:[%s11 + $0x30c] sm:$0xf]
        %v2359 = vld [vmem:[%s11 + $0x310] sm:$0xf]
        %v2360 = vld [vmem:[%s11 + $0x314] sm:$0xf]
        %v2361 = vld [vmem:[%s11 + $0x318] sm:$0xf]
        %v2362 = vld [vmem:[%s11 + $0x31c] sm:$0xf]
        %v2363 = vld [vmem:[%s11 + $0x320] sm:$0xf]
        %v2364 = vld [vmem:[%s11 + $0x324] sm:$0xf]
        %v2365 = vld [vmem:[%s11 + $0x328] sm:$0xf]
        %v2366 = vld [vmem:[%s11 + $0x32c] sm:$0xf]
        %v2367 = vld [vmem:[%s11 + $0x330] sm:$0xf]
        %v2368 = vld [vmem:[%s11 + $0x334] sm:$0xf]
        %v2369 = vld [vmem:[%s11 + $0x338] sm:$0xf]
        %v2370 = vld [vmem:[%s11 + $0x33c] sm:$0xf]
        %v2371 = vld [vmem:[%s11 + $0x340] sm:$0xf]
        %v2372 = vld [vmem:[%s11 + $0x344] sm:$0xf]
        %v2373 = vld [vmem:[%s11 + $0x348] sm:$0xf]
        %v2374 = vld [vmem:[%s11 + $0x34c] sm:$0xf]
        %v2375 = vld [vmem:[%s11 + $0x350] sm:$0xf]
        %v2376 = vld [vmem:[%s11 + $0x354] sm:$0xf]
        %v2377 = vld [vmem:[%s11 + $0x358] sm:$0xf]
        %v2378 = vld [vmem:[%s11 + $0x35c] sm:$0xf]
        %v2379 = vld [vmem:[%s11 + $0x360] sm:$0xf]
        %v2380 = vld [vmem:[%s11 + $0x364] sm:$0xf]
        %v2381 = vld [vmem:[%s11 + $0x368] sm:$0xf]
        %v2382 = vld [vmem:[%s11 + $0x36c] sm:$0xf]
        %v2383 = vld [vmem:[%s11 + $0x370] sm:$0xf]
        %v2384 = vld [vmem:[%s11 + $0x374] sm:$0xf]
        %v2385 = vld [vmem:[%s11 + $0x378] sm:$0xf]
        %v2386 = vld [vmem:[%s11 + $0x37c] sm:$0xf]
        %v2387 = vld [vmem:[%s11 + $0x380] sm:$0xf]
        %v2388 = vld [vmem:[%s11 + $0x384] sm:$0xf]
        %v2389 = vld [vmem:[%s11 + $0x388] sm:$0xf]
        %v2390 = vld [vmem:[%s11 + $0x38c] sm:$0xf]
        %v2391 = vld [vmem:[%s11 + $0x390] sm:$0xf]
        %v2392 = vld [vmem:[%s11 + $0x394] sm:$0xf]
        %v2393 = vld [vmem:[%s11 + $0x398] sm:$0xf]
        %v2394 = vld [vmem:[%s11 + $0x39c] sm:$0xf]
        %v2395 = vld [vmem:[%s11 + $0x3a0] sm:$0xf]
        %v2396 = vld [vmem:[%s11 + $0x3a4] sm:$0xf]
        %v2397 = vld [vmem:[%s11 + $0x3a8] sm:$0xf]
        %v2398 = vld [vmem:[%s11 + $0x3ac] sm:$0xf]
        %v2399 = vld [vmem:[%s11 + $0x3b0] sm:$0xf]
        %v2400 = vld [vmem:[%s11 + $0x3b4] sm:$0xf]
        %v2401 = vld [vmem:[%s11 + $0x3b8] sm:$0xf]
        %v2402 = vld [vmem:[%s11 + $0x3bc] sm:$0xf]
        %v2403 = vld [vmem:[%s11 + $0x3c0] sm:$0xf]
        %v2404 = vld [vmem:[%s11 + $0x3c4] sm:$0xf]
        %v2405 = vld [vmem:[%s11 + $0x3c8] sm:$0xf]
        %v2406 = vld [vmem:[%s11 + $0x3cc] sm:$0xf]
        %v2407 = vld [vmem:[%s11 + $0x3d0] sm:$0xf]
        %v2408 = vld [vmem:[%s11 + $0x3d4] sm:$0xf]
        %v2409 = vld [vmem:[%s11 + $0x3d8] sm:$0xf]
        %v2410 = vld [vmem:[%s11 + $0x3dc] sm:$0xf]
        %v2411 = vld [vmem:[%s11 + $0x3e0] sm:$0xf]
        %v2412 = vld [vmem:[%s11 + $0x3e4] sm:$0xf]
        %v2413 = vld [vmem:[%s11 + $0x3e8] sm:$0xf]
        %v2414 = vld [vmem:[%s11 + $0x3ec] sm:$0xf]
        %v2415 = vld [vmem:[%s11 + $0x3f0] sm:$0xf]
        %v2416 = vld [vmem:[%s11 + $0x3f4] sm:$0xf]
        %v2417 = vld [vmem:[%s11 + $0x3f8] sm:$0xf]
        %v2418 = vld [vmem:[%s11 + $0x3fc] sm:$0xf]
        %v2419 = vld [vmem:[%s12] sm:$0x1]
        %v2421 = vlaneseq
        %v2422 = vshrl.u32 %v2421, 7
        %v2423 = vsub.s32 0, %v2422
        %v2424 = vrot.slane %v2419, %v2423
        %v2682 = vunpack.c.l.b16 %v2163
        %v2683 = vunpack.c.l.b16 %v2164
        %v2684 = vunpack.c.l.b16 %v2165
        %v2685 = vunpack.c.l.b16 %v2166
        %v2686 = vunpack.c.l.b16 %v2167
        %v2687 = vunpack.c.l.b16 %v2168
        %v2688 = vunpack.c.l.b16 %v2169
        %v2689 = vunpack.c.l.b16 %v2170
        %v2690 = vunpack.c.l.b16 %v2171
        %v2691 = vunpack.c.l.b16 %v2172
        %v2692 = vunpack.c.l.b16 %v2173
        %v2693 = vunpack.c.l.b16 %v2174
        %v2694 = vunpack.c.l.b16 %v2175
        %v2695 = vunpack.c.l.b16 %v2176
        %v2696 = vunpack.c.l.b16 %v2177
        %v2697 = vunpack.c.l.b16 %v2178
        %v2698 = vunpack.c.l.b16 %v2179
        %v2699 = vunpack.c.l.b16 %v2180
        %v2700 = vunpack.c.l.b16 %v2181
        %v2701 = vunpack.c.l.b16 %v2182
        %v2702 = vunpack.c.l.b16 %v2183
        %v2703 = vunpack.c.l.b16 %v2184
        %v2704 = vunpack.c.l.b16 %v2185
        %v2705 = vunpack.c.l.b16 %v2186
        %v2706 = vunpack.c.l.b16 %v2187
        %v2707 = vunpack.c.l.b16 %v2188
        %v2708 = vunpack.c.l.b16 %v2189
        %v2709 = vunpack.c.l.b16 %v2190
        %v2710 = vunpack.c.l.b16 %v2191
        %v2711 = vunpack.c.l.b16 %v2192
        %v2712 = vunpack.c.l.b16 %v2193
        %v2713 = vunpack.c.l.b16 %v2194
        %v2714 = vunpack.c.l.b16 %v2195
        %v2715 = vunpack.c.l.b16 %v2196
        %v2716 = vunpack.c.l.b16 %v2197
        %v2717 = vunpack.c.l.b16 %v2198
        %v2718 = vunpack.c.l.b16 %v2199
        %v2719 = vunpack.c.l.b16 %v2200
        %v2720 = vunpack.c.l.b16 %v2201
        %v2721 = vunpack.c.l.b16 %v2202
        %v2722 = vunpack.c.l.b16 %v2203
        %v2723 = vunpack.c.l.b16 %v2204
        %v2724 = vunpack.c.l.b16 %v2205
        %v2725 = vunpack.c.l.b16 %v2206
        %v2726 = vunpack.c.l.b16 %v2207
        %v2727 = vunpack.c.l.b16 %v2208
        %v2728 = vunpack.c.l.b16 %v2209
        %v2729 = vunpack.c.l.b16 %v2210
        %v2730 = vunpack.c.l.b16 %v2211
        %v2731 = vunpack.c.l.b16 %v2212
        %v2732 = vunpack.c.l.b16 %v2213
        %v2733 = vunpack.c.l.b16 %v2214
        %v2734 = vunpack.c.l.b16 %v2215
        %v2735 = vunpack.c.l.b16 %v2216
        %v2736 = vunpack.c.l.b16 %v2217
        %v2737 = vunpack.c.l.b16 %v2218
        %v2738 = vunpack.c.l.b16 %v2219
        %v2739 = vunpack.c.l.b16 %v2220
        %v2740 = vunpack.c.l.b16 %v2221
        %v2741 = vunpack.c.l.b16 %v2222
        %v2742 = vunpack.c.l.b16 %v2223
        %v2743 = vunpack.c.l.b16 %v2224
        %v2744 = vunpack.c.l.b16 %v2225
        %v2745 = vunpack.c.l.b16 %v2226
        %v2746 = vunpack.c.l.b16 %v2227
        %v2747 = vunpack.c.l.b16 %v2228
        %v2748 = vunpack.c.l.b16 %v2229
        %v2749 = vunpack.c.l.b16 %v2230
        %v2750 = vunpack.c.l.b16 %v2231
        %v2751 = vunpack.c.l.b16 %v2232
        %v2752 = vunpack.c.l.b16 %v2233
        %v2753 = vunpack.c.l.b16 %v2234
        %v2754 = vunpack.c.l.b16 %v2235
        %v2755 = vunpack.c.l.b16 %v2236
        %v2756 = vunpack.c.l.b16 %v2237
        %v2757 = vunpack.c.l.b16 %v2238
        %v2758 = vunpack.c.l.b16 %v2239
        %v2759 = vunpack.c.l.b16 %v2240
        %v2760 = vunpack.c.l.b16 %v2241
        %v2761 = vunpack.c.l.b16 %v2242
        %v2762 = vunpack.c.l.b16 %v2243
        %v2763 = vunpack.c.l.b16 %v2244
        %v2764 = vunpack.c.l.b16 %v2245
        %v2765 = vunpack.c.l.b16 %v2246
        %v2766 = vunpack.c.l.b16 %v2247
        %v2767 = vunpack.c.l.b16 %v2248
        %v2768 = vunpack.c.l.b16 %v2249
        %v2769 = vunpack.c.l.b16 %v2250
        %v2770 = vunpack.c.l.b16 %v2251
        %v2771 = vunpack.c.l.b16 %v2252
        %v2772 = vunpack.c.l.b16 %v2253
        %v2773 = vunpack.c.l.b16 %v2254
        %v2774 = vunpack.c.l.b16 %v2255
        %v2775 = vunpack.c.l.b16 %v2256
        %v2776 = vunpack.c.l.b16 %v2257
        %v2777 = vunpack.c.l.b16 %v2258
        %v2778 = vunpack.c.l.b16 %v2259
        %v2779 = vunpack.c.l.b16 %v2260
        %v2780 = vunpack.c.l.b16 %v2261
        %v2781 = vunpack.c.l.b16 %v2262
        %v2782 = vunpack.c.l.b16 %v2263
        %v2783 = vunpack.c.l.b16 %v2264
        %v2784 = vunpack.c.l.b16 %v2265
        %v2785 = vunpack.c.l.b16 %v2266
        %v2786 = vunpack.c.l.b16 %v2267
        %v2787 = vunpack.c.l.b16 %v2268
        %v2788 = vunpack.c.l.b16 %v2269
        %v2789 = vunpack.c.l.b16 %v2270
        %v2790 = vunpack.c.l.b16 %v2271
        %v2791 = vunpack.c.l.b16 %v2272
        %v2792 = vunpack.c.l.b16 %v2273
        %v2793 = vunpack.c.l.b16 %v2274
        %v2794 = vunpack.c.l.b16 %v2275
        %v2795 = vunpack.c.l.b16 %v2276
        %v2796 = vunpack.c.l.b16 %v2277
        %v2797 = vunpack.c.l.b16 %v2278
        %v2798 = vunpack.c.l.b16 %v2279
        %v2799 = vunpack.c.l.b16 %v2280
        %v2800 = vunpack.c.l.b16 %v2281
        %v2801 = vunpack.c.l.b16 %v2282
        %v2802 = vunpack.c.l.b16 %v2283
        %v2803 = vunpack.c.l.b16 %v2284
        %v2804 = vunpack.c.l.b16 %v2285
        %v2805 = vunpack.c.l.b16 %v2286
        %v2806 = vunpack.c.l.b16 %v2287
        %v2807 = vunpack.c.l.b16 %v2288
        %v2808 = vunpack.c.l.b16 %v2289
        %v2809 = vunpack.c.l.b16 %v2290
        %v2810 = vunpack.c.l.b16 %v2291
        %v2811 = vunpack.c.l.b16 %v2292
        %v2812 = vunpack.c.l.b16 %v2293
        %v2813 = vunpack.c.l.b16 %v2294
        %v2814 = vunpack.c.l.b16 %v2295
        %v2815 = vunpack.c.l.b16 %v2296
        %v2816 = vunpack.c.l.b16 %v2297
        %v2817 = vunpack.c.l.b16 %v2298
        %v2818 = vunpack.c.l.b16 %v2299
        %v2819 = vunpack.c.l.b16 %v2300
        %v2820 = vunpack.c.l.b16 %v2301
        %v2821 = vunpack.c.l.b16 %v2302
        %v2822 = vunpack.c.l.b16 %v2303
        %v2823 = vunpack.c.l.b16 %v2304
        %v2824 = vunpack.c.l.b16 %v2305
        %v2825 = vunpack.c.l.b16 %v2306
        %v2826 = vunpack.c.l.b16 %v2307
        %v2827 = vunpack.c.l.b16 %v2308
        %v2828 = vunpack.c.l.b16 %v2309
        %v2829 = vunpack.c.l.b16 %v2310
        %v2830 = vunpack.c.l.b16 %v2311
        %v2831 = vunpack.c.l.b16 %v2312
        %v2832 = vunpack.c.l.b16 %v2313
        %v2833 = vunpack.c.l.b16 %v2314
        %v2834 = vunpack.c.l.b16 %v2315
        %v2835 = vunpack.c.l.b16 %v2316
        %v2836 = vunpack.c.l.b16 %v2317
        %v2837 = vunpack.c.l.b16 %v2318
        %v2838 = vunpack.c.l.b16 %v2319
        %v2839 = vunpack.c.l.b16 %v2320
        %v2840 = vunpack.c.l.b16 %v2321
        %v2841 = vunpack.c.l.b16 %v2322
        %v2842 = vunpack.c.l.b16 %v2323
        %v2843 = vunpack.c.l.b16 %v2324
        %v2844 = vunpack.c.l.b16 %v2325
        %v2845 = vunpack.c.l.b16 %v2326
        %v2846 = vunpack.c.l.b16 %v2327
        %v2847 = vunpack.c.l.b16 %v2328
        %v2848 = vunpack.c.l.b16 %v2329
        %v2849 = vunpack.c.l.b16 %v2330
        %v2850 = vunpack.c.l.b16 %v2331
        %v2851 = vunpack.c.l.b16 %v2332
        %v2852 = vunpack.c.l.b16 %v2333
        %v2853 = vunpack.c.l.b16 %v2334
        %v2854 = vunpack.c.l.b16 %v2335
        %v2855 = vunpack.c.l.b16 %v2336
        %v2856 = vunpack.c.l.b16 %v2337
        %v2857 = vunpack.c.l.b16 %v2338
        %v2858 = vunpack.c.l.b16 %v2339
        %v2859 = vunpack.c.l.b16 %v2340
        %v2860 = vunpack.c.l.b16 %v2341
        %v2861 = vunpack.c.l.b16 %v2342
        %v2862 = vunpack.c.l.b16 %v2343
        %v2863 = vunpack.c.l.b16 %v2344
        %v2864 = vunpack.c.l.b16 %v2345
        %v2865 = vunpack.c.l.b16 %v2346
        %v2866 = vunpack.c.l.b16 %v2347
        %v2867 = vunpack.c.l.b16 %v2348
        %v2868 = vunpack.c.l.b16 %v2349
        %v2869 = vunpack.c.l.b16 %v2350
        %v2870 = vunpack.c.l.b16 %v2351
        %v2871 = vunpack.c.l.b16 %v2352
        %v2872 = vunpack.c.l.b16 %v2353
        %v2873 = vunpack.c.l.b16 %v2354
        %v2874 = vunpack.c.l.b16 %v2355
        %v2875 = vunpack.c.l.b16 %v2356
        %v2876 = vunpack.c.l.b16 %v2357
        %v2877 = vunpack.c.l.b16 %v2358
        %v2878 = vunpack.c.l.b16 %v2359
        %v2879 = vunpack.c.l.b16 %v2360
        %v2880 = vunpack.c.l.b16 %v2361
        %v2881 = vunpack.c.l.b16 %v2362
        %v2882 = vunpack.c.l.b16 %v2363
        %v2883 = vunpack.c.l.b16 %v2364
        %v2884 = vunpack.c.l.b16 %v2365
        %v2885 = vunpack.c.l.b16 %v2366
        %v2886 = vunpack.c.l.b16 %v2367
        %v2887 = vunpack.c.l.b16 %v2368
        %v2888 = vunpack.c.l.b16 %v2369
        %v2889 = vunpack.c.l.b16 %v2370
        %v2890 = vunpack.c.l.b16 %v2371
        %v2891 = vunpack.c.l.b16 %v2372
        %v2892 = vunpack.c.l.b16 %v2373
        %v2893 = vunpack.c.l.b16 %v2374
        %v2894 = vunpack.c.l.b16 %v2375
        %v2895 = vunpack.c.l.b16 %v2376
        %v2896 = vunpack.c.l.b16 %v2377
        %v2897 = vunpack.c.l.b16 %v2378
        %v2898 = vunpack.c.l.b16 %v2379
        %v2899 = vunpack.c.l.b16 %v2380
        %v2900 = vunpack.c.l.b16 %v2381
        %v2901 = vunpack.c.l.b16 %v2382
        %v2902 = vunpack.c.l.b16 %v2383
        %v2903 = vunpack.c.l.b16 %v2384
        %v2904 = vunpack.c.l.b16 %v2385
        %v2905 = vunpack.c.l.b16 %v2386
        %v2906 = vunpack.c.l.b16 %v2387
        %v2907 = vunpack.c.l.b16 %v2388
        %v2908 = vunpack.c.l.b16 %v2389
        %v2909 = vunpack.c.l.b16 %v2390
        %v2910 = vunpack.c.l.b16 %v2391
        %v2911 = vunpack.c.l.b16 %v2392
        %v2912 = vunpack.c.l.b16 %v2393
        %v2913 = vunpack.c.l.b16 %v2394
        %v2914 = vunpack.c.l.b16 %v2395
        %v2915 = vunpack.c.l.b16 %v2396
        %v2916 = vunpack.c.l.b16 %v2397
        %v2917 = vunpack.c.l.b16 %v2398
        %v2918 = vunpack.c.l.b16 %v2399
        %v2919 = vunpack.c.l.b16 %v2400
        %v2920 = vunpack.c.l.b16 %v2401
        %v2921 = vunpack.c.l.b16 %v2402
        %v2922 = vunpack.c.l.b16 %v2403
        %v2923 = vunpack.c.l.b16 %v2404
        %v2924 = vunpack.c.l.b16 %v2405
        %v2925 = vunpack.c.l.b16 %v2406
        %v2926 = vunpack.c.l.b16 %v2407
        %v2927 = vunpack.c.l.b16 %v2408
        %v2928 = vunpack.c.l.b16 %v2409
        %v2929 = vunpack.c.l.b16 %v2410
        %v2930 = vunpack.c.l.b16 %v2411
        %v2931 = vunpack.c.l.b16 %v2412
        %v2932 = vunpack.c.l.b16 %v2413
        %v2933 = vunpack.c.l.b16 %v2414
        %v2934 = vunpack.c.l.b16 %v2415
        %v2935 = vunpack.c.l.b16 %v2416
        %v2936 = vunpack.c.l.b16 %v2417
        %v2937 = vunpack.c.l.b16 %v2418
        %v2938 = vpack.c.b16 %v2683, %v2682
        %v2939 = vpack.c.b16 %v2685, %v2684
        %v2940 = vpack.c.b16 %v2687, %v2686
        %v2941 = vpack.c.b16 %v2689, %v2688
        %v2942 = vpack.c.b16 %v2691, %v2690
        %v2943 = vpack.c.b16 %v2693, %v2692
        %v2944 = vpack.c.b16 %v2695, %v2694
        %v2945 = vpack.c.b16 %v2697, %v2696
        %v2946 = vpack.c.b16 %v2699, %v2698
        %v2947 = vpack.c.b16 %v2701, %v2700
        %v2948 = vpack.c.b16 %v2703, %v2702
        %v2949 = vpack.c.b16 %v2705, %v2704
        %v2950 = vpack.c.b16 %v2707, %v2706
        %v2951 = vpack.c.b16 %v2709, %v2708
        %v2952 = vpack.c.b16 %v2711, %v2710
        %v2953 = vpack.c.b16 %v2713, %v2712
        %v2954 = vpack.c.b16 %v2715, %v2714
        %v2955 = vpack.c.b16 %v2717, %v2716
        %v2956 = vpack.c.b16 %v2719, %v2718
        %v2957 = vpack.c.b16 %v2721, %v2720
        %v2958 = vpack.c.b16 %v2723, %v2722
        %v2959 = vpack.c.b16 %v2725, %v2724
        %v2960 = vpack.c.b16 %v2727, %v2726
        %v2961 = vpack.c.b16 %v2729, %v2728
        %v2962 = vpack.c.b16 %v2731, %v2730
        %v2963 = vpack.c.b16 %v2733, %v2732
        %v2964 = vpack.c.b16 %v2735, %v2734
        %v2965 = vpack.c.b16 %v2737, %v2736
        %v2966 = vpack.c.b16 %v2739, %v2738
        %v2967 = vpack.c.b16 %v2741, %v2740
        %v2968 = vpack.c.b16 %v2743, %v2742
        %v2969 = vpack.c.b16 %v2745, %v2744
        %v2970 = vpack.c.b16 %v2747, %v2746
        %v2971 = vpack.c.b16 %v2749, %v2748
        %v2972 = vpack.c.b16 %v2751, %v2750
        %v2973 = vpack.c.b16 %v2753, %v2752
        %v2974 = vpack.c.b16 %v2755, %v2754
        %v2975 = vpack.c.b16 %v2757, %v2756
        %v2976 = vpack.c.b16 %v2759, %v2758
        %v2977 = vpack.c.b16 %v2761, %v2760
        %v2978 = vpack.c.b16 %v2763, %v2762
        %v2979 = vpack.c.b16 %v2765, %v2764
        %v2980 = vpack.c.b16 %v2767, %v2766
        %v2981 = vpack.c.b16 %v2769, %v2768
        %v2982 = vpack.c.b16 %v2771, %v2770
        %v2983 = vpack.c.b16 %v2773, %v2772
        %v2984 = vpack.c.b16 %v2775, %v2774
        %v2985 = vpack.c.b16 %v2777, %v2776
        %v2986 = vpack.c.b16 %v2779, %v2778
        %v2987 = vpack.c.b16 %v2781, %v2780
        %v2988 = vpack.c.b16 %v2783, %v2782
        %v2989 = vpack.c.b16 %v2785, %v2784
        %v2990 = vpack.c.b16 %v2787, %v2786
        %v2991 = vpack.c.b16 %v2789, %v2788
        %v2992 = vpack.c.b16 %v2791, %v2790
        %v2993 = vpack.c.b16 %v2793, %v2792
        %v2994 = vpack.c.b16 %v2795, %v2794
        %v2995 = vpack.c.b16 %v2797, %v2796
        %v2996 = vpack.c.b16 %v2799, %v2798
        %v2997 = vpack.c.b16 %v2801, %v2800
        %v2998 = vpack.c.b16 %v2803, %v2802
        %v2999 = vpack.c.b16 %v2805, %v2804
        %v3000 = vpack.c.b16 %v2807, %v2806
        %v3001 = vpack.c.b16 %v2809, %v2808
        %v3002 = vpack.c.b16 %v2811, %v2810
        %v3003 = vpack.c.b16 %v2813, %v2812
        %v3004 = vpack.c.b16 %v2815, %v2814
        %v3005 = vpack.c.b16 %v2817, %v2816
        %v3006 = vpack.c.b16 %v2819, %v2818
        %v3007 = vpack.c.b16 %v2821, %v2820
        %v3008 = vpack.c.b16 %v2823, %v2822
        %v3009 = vpack.c.b16 %v2825, %v2824
        %v3010 = vpack.c.b16 %v2827, %v2826
        %v3011 = vpack.c.b16 %v2829, %v2828
        %v3012 = vpack.c.b16 %v2831, %v2830
        %v3013 = vpack.c.b16 %v2833, %v2832
        %v3014 = vpack.c.b16 %v2835, %v2834
        %v3015 = vpack.c.b16 %v2837, %v2836
        %v3016 = vpack.c.b16 %v2839, %v2838
        %v3017 = vpack.c.b16 %v2841, %v2840
        %v3018 = vpack.c.b16 %v2843, %v2842
        %v3019 = vpack.c.b16 %v2845, %v2844
        %v3020 = vpack.c.b16 %v2847, %v2846
        %v3021 = vpack.c.b16 %v2849, %v2848
        %v3022 = vpack.c.b16 %v2851, %v2850
        %v3023 = vpack.c.b16 %v2853, %v2852
        %v3024 = vpack.c.b16 %v2855, %v2854
        %v3025 = vpack.c.b16 %v2857, %v2856
        %v3026 = vpack.c.b16 %v2859, %v2858
        %v3027 = vpack.c.b16 %v2861, %v2860
        %v3028 = vpack.c.b16 %v2863, %v2862
        %v3029 = vpack.c.b16 %v2865, %v2864
        %v3030 = vpack.c.b16 %v2867, %v2866
        %v3031 = vpack.c.b16 %v2869, %v2868
        %v3032 = vpack.c.b16 %v2871, %v2870
        %v3033 = vpack.c.b16 %v2873, %v2872
        %v3034 = vpack.c.b16 %v2875, %v2874
        %v3035 = vpack.c.b16 %v2877, %v2876
        %v3036 = vpack.c.b16 %v2879, %v2878
        %v3037 = vpack.c.b16 %v2881, %v2880
        %v3038 = vpack.c.b16 %v2883, %v2882
        %v3039 = vpack.c.b16 %v2885, %v2884
        %v3040 = vpack.c.b16 %v2887, %v2886
        %v3041 = vpack.c.b16 %v2889, %v2888
        %v3042 = vpack.c.b16 %v2891, %v2890
        %v3043 = vpack.c.b16 %v2893, %v2892
        %v3044 = vpack.c.b16 %v2895, %v2894
        %v3045 = vpack.c.b16 %v2897, %v2896
        %v3046 = vpack.c.b16 %v2899, %v2898
        %v3047 = vpack.c.b16 %v2901, %v2900
        %v3048 = vpack.c.b16 %v2903, %v2902
        %v3049 = vpack.c.b16 %v2905, %v2904
        %v3050 = vpack.c.b16 %v2907, %v2906
        %v3051 = vpack.c.b16 %v2909, %v2908
        %v3052 = vpack.c.b16 %v2911, %v2910
        %v3053 = vpack.c.b16 %v2913, %v2912
        %v3054 = vpack.c.b16 %v2915, %v2914
        %v3055 = vpack.c.b16 %v2917, %v2916
        %v3056 = vpack.c.b16 %v2919, %v2918
        %v3057 = vpack.c.b16 %v2921, %v2920
        %v3058 = vpack.c.b16 %v2923, %v2922
        %v3059 = vpack.c.b16 %v2925, %v2924
        %v3060 = vpack.c.b16 %v2927, %v2926
        %v3061 = vpack.c.b16 %v2929, %v2928
        %v3062 = vpack.c.b16 %v2931, %v2930
        %v3063 = vpack.c.b16 %v2933, %v2932
        %v3064 = vpack.c.b16 %v2935, %v2934
        %v3065 = vpack.c.b16 %v2937, %v2936
        %3194 = vmatprep.subr.bf16.mxu0 0
        %3195 = vmatpush1.bf16.msra.mxu0 %v2938
        %3196 = vmatprep.subr.bf16.mxu0 0
        %3197 = vmatpush1.bf16.msra.mxu0 %v2939
        %3198 = vmatprep.subr.bf16.mxu0 0
        %3199 = vmatpush1.bf16.msra.mxu0 %v2940
        %3200 = vmatprep.subr.bf16.mxu0 0
        %3201 = vmatpush1.bf16.msra.mxu0 %v2941
        %3202 = vmatprep.subr.bf16.mxu0 0
        %3203 = vmatpush1.bf16.msra.mxu0 %v2942
        %3204 = vmatprep.subr.bf16.mxu0 0
        %3205 = vmatpush1.bf16.msra.mxu0 %v2943
        %3206 = vmatprep.subr.bf16.mxu0 0
        %3207 = vmatpush1.bf16.msra.mxu0 %v2944
        %3208 = vmatprep.subr.bf16.mxu0 0
        %3209 = vmatpush1.bf16.msra.mxu0 %v2945
        %3210 = vmatprep.subr.bf16.mxu0 0
        %3211 = vmatpush1.bf16.msra.mxu0 %v2946
        %3212 = vmatprep.subr.bf16.mxu0 0
        %3213 = vmatpush1.bf16.msra.mxu0 %v2947
        %3214 = vmatprep.subr.bf16.mxu0 0
        %3215 = vmatpush1.bf16.msra.mxu0 %v2948
        %3216 = vmatprep.subr.bf16.mxu0 0
        %3217 = vmatpush1.bf16.msra.mxu0 %v2949
        %3218 = vmatprep.subr.bf16.mxu0 0
        %3219 = vmatpush1.bf16.msra.mxu0 %v2950
        %3220 = vmatprep.subr.bf16.mxu0 0
        %3221 = vmatpush1.bf16.msra.mxu0 %v2951
        %3222 = vmatprep.subr.bf16.mxu0 0
        %3223 = vmatpush1.bf16.msra.mxu0 %v2952
        %3224 = vmatprep.subr.bf16.mxu0 0
        %3225 = vmatpush1.bf16.msra.mxu0 %v2953
        %3226 = vmatprep.mubr.bf16.mxu0 %v2148
        %3227 = vmatmul.mubr.bf16.gmra.mrb[0].mxu0 %v2147
        %v3228 = vpop.f32.mrb[0].mxu0
        %v3229 = vadd.f32 %v2424, %v3228
        %v3230 = vpop.f32.mrb[0].mxu0
        %v3231 = vpop.f32.mrb[0].mxu0
        %v3232 = vpop.f32.mrb[0].mxu0
        %3233 = vdwg.mxu0
        %3234 = vmatprep.subr.bf16.mxu0 0
        %3235 = vmatpush1.bf16.msra.mxu0 %v2954
        %3236 = vmatprep.subr.bf16.mxu0 0
        %3237 = vmatpush1.bf16.msra.mxu0 %v2955
        %3238 = vmatprep.subr.bf16.mxu0 0
        %3239 = vmatpush1.bf16.msra.mxu0 %v2956
        %3240 = vmatprep.subr.bf16.mxu0 0
        %3241 = vmatpush1.bf16.msra.mxu0 %v2957
        %3242 = vmatprep.subr.bf16.mxu0 0
        %3243 = vmatpush1.bf16.msra.mxu0 %v2958
        %3244 = vmatprep.subr.bf16.mxu0 0
        %3245 = vmatpush1.bf16.msra.mxu0 %v2959
        %3246 = vmatprep.subr.bf16.mxu0 0
        %3247 = vmatpush1.bf16.msra.mxu0 %v2960
        %3248 = vmatprep.subr.bf16.mxu0 0
        %3249 = vmatpush1.bf16.msra.mxu0 %v2961
        %3250 = vmatprep.subr.bf16.mxu0 0
        %3251 = vmatpush1.bf16.msra.mxu0 %v2962
        %3252 = vmatprep.subr.bf16.mxu0 0
        %3253 = vmatpush1.bf16.msra.mxu0 %v2963
        %3254 = vmatprep.subr.bf16.mxu0 0
        %3255 = vmatpush1.bf16.msra.mxu0 %v2964
        %3256 = vmatprep.subr.bf16.mxu0 0
        %3257 = vmatpush1.bf16.msra.mxu0 %v2965
        %3258 = vmatprep.subr.bf16.mxu0 0
        %3259 = vmatpush1.bf16.msra.mxu0 %v2966
        %3260 = vmatprep.subr.bf16.mxu0 0
        %3261 = vmatpush1.bf16.msra.mxu0 %v2967
        %3262 = vmatprep.subr.bf16.mxu0 0
        %3263 = vmatpush1.bf16.msra.mxu0 %v2968
        %3264 = vmatprep.subr.bf16.mxu0 0
        %3265 = vmatpush1.bf16.msra.mxu0 %v2969
        %3266 = vmatprep.mubr.bf16.mxu0 %v2150
        %3267 = vmatmul.mubr.bf16.gmra.mrb[0].mxu0 %v2149
        %v3268 = vpop.f32.mrb[0].mxu0
        %v3269 = vadd.f32 %v3229, %v3268
        %v3270 = vpop.f32.mrb[0].mxu0
        %v3271 = vpop.f32.mrb[0].mxu0
        %v3272 = vpop.f32.mrb[0].mxu0
        %3273 = vdwg.mxu0
        %3274 = vmatprep.subr.bf16.mxu0 0
        %3275 = vmatpush1.bf16.msra.mxu0 %v2970
        %3276 = vmatprep.subr.bf16.mxu0 0
        %3277 = vmatpush1.bf16.msra.mxu0 %v2971
        %3278 = vmatprep.subr.bf16.mxu0 0
        %3279 = vmatpush1.bf16.msra.mxu0 %v2972
        %3280 = vmatprep.subr.bf16.mxu0 0
        %3281 = vmatpush1.bf16.msra.mxu0 %v2973
        %3282 = vmatprep.subr.bf16.mxu0 0
        %3283 = vmatpush1.bf16.msra.mxu0 %v2974
        %3284 = vmatprep.subr.bf16.mxu0 0
        %3285 = vmatpush1.bf16.msra.mxu0 %v2975
        %3286 = vmatprep.subr.bf16.mxu0 0
        %3287 = vmatpush1.bf16.msra.mxu0 %v2976
        %3288 = vmatprep.subr.bf16.mxu0 0
        %3289 = vmatpush1.bf16.msra.mxu0 %v2977
        %3290 = vmatprep.subr.bf16.mxu0 0
        %3291 = vmatpush1.bf16.msra.mxu0 %v2978
        %3292 = vmatprep.subr.bf16.mxu0 0
        %3293 = vmatpush1.bf16.msra.mxu0 %v2979
        %3294 = vmatprep.subr.bf16.mxu0 0
        %3295 = vmatpush1.bf16.msra.mxu0 %v2980
        %3296 = vmatprep.subr.bf16.mxu0 0
        %3297 = vmatpush1.bf16.msra.mxu0 %v2981
        %3298 = vmatprep.subr.bf16.mxu0 0
        %3299 = vmatpush1.bf16.msra.mxu0 %v2982
        %3300 = vmatprep.subr.bf16.mxu0 0
        %3301 = vmatpush1.bf16.msra.mxu0 %v2983
        %3302 = vmatprep.subr.bf16.mxu0 0
        %3303 = vmatpush1.bf16.msra.mxu0 %v2984
        %3304 = vmatprep.subr.bf16.mxu0 0
        %3305 = vmatpush1.bf16.msra.mxu0 %v2985
        %3306 = vmatprep.mubr.bf16.mxu0 %v2152
        %3307 = vmatmul.mubr.bf16.gmra.mrb[0].mxu0 %v2151
        %v3308 = vpop.f32.mrb[0].mxu0
        %v3309 = vadd.f32 %v3269, %v3308
        %v3310 = vpop.f32.mrb[0].mxu0
        %v3311 = vpop.f32.mrb[0].mxu0
        %v3312 = vpop.f32.mrb[0].mxu0
        %3313 = vdwg.mxu0
        %3314 = vmatprep.subr.bf16.mxu0 0
        %3315 = vmatpush1.bf16.msra.mxu0 %v2986
        %3316 = vmatprep.subr.bf16.mxu0 0
        %3317 = vmatpush1.bf16.msra.mxu0 %v2987
        %3318 = vmatprep.subr.bf16.mxu0 0
        %3319 = vmatpush1.bf16.msra.mxu0 %v2988
        %3320 = vmatprep.subr.bf16.mxu0 0
        %3321 = vmatpush1.bf16.msra.mxu0 %v2989
        %3322 = vmatprep.subr.bf16.mxu0 0
        %3323 = vmatpush1.bf16.msra.mxu0 %v2990
        %3324 = vmatprep.subr.bf16.mxu0 0
        %3325 = vmatpush1.bf16.msra.mxu0 %v2991
        %3326 = vmatprep.subr.bf16.mxu0 0
        %3327 = vmatpush1.bf16.msra.mxu0 %v2992
        %3328 = vmatprep.subr.bf16.mxu0 0
        %3329 = vmatpush1.bf16.msra.mxu0 %v2993
        %3330 = vmatprep.subr.bf16.mxu0 0
        %3331 = vmatpush1.bf16.msra.mxu0 %v2994
        %3332 = vmatprep.subr.bf16.mxu0 0
        %3333 = vmatpush1.bf16.msra.mxu0 %v2995
        %3334 = vmatprep.subr.bf16.mxu0 0
        %3335 = vmatpush1.bf16.msra.mxu0 %v2996
        %3336 = vmatprep.subr.bf16.mxu0 0
        %3337 = vmatpush1.bf16.msra.mxu0 %v2997
        %3338 = vmatprep.subr.bf16.mxu0 0
        %3339 = vmatpush1.bf16.msra.mxu0 %v2998
        %3340 = vmatprep.subr.bf16.mxu0 0
        %3341 = vmatpush1.bf16.msra.mxu0 %v2999
        %3342 = vmatprep.subr.bf16.mxu0 0
        %3343 = vmatpush1.bf16.msra.mxu0 %v3000
        %3344 = vmatprep.subr.bf16.mxu0 0
        %3345 = vmatpush1.bf16.msra.mxu0 %v3001
        %3346 = vmatprep.mubr.bf16.mxu0 %v2154
        %3347 = vmatmul.mubr.bf16.gmra.mrb[0].mxu0 %v2153
        %v3348 = vpop.f32.mrb[0].mxu0
        %v3349 = vadd.f32 %v3309, %v3348
        %v3350 = vpop.f32.mrb[0].mxu0
        %v3351 = vpop.f32.mrb[0].mxu0
        %v3352 = vpop.f32.mrb[0].mxu0
        %3353 = vdwg.mxu0
        %3354 = vmatprep.subr.bf16.mxu0 0
        %3355 = vmatpush1.bf16.msra.mxu0 %v3002
        %3356 = vmatprep.subr.bf16.mxu0 0
        %3357 = vmatpush1.bf16.msra.mxu0 %v3003
        %3358 = vmatprep.subr.bf16.mxu0 0
        %3359 = vmatpush1.bf16.msra.mxu0 %v3004
        %3360 = vmatprep.subr.bf16.mxu0 0
        %3361 = vmatpush1.bf16.msra.mxu0 %v3005
        %3362 = vmatprep.subr.bf16.mxu0 0
        %3363 = vmatpush1.bf16.msra.mxu0 %v3006
        %3364 = vmatprep.subr.bf16.mxu0 0
        %3365 = vmatpush1.bf16.msra.mxu0 %v3007
        %3366 = vmatprep.subr.bf16.mxu0 0
        %3367 = vmatpush1.bf16.msra.mxu0 %v3008
        %3368 = vmatprep.subr.bf16.mxu0 0
        %3369 = vmatpush1.bf16.msra.mxu0 %v3009
        %3370 = vmatprep.subr.bf16.mxu0 0
        %3371 = vmatpush1.bf16.msra.mxu0 %v3010
        %3372 = vmatprep.subr.bf16.mxu0 0
        %3373 = vmatpush1.bf16.msra.mxu0 %v3011
        %3374 = vmatprep.subr.bf16.mxu0 0
        %3375 = vmatpush1.bf16.msra.mxu0 %v3012
        %3376 = vmatprep.subr.bf16.mxu0 0
        %3377 = vmatpush1.bf16.msra.mxu0 %v3013
        %3378 = vmatprep.subr.bf16.mxu0 0
        %3379 = vmatpush1.bf16.msra.mxu0 %v3014
        %3380 = vmatprep.subr.bf16.mxu0 0
        %3381 = vmatpush1.bf16.msra.mxu0 %v3015
        %3382 = vmatprep.subr.bf16.mxu0 0
        %3383 = vmatpush1.bf16.msra.mxu0 %v3016
        %3384 = vmatprep.subr.bf16.mxu0 0
        %3385 = vmatpush1.bf16.msra.mxu0 %v3017
        %3386 = vmatprep.mubr.bf16.mxu0 %v2156
        %3387 = vmatmul.mubr.bf16.gmra.mrb[0].mxu0 %v2155
        %v3388 = vpop.f32.mrb[0].mxu0
        %v3389 = vadd.f32 %v3349, %v3388
        %v3390 = vpop.f32.mrb[0].mxu0
        %v3391 = vpop.f32.mrb[0].mxu0
        %v3392 = vpop.f32.mrb[0].mxu0
        %3393 = vdwg.mxu0
        %3394 = vmatprep.subr.bf16.mxu0 0
        %3395 = vmatpush1.bf16.msra.mxu0 %v3018
        %3396 = vmatprep.subr.bf16.mxu0 0
        %3397 = vmatpush1.bf16.msra.mxu0 %v3019
        %3398 = vmatprep.subr.bf16.mxu0 0
        %3399 = vmatpush1.bf16.msra.mxu0 %v3020
        %3400 = vmatprep.subr.bf16.mxu0 0
        %3401 = vmatpush1.bf16.msra.mxu0 %v3021
        %3402 = vmatprep.subr.bf16.mxu0 0
        %3403 = vmatpush1.bf16.msra.mxu0 %v3022
        %3404 = vmatprep.subr.bf16.mxu0 0
        %3405 = vmatpush1.bf16.msra.mxu0 %v3023
        %3406 = vmatprep.subr.bf16.mxu0 0
        %3407 = vmatpush1.bf16.msra.mxu0 %v3024
        %3408 = vmatprep.subr.bf16.mxu0 0
        %3409 = vmatpush1.bf16.msra.mxu0 %v3025
        %3410 = vmatprep.subr.bf16.mxu0 0
        %3411 = vmatpush1.bf16.msra.mxu0 %v3026
        %3412 = vmatprep.subr.bf16.mxu0 0
        %3413 = vmatpush1.bf16.msra.mxu0 %v3027
        %3414 = vmatprep.subr.bf16.mxu0 0
        %3415 = vmatpush1.bf16.msra.mxu0 %v3028
        %3416 = vmatprep.subr.bf16.mxu0 0
        %3417 = vmatpush1.bf16.msra.mxu0 %v3029
        %3418 = vmatprep.subr.bf16.mxu0 0
        %3419 = vmatpush1.bf16.msra.mxu0 %v3030
        %3420 = vmatprep.subr.bf16.mxu0 0
        %3421 = vmatpush1.bf16.msra.mxu0 %v3031
        %3422 = vmatprep.subr.bf16.mxu0 0
        %3423 = vmatpush1.bf16.msra.mxu0 %v3032
        %3424 = vmatprep.subr.bf16.mxu0 0
        %3425 = vmatpush1.bf16.msra.mxu0 %v3033
        %3426 = vmatprep.mubr.bf16.mxu0 %v2158
        %3427 = vmatmul.mubr.bf16.gmra.mrb[0].mxu0 %v2157
        %v3428 = vpop.f32.mrb[0].mxu0
        %v3429 = vadd.f32 %v3389, %v3428
        %v3430 = vpop.f32.mrb[0].mxu0
        %v3431 = vpop.f32.mrb[0].mxu0
        %v3432 = vpop.f32.mrb[0].mxu0
        %3433 = vdwg.mxu0
        %3434 = vmatprep.subr.bf16.mxu0 0
        %3435 = vmatpush1.bf16.msra.mxu0 %v3034
        %3436 = vmatprep.subr.bf16.mxu0 0
        %3437 = vmatpush1.bf16.msra.mxu0 %v3035
        %3438 = vmatprep.subr.bf16.mxu0 0
        %3439 = vmatpush1.bf16.msra.mxu0 %v3036
        %3440 = vmatprep.subr.bf16.mxu0 0
        %3441 = vmatpush1.bf16.msra.mxu0 %v3037
        %3442 = vmatprep.subr.bf16.mxu0 0
        %3443 = vmatpush1.bf16.msra.mxu0 %v3038
        %3444 = vmatprep.subr.bf16.mxu0 0
        %3445 = vmatpush1.bf16.msra.mxu0 %v3039
        %3446 = vmatprep.subr.bf16.mxu0 0
        %3447 = vmatpush1.bf16.msra.mxu0 %v3040
        %3448 = vmatprep.subr.bf16.mxu0 0
        %3449 = vmatpush1.bf16.msra.mxu0 %v3041
        %3450 = vmatprep.subr.bf16.mxu0 0
        %3451 = vmatpush1.bf16.msra.mxu0 %v3042
        %3452 = vmatprep.subr.bf16.mxu0 0
        %3453 = vmatpush1.bf16.msra.mxu0 %v3043
        %3454 = vmatprep.subr.bf16.mxu0 0
        %3455 = vmatpush1.bf16.msra.mxu0 %v3044
        %3456 = vmatprep.subr.bf16.mxu0 0
        %3457 = vmatpush1.bf16.msra.mxu0 %v3045
        %3458 = vmatprep.subr.bf16.mxu0 0
        %3459 = vmatpush1.bf16.msra.mxu0 %v3046
        %3460 = vmatprep.subr.bf16.mxu0 0
        %3461 = vmatpush1.bf16.msra.mxu0 %v3047
        %3462 = vmatprep.subr.bf16.mxu0 0
        %3463 = vmatpush1.bf16.msra.mxu0 %v3048
        %3464 = vmatprep.subr.bf16.mxu0 0
        %3465 = vmatpush1.bf16.msra.mxu0 %v3049
        %3466 = vmatprep.mubr.bf16.mxu0 %v2160
        %3467 = vmatmul.mubr.bf16.gmra.mrb[0].mxu0 %v2159
        %v3468 = vpop.f32.mrb[0].mxu0
        %v3469 = vadd.f32 %v3429, %v3468
        %v3470 = vpop.f32.mrb[0].mxu0
        %v3471 = vpop.f32.mrb[0].mxu0
        %v3472 = vpop.f32.mrb[0].mxu0
        %3473 = vdwg.mxu0
        %3474 = vmatprep.subr.bf16.mxu0 0
        %3475 = vmatpush1.bf16.msra.mxu0 %v3050
        %3476 = vmatprep.subr.bf16.mxu0 0
        %3477 = vmatpush1.bf16.msra.mxu0 %v3051
        %3478 = vmatprep.subr.bf16.mxu0 0
        %3479 = vmatpush1.bf16.msra.mxu0 %v3052
        %3480 = vmatprep.subr.bf16.mxu0 0
        %3481 = vmatpush1.bf16.msra.mxu0 %v3053
        %3482 = vmatprep.subr.bf16.mxu0 0
        %3483 = vmatpush1.bf16.msra.mxu0 %v3054
        %3484 = vmatprep.subr.bf16.mxu0 0
        %3485 = vmatpush1.bf16.msra.mxu0 %v3055
        %3486 = vmatprep.subr.bf16.mxu0 0
        %3487 = vmatpush1.bf16.msra.mxu0 %v3056
        %3488 = vmatprep.subr.bf16.mxu0 0
        %3489 = vmatpush1.bf16.msra.mxu0 %v3057
        %3490 = vmatprep.subr.bf16.mxu0 0
        %3491 = vmatpush1.bf16.msra.mxu0 %v3058
        %3492 = vmatprep.subr.bf16.mxu0 0
        %3493 = vmatpush1.bf16.msra.mxu0 %v3059
        %3494 = vmatprep.subr.bf16.mxu0 0
        %3495 = vmatpush1.bf16.msra.mxu0 %v3060
        %3496 = vmatprep.subr.bf16.mxu0 0
        %3497 = vmatpush1.bf16.msra.mxu0 %v3061
        %3498 = vmatprep.subr.bf16.mxu0 0
        %3499 = vmatpush1.bf16.msra.mxu0 %v3062
        %3500 = vmatprep.subr.bf16.mxu0 0
        %3501 = vmatpush1.bf16.msra.mxu0 %v3063
        %3502 = vmatprep.subr.bf16.mxu0 0
        %3503 = vmatpush1.bf16.msra.mxu0 %v3064
        %3504 = vmatprep.subr.bf16.mxu0 0
        %3505 = vmatpush1.bf16.msra.mxu0 %v3065
        %3506 = vmatprep.mubr.bf16.mxu0 %v2162
        %3507 = vmatmul.mubr.bf16.gmra.mrb[0].mxu0 %v2161
        %v3508 = vpop.f32.mrb[0].mxu0
        %v3509 = vadd.f32 %v3469, %v3508
        %v3510 = vpop.f32.mrb[0].mxu0
        %v3511 = vpop.f32.mrb[0].mxu0
        %v3512 = vpop.f32.mrb[0].mxu0
        %3513 = vdwg.mxu0
        %v3514 = vadd.f32 %v1522, %v3509
        %v3515 = vsel %vm785, %v3514, 0.0
        %3516 = vadd.xlane.f32.xlu0 %v3515
        %v3517 = vpop.xlane.xlu0 %3516
        %v3518 = vmul.f32 %v3517, %v1496
        %v3519 = vsub.f32 %v3514, %v3518
        %v3520 = vmul.f32 %v3519, %v3519
        %v3521 = vsel %vm785, %v3520, 0.0
        %3522 = vadd.xlane.f32.xlu0 %v3521
        %v3523 = vpop.xlane.xlu0 %3522
        %v3524 = vmul.f32 %v3523, %v1496
        %v3525 = vadd.f32 %v3524, 1e-05
        %v3526 = vrsqrt.pop %v3525
        %v3527 = vmul.f32 %v3519, %v3526
        %v3528 = vld [vmem:[%s7] sm:$0x1]
        %v3530 = vlaneseq
        %v3531 = vshrl.u32 %v3530, 7
        %v3532 = vsub.s32 0, %v3531
        %v3533 = vrot.slane %v3528, %v3532
        %v3535 = vmul.f32 %v3527, %v3533
        %v3536 = vld [vmem:[%s8] sm:$0x1]
        %v3538 = vlaneseq
        %v3539 = vshrl.u32 %v3538, 7
        %v3540 = vsub.s32 0, %v3539
        %v3541 = vrot.slane %v3536, %v3540
        %v3543 = vadd.f32 %v3535, %v3541
        %v3544 = vpack.c.bf16 %v3543, %v3543
        %v3545 = vld [vmem:[%s13] sm:$0xf]
        %v3546 = vld [vmem:[%s13 + $0x4] sm:$0xf]
        %v3547 = vld [vmem:[%s13 + $0x8] sm:$0xf]
        %v3548 = vld [vmem:[%s13 + $0xc] sm:$0xf]
        %v3549 = vld [vmem:[%s14] sm:$0x1]
        %v3551 = vlaneseq
        %v3552 = vshrl.u32 %v3551, 7
        %v3553 = vsub.s32 0, %v3552
        %v3554 = vrot.slane %v3549, %v3553
        %v3560 = vunpack.c.l.b16 %v3545
        %v3561 = vunpack.c.l.b16 %v3546
        %v3562 = vunpack.c.l.b16 %v3547
        %v3563 = vunpack.c.l.b16 %v3548
        %v3564 = vpack.c.b16 %v3561, %v3560
        %v3565 = vpack.c.b16 %v3563, %v3562
        %v3569 = vsel %vm785, %v3544, 0
        %3571 = vmatprep.subr.bf16.mxu0 0
        %3572 = vmatpush1.bf16.msra.mxu0 %v3564
        %3573 = vmatprep.subr.bf16.mxu0 0
        %3574 = vmatpush1.bf16.msra.mxu0 %v3565
        %3575 = vmatprep.subr.bf16.mxu0 0
        %3576 = vmatpush1.bf16.msra.mxu0 0
        %3577 = vmatprep.subr.bf16.mxu0 0
        %3578 = vmatpush1.bf16.msra.mxu0 0
        %3579 = vmatprep.subr.bf16.mxu0 0
        %3580 = vmatpush1.bf16.msra.mxu0 0
        %3581 = vmatprep.subr.bf16.mxu0 0
        %3582 = vmatpush1.bf16.msra.mxu0 0
        %3583 = vmatprep.subr.bf16.mxu0 0
        %3584 = vmatpush1.bf16.msra.mxu0 0
        %3585 = vmatprep.subr.bf16.mxu0 0
        %3586 = vmatpush1.bf16.msra.mxu0 0
        %3587 = vmatprep.subr.bf16.mxu0 0
        %3588 = vmatpush1.bf16.msra.mxu0 0
        %3589 = vmatprep.subr.bf16.mxu0 0
        %3590 = vmatpush1.bf16.msra.mxu0 0
        %3591 = vmatprep.subr.bf16.mxu0 0
        %3592 = vmatpush1.bf16.msra.mxu0 0
        %3593 = vmatprep.subr.bf16.mxu0 0
        %3594 = vmatpush1.bf16.msra.mxu0 0
        %3595 = vmatprep.subr.bf16.mxu0 0
        %3596 = vmatpush1.bf16.msra.mxu0 0
        %3597 = vmatprep.subr.bf16.mxu0 0
        %3598 = vmatpush1.bf16.msra.mxu0 0
        %3599 = vmatprep.subr.bf16.mxu0 0
        %3600 = vmatpush1.bf16.msra.mxu0 0
        %3601 = vmatprep.subr.bf16.mxu0 0
        %3602 = vmatpush1.bf16.msra.mxu0 0
        %3603 = vmatprep.mubr.bf16.mxu0 0
        %3604 = vmatmul.mubr.bf16.gmra.mrb[0].mxu0 %v3569
        %v3605 = vpop.f32.mrb[0].mxu0
        %v3606 = vadd.f32 %v3554, %v3605
        %v3607 = vpop.f32.mrb[0].mxu0
        %v3608 = vpop.f32.mrb[0].mxu0
        %v3609 = vpop.f32.mrb[0].mxu0
        %3610 = vdwg.mxu0
        %3612 = vrot.lane.b32.xlu0 %v3606, 120
        %v3613 = vpop.permute.xlu0 %3612
        %3615 = vrot.lane.b32.xlu0 %v3606, 112
        %v3616 = vpop.permute.xlu0 %3615
        %3618 = vrot.lane.b32.xlu0 %v3606, 104
        %v3619 = vpop.permute.xlu0 %3618
        %v3621 = vpack.c.bf16 %v3606, %v3606
        %v3622 = vpack.c.bf16 %v3613, %v3613
        %v3623 = vpack.c.bf16 %v3616, %v3616
        %v3624 = vpack.c.bf16 %v3619, %v3619
        %3626 = vrot.lane.b32.xlu0 %v3621, 96
        %v3627 = vpop.permute.xlu0 %3626
        %v3629 = vsel %vm846, %v3621, 0
        %v3632 = vsel %vm846, %v3627, 0
        %3634 = vmatprep.subr.bf16.mxu0 0
        %3635 = vmatpush1.bf16.xpose.msra.mxu0 %v3632
        %3636 = vmatprep.subr.bf16.mxu0 0
        %3637 = vmatpush1.bf16.xpose.msra.mxu0 0
        %3638 = vmatprep.subr.bf16.mxu0 0
        %3639 = vmatpush1.bf16.xpose.msra.mxu0 0
        %3640 = vmatprep.subr.bf16.mxu0 0
        %3641 = vmatpush1.bf16.xpose.msra.mxu0 0
        %3642 = vmatprep.subr.bf16.mxu0 0
        %3643 = vmatpush1.bf16.xpose.msra.mxu0 0
        %3644 = vmatprep.subr.bf16.mxu0 0
        %3645 = vmatpush1.bf16.xpose.msra.mxu0 0
        %3646 = vmatprep.subr.bf16.mxu0 0
        %3647 = vmatpush1.bf16.xpose.msra.mxu0 0
        %3648 = vmatprep.subr.bf16.mxu0 0
        %3649 = vmatpush1.bf16.xpose.msra.mxu0 0
        %3650 = vmatprep.subr.bf16.mxu0 0
        %3651 = vmatpush1.bf16.xpose.msra.mxu0 0
        %3652 = vmatprep.subr.bf16.mxu0 0
        %3653 = vmatpush1.bf16.xpose.msra.mxu0 0
        %3654 = vmatprep.subr.bf16.mxu0 0
        %3655 = vmatpush1.bf16.xpose.msra.mxu0 0
        %3656 = vmatprep.subr.bf16.mxu0 0
        %3657 = vmatpush1.bf16.xpose.msra.mxu0 0
        %3658 = vmatprep.subr.bf16.mxu0 0
        %3659 = vmatpush1.bf16.xpose.msra.mxu0 0
        %3660 = vmatprep.subr.bf16.mxu0 0
        %3661 = vmatpush1.bf16.xpose.msra.mxu0 0
        %3662 = vmatprep.subr.bf16.mxu0 0
        %3663 = vmatpush1.bf16.xpose.msra.mxu0 0
        %3664 = vmatprep.subr.bf16.mxu0 0
        %3665 = vmatpush1.bf16.xpose.msra.mxu0 0
        %3666 = vmatprep.mubr.bf16.mxu0 0
        %3667 = vmatmul.mubr.bf16.gmra.mrb[0].mxu0 %v3629
        %v3668 = vpop.f32.mrb[0].mxu0
        %v3669 = vadd.f32 0.0, %v3668
        %v3670 = vpop.f32.mrb[0].mxu0
        %v3671 = vpop.f32.mrb[0].mxu0
        %v3672 = vpop.f32.mrb[0].mxu0
        %3673 = vdwg.mxu0
        %3675 = vrot.lane.b32.xlu0 %v3622, 96
        %v3676 = vpop.permute.xlu0 %3675
        %v3678 = vsel %vm846, %v3622, 0
        %v3681 = vsel %vm846, %v3676, 0
        %3683 = vmatprep.subr.bf16.mxu0 0
        %3684 = vmatpush1.bf16.xpose.msra.mxu0 %v3681
        %3685 = vmatprep.subr.bf16.mxu0 0
        %3686 = vmatpush1.bf16.xpose.msra.mxu0 0
        %3687 = vmatprep.subr.bf16.mxu0 0
        %3688 = vmatpush1.bf16.xpose.msra.mxu0 0
        %3689 = vmatprep.subr.bf16.mxu0 0
        %3690 = vmatpush1.bf16.xpose.msra.mxu0 0
        %3691 = vmatprep.subr.bf16.mxu0 0
        %3692 = vmatpush1.bf16.xpose.msra.mxu0 0
        %3693 = vmatprep.subr.bf16.mxu0 0
        %3694 = vmatpush1.bf16.xpose.msra.mxu0 0
        %3695 = vmatprep.subr.bf16.mxu0 0
        %3696 = vmatpush1.bf16.xpose.msra.mxu0 0
        %3697 = vmatprep.subr.bf16.mxu0 0
        %3698 = vmatpush1.bf16.xpose.msra.mxu0 0
        %3699 = vmatprep.subr.bf16.mxu0 0
        %3700 = vmatpush1.bf16.xpose.msra.mxu0 0
        %3701 = vmatprep.subr.bf16.mxu0 0
        %3702 = vmatpush1.bf16.xpose.msra.mxu0 0
        %3703 = vmatprep.subr.bf16.mxu0 0
        %3704 = vmatpush1.bf16.xpose.msra.mxu0 0
        %3705 = vmatprep.subr.bf16.mxu0 0
        %3706 = vmatpush1.bf16.xpose.msra.mxu0 0
        %3707 = vmatprep.subr.bf16.mxu0 0
        %3708 = vmatpush1.bf16.xpose.msra.mxu0 0
        %3709 = vmatprep.subr.bf16.mxu0 0
        %3710 = vmatpush1.bf16.xpose.msra.mxu0 0
        %3711 = vmatprep.subr.bf16.mxu0 0
        %3712 = vmatpush1.bf16.xpose.msra.mxu0 0
        %3713 = vmatprep.subr.bf16.mxu0 0
        %3714 = vmatpush1.bf16.xpose.msra.mxu0 0
        %3715 = vmatprep.mubr.bf16.mxu0 0
        %3716 = vmatmul.mubr.bf16.gmra.mrb[0].mxu0 %v3678
        %v3717 = vpop.f32.mrb[0].mxu0
        %v3718 = vadd.f32 0.0, %v3717
        %v3719 = vpop.f32.mrb[0].mxu0
        %v3720 = vpop.f32.mrb[0].mxu0
        %v3721 = vpop.f32.mrb[0].mxu0
        %3722 = vdwg.mxu0
        %3724 = vrot.lane.b32.xlu0 %v3623, 96
        %v3725 = vpop.permute.xlu0 %3724
        %v3727 = vsel %vm846, %v3623, 0
        %v3730 = vsel %vm846, %v3725, 0
        %3732 = vmatprep.subr.bf16.mxu0 0
        %3733 = vmatpush1.bf16.xpose.msra.mxu0 %v3730
        %3734 = vmatprep.subr.bf16.mxu0 0
        %3735 = vmatpush1.bf16.xpose.msra.mxu0 0
        %3736 = vmatprep.subr.bf16.mxu0 0
        %3737 = vmatpush1.bf16.xpose.msra.mxu0 0
        %3738 = vmatprep.subr.bf16.mxu0 0
        %3739 = vmatpush1.bf16.xpose.msra.mxu0 0
        %3740 = vmatprep.subr.bf16.mxu0 0
        %3741 = vmatpush1.bf16.xpose.msra.mxu0 0
        %3742 = vmatprep.subr.bf16.mxu0 0
        %3743 = vmatpush1.bf16.xpose.msra.mxu0 0
        %3744 = vmatprep.subr.bf16.mxu0 0
        %3745 = vmatpush1.bf16.xpose.msra.mxu0 0
        %3746 = vmatprep.subr.bf16.mxu0 0
        %3747 = vmatpush1.bf16.xpose.msra.mxu0 0
        %3748 = vmatprep.subr.bf16.mxu0 0
        %3749 = vmatpush1.bf16.xpose.msra.mxu0 0
        %3750 = vmatprep.subr.bf16.mxu0 0
        %3751 = vmatpush1.bf16.xpose.msra.mxu0 0
        %3752 = vmatprep.subr.bf16.mxu0 0
        %3753 = vmatpush1.bf16.xpose.msra.mxu0 0
        %3754 = vmatprep.subr.bf16.mxu0 0
        %3755 = vmatpush1.bf16.xpose.msra.mxu0 0
        %3756 = vmatprep.subr.bf16.mxu0 0
        %3757 = vmatpush1.bf16.xpose.msra.mxu0 0
        %3758 = vmatprep.subr.bf16.mxu0 0
        %3759 = vmatpush1.bf16.xpose.msra.mxu0 0
        %3760 = vmatprep.subr.bf16.mxu0 0
        %3761 = vmatpush1.bf16.xpose.msra.mxu0 0
        %3762 = vmatprep.subr.bf16.mxu0 0
        %3763 = vmatpush1.bf16.xpose.msra.mxu0 0
        %3764 = vmatprep.mubr.bf16.mxu0 0
        %3765 = vmatmul.mubr.bf16.gmra.mrb[0].mxu0 %v3727
        %v3766 = vpop.f32.mrb[0].mxu0
        %v3767 = vadd.f32 0.0, %v3766
        %v3768 = vpop.f32.mrb[0].mxu0
        %v3769 = vpop.f32.mrb[0].mxu0
        %v3770 = vpop.f32.mrb[0].mxu0
        %3771 = vdwg.mxu0
        %3773 = vrot.lane.b32.xlu0 %v3624, 96
        %v3774 = vpop.permute.xlu0 %3773
        %v3776 = vsel %vm846, %v3624, 0
        %v3779 = vsel %vm846, %v3774, 0
        %3781 = vmatprep.subr.bf16.mxu0 0
        %3782 = vmatpush1.bf16.xpose.msra.mxu0 %v3779
        %3783 = vmatprep.subr.bf16.mxu0 0
        %3784 = vmatpush1.bf16.xpose.msra.mxu0 0
        %3785 = vmatprep.subr.bf16.mxu0 0
        %3786 = vmatpush1.bf16.xpose.msra.mxu0 0
        %3787 = vmatprep.subr.bf16.mxu0 0
        %3788 = vmatpush1.bf16.xpose.msra.mxu0 0
        %3789 = vmatprep.subr.bf16.mxu0 0
        %3790 = vmatpush1.bf16.xpose.msra.mxu0 0
        %3791 = vmatprep.subr.bf16.mxu0 0
        %3792 = vmatpush1.bf16.xpose.msra.mxu0 0
        %3793 = vmatprep.subr.bf16.mxu0 0
        %3794 = vmatpush1.bf16.xpose.msra.mxu0 0
        %3795 = vmatprep.subr.bf16.mxu0 0
        %3796 = vmatpush1.bf16.xpose.msra.mxu0 0
        %3797 = vmatprep.subr.bf16.mxu0 0
        %3798 = vmatpush1.bf16.xpose.msra.mxu0 0
        %3799 = vmatprep.subr.bf16.mxu0 0
        %3800 = vmatpush1.bf16.xpose.msra.mxu0 0
        %3801 = vmatprep.subr.bf16.mxu0 0
        %3802 = vmatpush1.bf16.xpose.msra.mxu0 0
        %3803 = vmatprep.subr.bf16.mxu0 0
        %3804 = vmatpush1.bf16.xpose.msra.mxu0 0
        %3805 = vmatprep.subr.bf16.mxu0 0
        %3806 = vmatpush1.bf16.xpose.msra.mxu0 0
        %3807 = vmatprep.subr.bf16.mxu0 0
        %3808 = vmatpush1.bf16.xpose.msra.mxu0 0
        %3809 = vmatprep.subr.bf16.mxu0 0
        %3810 = vmatpush1.bf16.xpose.msra.mxu0 0
        %3811 = vmatprep.subr.bf16.mxu0 0
        %3812 = vmatpush1.bf16.xpose.msra.mxu0 0
        %3813 = vmatprep.mubr.bf16.mxu0 0
        %3814 = vmatmul.mubr.bf16.gmra.mrb[0].mxu0 %v3776
        %v3815 = vpop.f32.mrb[0].mxu0
        %v3816 = vadd.f32 0.0, %v3815
        %v3817 = vpop.f32.mrb[0].mxu0
        %v3818 = vpop.f32.mrb[0].mxu0
        %v3819 = vpop.f32.mrb[0].mxu0
        %3820 = vdwg.mxu0
        %v3821 = vmul.f32 %v3669, 0.35355338
        %v3822 = vmul.f32 %v3718, 0.35355338
        %v3823 = vmul.f32 %v3767, 0.35355338
        %v3824 = vmul.f32 %v3816, 0.35355338
        %v3825 = vsel %vm846, %v3821, -inf
        %3826 = vmax.xlane.f32.xlu0 %v3825
        %v3827 = vpop.xlane.xlu0 %3826
        %v3828 = vsel %vm846, %v3822, -inf
        %3829 = vmax.xlane.f32.xlu0 %v3828
        %v3830 = vpop.xlane.xlu0 %3829
        %v3831 = vsel %vm846, %v3823, -inf
        %3832 = vmax.xlane.f32.xlu0 %v3831
        %v3833 = vpop.xlane.xlu0 %3832
        %v3834 = vsel %vm846, %v3824, -inf
        %3835 = vmax.xlane.f32.xlu0 %v3834
        %v3836 = vpop.xlane.xlu0 %3835
        %v3837 = vsub.f32 %v3821, %v3827
        %v3838 = vsub.f32 %v3822, %v3830
        %v3839 = vsub.f32 %v3823, %v3833
        %v3840 = vsub.f32 %v3824, %v3836
        %v3841 = vmul.f32 %v3837, 1.442695
        %v3842 = vpow.pop %v3841
        %v3843 = vmul.f32 %v3838, 1.442695
        %v3844 = vpow.pop %v3843
        %v3845 = vmul.f32 %v3839, 1.442695
        %v3846 = vpow.pop %v3845
        %v3847 = vmul.f32 %v3840, 1.442695
        %v3848 = vpow.pop %v3847
        %v3849 = vsel %vm846, %v3842, 0.0
        %3850 = vadd.xlane.f32.xlu0 %v3849
        %v3851 = vpop.xlane.xlu0 %3850
        %v3852 = vsel %vm846, %v3844, 0.0
        %3853 = vadd.xlane.f32.xlu0 %v3852
        %v3854 = vpop.xlane.xlu0 %3853
        %v3855 = vsel %vm846, %v3846, 0.0
        %3856 = vadd.xlane.f32.xlu0 %v3855
        %v3857 = vpop.xlane.xlu0 %3856
        %v3858 = vsel %vm846, %v3848, 0.0
        %3859 = vadd.xlane.f32.xlu0 %v3858
        %v3860 = vpop.xlane.xlu0 %3859
        %v3861 = vrcp.pop %v3851
        %v3862 = vrcp.pop %v3854
        %v3863 = vrcp.pop %v3857
        %v3864 = vrcp.pop %v3860
        %v3865 = vmul.f32 %v3842, %v3861
        %v3866 = vmul.f32 %v3844, %v3862
        %v3867 = vmul.f32 %v3846, %v3863
        %v3868 = vmul.f32 %v3848, %v3864
        %v3869 = vpack.c.bf16 %v3865, %v3865
        %v3870 = vpack.c.bf16 %v3866, %v3866
        %v3871 = vpack.c.bf16 %v3867, %v3867
        %v3872 = vpack.c.bf16 %v3868, %v3868
        %3873 = vrot.lane.b32.xlu0 %v3621, 64
        %v3874 = vpop.permute.xlu0 %3873
        %v3876 = vsel %vm846, %v3869, 0
        %v3879 = vsel %vm1097, %v3874, 0
        %3881 = vmatprep.subr.bf16.mxu0 0
        %3882 = vmatpush1.bf16.msra.mxu0 %v3879
        %3883 = vmatprep.subr.bf16.mxu0 0
        %3884 = vmatpush1.bf16.msra.mxu0 0
        %3885 = vmatprep.subr.bf16.mxu0 0
        %3886 = vmatpush1.bf16.msra.mxu0 0
        %3887 = vmatprep.subr.bf16.mxu0 0
        %3888 = vmatpush1.bf16.msra.mxu0 0
        %3889 = vmatprep.subr.bf16.mxu0 0
        %3890 = vmatpush1.bf16.msra.mxu0 0
        %3891 = vmatprep.subr.bf16.mxu0 0
        %3892 = vmatpush1.bf16.msra.mxu0 0
        %3893 = vmatprep.subr.bf16.mxu0 0
        %3894 = vmatpush1.bf16.msra.mxu0 0
        %3895 = vmatprep.subr.bf16.mxu0 0
        %3896 = vmatpush1.bf16.msra.mxu0 0
        %3897 = vmatprep.subr.bf16.mxu0 0
        %3898 = vmatpush1.bf16.msra.mxu0 0
        %3899 = vmatprep.subr.bf16.mxu0 0
        %3900 = vmatpush1.bf16.msra.mxu0 0
        %3901 = vmatprep.subr.bf16.mxu0 0
        %3902 = vmatpush1.bf16.msra.mxu0 0
        %3903 = vmatprep.subr.bf16.mxu0 0
        %3904 = vmatpush1.bf16.msra.mxu0 0
        %3905 = vmatprep.subr.bf16.mxu0 0
        %3906 = vmatpush1.bf16.msra.mxu0 0
        %3907 = vmatprep.subr.bf16.mxu0 0
        %3908 = vmatpush1.bf16.msra.mxu0 0
        %3909 = vmatprep.subr.bf16.mxu0 0
        %3910 = vmatpush1.bf16.msra.mxu0 0
        %3911 = vmatprep.subr.bf16.mxu0 0
        %3912 = vmatpush1.bf16.msra.mxu0 0
        %3913 = vmatprep.mubr.bf16.mxu0 0
        %3914 = vmatmul.mubr.bf16.gmra.mrb[0].mxu0 %v3876
        %v3915 = vpop.f32.mrb[0].mxu0
        %v3916 = vadd.f32 0.0, %v3915
        %v3917 = vpop.f32.mrb[0].mxu0
        %v3918 = vpop.f32.mrb[0].mxu0
        %v3919 = vpop.f32.mrb[0].mxu0
        %3920 = vdwg.mxu0
        %3921 = vrot.lane.b32.xlu0 %v3622, 64
        %v3922 = vpop.permute.xlu0 %3921
        %v3924 = vsel %vm846, %v3870, 0
        %v3927 = vsel %vm1097, %v3922, 0
        %3929 = vmatprep.subr.bf16.mxu0 0
        %3930 = vmatpush1.bf16.msra.mxu0 %v3927
        %3931 = vmatprep.subr.bf16.mxu0 0
        %3932 = vmatpush1.bf16.msra.mxu0 0
        %3933 = vmatprep.subr.bf16.mxu0 0
        %3934 = vmatpush1.bf16.msra.mxu0 0
        %3935 = vmatprep.subr.bf16.mxu0 0
        %3936 = vmatpush1.bf16.msra.mxu0 0
        %3937 = vmatprep.subr.bf16.mxu0 0
        %3938 = vmatpush1.bf16.msra.mxu0 0
        %3939 = vmatprep.subr.bf16.mxu0 0
        %3940 = vmatpush1.bf16.msra.mxu0 0
        %3941 = vmatprep.subr.bf16.mxu0 0
        %3942 = vmatpush1.bf16.msra.mxu0 0
        %3943 = vmatprep.subr.bf16.mxu0 0
        %3944 = vmatpush1.bf16.msra.mxu0 0
        %3945 = vmatprep.subr.bf16.mxu0 0
        %3946 = vmatpush1.bf16.msra.mxu0 0
        %3947 = vmatprep.subr.bf16.mxu0 0
        %3948 = vmatpush1.bf16.msra.mxu0 0
        %3949 = vmatprep.subr.bf16.mxu0 0
        %3950 = vmatpush1.bf16.msra.mxu0 0
        %3951 = vmatprep.subr.bf16.mxu0 0
        %3952 = vmatpush1.bf16.msra.mxu0 0
        %3953 = vmatprep.subr.bf16.mxu0 0
        %3954 = vmatpush1.bf16.msra.mxu0 0
        %3955 = vmatprep.subr.bf16.mxu0 0
        %3956 = vmatpush1.bf16.msra.mxu0 0
        %3957 = vmatprep.subr.bf16.mxu0 0
        %3958 = vmatpush1.bf16.msra.mxu0 0
        %3959 = vmatprep.subr.bf16.mxu0 0
        %3960 = vmatpush1.bf16.msra.mxu0 0
        %3961 = vmatprep.mubr.bf16.mxu0 0
        %3962 = vmatmul.mubr.bf16.gmra.mrb[0].mxu0 %v3924
        %v3963 = vpop.f32.mrb[0].mxu0
        %v3964 = vadd.f32 0.0, %v3963
        %v3965 = vpop.f32.mrb[0].mxu0
        %v3966 = vpop.f32.mrb[0].mxu0
        %v3967 = vpop.f32.mrb[0].mxu0
        %3968 = vdwg.mxu0
        %3969 = vrot.lane.b32.xlu0 %v3623, 64
        %v3970 = vpop.permute.xlu0 %3969
        %v3972 = vsel %vm846, %v3871, 0
        %v3975 = vsel %vm1097, %v3970, 0
        %3977 = vmatprep.subr.bf16.mxu0 0
        %3978 = vmatpush1.bf16.msra.mxu0 %v3975
        %3979 = vmatprep.subr.bf16.mxu0 0
        %3980 = vmatpush1.bf16.msra.mxu0 0
        %3981 = vmatprep.subr.bf16.mxu0 0
        %3982 = vmatpush1.bf16.msra.mxu0 0
        %3983 = vmatprep.subr.bf16.mxu0 0
        %3984 = vmatpush1.bf16.msra.mxu0 0
        %3985 = vmatprep.subr.bf16.mxu0 0
        %3986 = vmatpush1.bf16.msra.mxu0 0
        %3987 = vmatprep.subr.bf16.mxu0 0
        %3988 = vmatpush1.bf16.msra.mxu0 0
        %3989 = vmatprep.subr.bf16.mxu0 0
        %3990 = vmatpush1.bf16.msra.mxu0 0
        %3991 = vmatprep.subr.bf16.mxu0 0
        %3992 = vmatpush1.bf16.msra.mxu0 0
        %3993 = vmatprep.subr.bf16.mxu0 0
        %3994 = vmatpush1.bf16.msra.mxu0 0
        %3995 = vmatprep.subr.bf16.mxu0 0
        %3996 = vmatpush1.bf16.msra.mxu0 0
        %3997 = vmatprep.subr.bf16.mxu0 0
        %3998 = vmatpush1.bf16.msra.mxu0 0
        %3999 = vmatprep.subr.bf16.mxu0 0
        %4000 = vmatpush1.bf16.msra.mxu0 0
        %4001 = vmatprep.subr.bf16.mxu0 0
        %4002 = vmatpush1.bf16.msra.mxu0 0
        %4003 = vmatprep.subr.bf16.mxu0 0
        %4004 = vmatpush1.bf16.msra.mxu0 0
        %4005 = vmatprep.subr.bf16.mxu0 0
        %4006 = vmatpush1.bf16.msra.mxu0 0
        %4007 = vmatprep.subr.bf16.mxu0 0
        %4008 = vmatpush1.bf16.msra.mxu0 0
        %4009 = vmatprep.mubr.bf16.mxu0 0
        %4010 = vmatmul.mubr.bf16.gmra.mrb[0].mxu0 %v3972
        %v4011 = vpop.f32.mrb[0].mxu0
        %v4012 = vadd.f32 0.0, %v4011
        %v4013 = vpop.f32.mrb[0].mxu0
        %v4014 = vpop.f32.mrb[0].mxu0
        %v4015 = vpop.f32.mrb[0].mxu0
        %4016 = vdwg.mxu0
        %4017 = vrot.lane.b32.xlu0 %v3624, 64
        %v4018 = vpop.permute.xlu0 %4017
        %v4020 = vsel %vm846, %v3872, 0
        %v4023 = vsel %vm1097, %v4018, 0
        %4025 = vmatprep.subr.bf16.mxu0 0
        %4026 = vmatpush1.bf16.msra.mxu0 %v4023
        %4027 = vmatprep.subr.bf16.mxu0 0
        %4028 = vmatpush1.bf16.msra.mxu0 0
        %4029 = vmatprep.subr.bf16.mxu0 0
        %4030 = vmatpush1.bf16.msra.mxu0 0
        %4031 = vmatprep.subr.bf16.mxu0 0
        %4032 = vmatpush1.bf16.msra.mxu0 0
        %4033 = vmatprep.subr.bf16.mxu0 0
        %4034 = vmatpush1.bf16.msra.mxu0 0
        %4035 = vmatprep.subr.bf16.mxu0 0
        %4036 = vmatpush1.bf16.msra.mxu0 0
        %4037 = vmatprep.subr.bf16.mxu0 0
        %4038 = vmatpush1.bf16.msra.mxu0 0
        %4039 = vmatprep.subr.bf16.mxu0 0
        %4040 = vmatpush1.bf16.msra.mxu0 0
        %4041 = vmatprep.subr.bf16.mxu0 0
        %4042 = vmatpush1.bf16.msra.mxu0 0
        %4043 = vmatprep.subr.bf16.mxu0 0
        %4044 = vmatpush1.bf16.msra.mxu0 0
        %4045 = vmatprep.subr.bf16.mxu0 0
        %4046 = vmatpush1.bf16.msra.mxu0 0
        %4047 = vmatprep.subr.bf16.mxu0 0
        %4048 = vmatpush1.bf16.msra.mxu0 0
        %4049 = vmatprep.subr.bf16.mxu0 0
        %4050 = vmatpush1.bf16.msra.mxu0 0
        %4051 = vmatprep.subr.bf16.mxu0 0
        %4052 = vmatpush1.bf16.msra.mxu0 0
        %4053 = vmatprep.subr.bf16.mxu0 0
        %4054 = vmatpush1.bf16.msra.mxu0 0
        %4055 = vmatprep.subr.bf16.mxu0 0
        %4056 = vmatpush1.bf16.msra.mxu0 0
        %4057 = vmatprep.mubr.bf16.mxu0 0
        %4058 = vmatmul.mubr.bf16.gmra.mrb[0].mxu0 %v4020
        %v4059 = vpop.f32.mrb[0].mxu0
        %v4060 = vadd.f32 0.0, %v4059
        %v4061 = vpop.f32.mrb[0].mxu0
        %v4062 = vpop.f32.mrb[0].mxu0
        %v4063 = vpop.f32.mrb[0].mxu0
        %4064 = vdwg.mxu0
        %v4065 = vpack.c.bf16 %v3916, %v3916
        %v4066 = vpack.c.bf16 %v3964, %v3964
        %v4067 = vpack.c.bf16 %v4012, %v4012
        %v4068 = vpack.c.bf16 %v4060, %v4060
        %v4069 = vld [vmem:[%s15] sm:$0xf]
        %v4070 = vld [vmem:[%s15 + $0x4] sm:$0xf]
        %v4071 = vld [vmem:[%s15 + $0x8] sm:$0xf]
        %v4072 = vld [vmem:[%s15 + $0xc] sm:$0xf]
        %v4074 = vsel %vm846, %v4065, 0
        %v4077 = vsel %vm1097, %v4069, 0
        %4079 = vmatprep.subr.bf16.mxu0 0
        %4080 = vmatpush1.bf16.msra.mxu0 %v4077
        %4081 = vmatprep.subr.bf16.mxu0 0
        %4082 = vmatpush1.bf16.msra.mxu0 0
        %4083 = vmatprep.subr.bf16.mxu0 0
        %4084 = vmatpush1.bf16.msra.mxu0 0
        %4085 = vmatprep.subr.bf16.mxu0 0
        %4086 = vmatpush1.bf16.msra.mxu0 0
        %4087 = vmatprep.subr.bf16.mxu0 0
        %4088 = vmatpush1.bf16.msra.mxu0 0
        %4089 = vmatprep.subr.bf16.mxu0 0
        %4090 = vmatpush1.bf16.msra.mxu0 0
        %4091 = vmatprep.subr.bf16.mxu0 0
        %4092 = vmatpush1.bf16.msra.mxu0 0
        %4093 = vmatprep.subr.bf16.mxu0 0
        %4094 = vmatpush1.bf16.msra.mxu0 0
        %4095 = vmatprep.subr.bf16.mxu0 0
        %4096 = vmatpush1.bf16.msra.mxu0 0
        %4097 = vmatprep.subr.bf16.mxu0 0
        %4098 = vmatpush1.bf16.msra.mxu0 0
        %4099 = vmatprep.subr.bf16.mxu0 0
        %4100 = vmatpush1.bf16.msra.mxu0 0
        %4101 = vmatprep.subr.bf16.mxu0 0
        %4102 = vmatpush1.bf16.msra.mxu0 0
        %4103 = vmatprep.subr.bf16.mxu0 0
        %4104 = vmatpush1.bf16.msra.mxu0 0
        %4105 = vmatprep.subr.bf16.mxu0 0
        %4106 = vmatpush1.bf16.msra.mxu0 0
        %4107 = vmatprep.subr.bf16.mxu0 0
        %4108 = vmatpush1.bf16.msra.mxu0 0
        %4109 = vmatprep.subr.bf16.mxu0 0
        %4110 = vmatpush1.bf16.msra.mxu0 0
        %4111 = vmatprep.mubr.bf16.mxu0 0
        %4112 = vmatmul.mubr.bf16.gmra.mrb[0].mxu0 %v4074
        %v4113 = vpop.f32.mrb[0].mxu0
        %v4114 = vadd.f32 0.0, %v4113
        %v4115 = vpop.f32.mrb[0].mxu0
        %v4116 = vpop.f32.mrb[0].mxu0
        %v4117 = vpop.f32.mrb[0].mxu0
        %4118 = vdwg.mxu0
        %v4120 = vsel %vm846, %v4066, 0
        %v4123 = vsel %vm1097, %v4070, 0
        %4125 = vmatprep.subr.bf16.mxu0 0
        %4126 = vmatpush1.bf16.msra.mxu0 %v4123
        %4127 = vmatprep.subr.bf16.mxu0 0
        %4128 = vmatpush1.bf16.msra.mxu0 0
        %4129 = vmatprep.subr.bf16.mxu0 0
        %4130 = vmatpush1.bf16.msra.mxu0 0
        %4131 = vmatprep.subr.bf16.mxu0 0
        %4132 = vmatpush1.bf16.msra.mxu0 0
        %4133 = vmatprep.subr.bf16.mxu0 0
        %4134 = vmatpush1.bf16.msra.mxu0 0
        %4135 = vmatprep.subr.bf16.mxu0 0
        %4136 = vmatpush1.bf16.msra.mxu0 0
        %4137 = vmatprep.subr.bf16.mxu0 0
        %4138 = vmatpush1.bf16.msra.mxu0 0
        %4139 = vmatprep.subr.bf16.mxu0 0
        %4140 = vmatpush1.bf16.msra.mxu0 0
        %4141 = vmatprep.subr.bf16.mxu0 0
        %4142 = vmatpush1.bf16.msra.mxu0 0
        %4143 = vmatprep.subr.bf16.mxu0 0
        %4144 = vmatpush1.bf16.msra.mxu0 0
        %4145 = vmatprep.subr.bf16.mxu0 0
        %4146 = vmatpush1.bf16.msra.mxu0 0
        %4147 = vmatprep.subr.bf16.mxu0 0
        %4148 = vmatpush1.bf16.msra.mxu0 0
        %4149 = vmatprep.subr.bf16.mxu0 0
        %4150 = vmatpush1.bf16.msra.mxu0 0
        %4151 = vmatprep.subr.bf16.mxu0 0
        %4152 = vmatpush1.bf16.msra.mxu0 0
        %4153 = vmatprep.subr.bf16.mxu0 0
        %4154 = vmatpush1.bf16.msra.mxu0 0
        %4155 = vmatprep.subr.bf16.mxu0 0
        %4156 = vmatpush1.bf16.msra.mxu0 0
        %4157 = vmatprep.mubr.bf16.mxu0 0
        %4158 = vmatmul.mubr.bf16.gmra.mrb[0].mxu0 %v4120
        %v4159 = vpop.f32.mrb[0].mxu0
        %v4160 = vadd.f32 0.0, %v4159
        %v4161 = vpop.f32.mrb[0].mxu0
        %v4162 = vpop.f32.mrb[0].mxu0
        %v4163 = vpop.f32.mrb[0].mxu0
        %4164 = vdwg.mxu0
        %v4166 = vsel %vm846, %v4067, 0
        %v4169 = vsel %vm1097, %v4071, 0
        %4171 = vmatprep.subr.bf16.mxu0 0
        %4172 = vmatpush1.bf16.msra.mxu0 %v4169
        %4173 = vmatprep.subr.bf16.mxu0 0
        %4174 = vmatpush1.bf16.msra.mxu0 0
        %4175 = vmatprep.subr.bf16.mxu0 0
        %4176 = vmatpush1.bf16.msra.mxu0 0
        %4177 = vmatprep.subr.bf16.mxu0 0
        %4178 = vmatpush1.bf16.msra.mxu0 0
        %4179 = vmatprep.subr.bf16.mxu0 0
        %4180 = vmatpush1.bf16.msra.mxu0 0
        %4181 = vmatprep.subr.bf16.mxu0 0
        %4182 = vmatpush1.bf16.msra.mxu0 0
        %4183 = vmatprep.subr.bf16.mxu0 0
        %4184 = vmatpush1.bf16.msra.mxu0 0
        %4185 = vmatprep.subr.bf16.mxu0 0
        %4186 = vmatpush1.bf16.msra.mxu0 0
        %4187 = vmatprep.subr.bf16.mxu0 0
        %4188 = vmatpush1.bf16.msra.mxu0 0
        %4189 = vmatprep.subr.bf16.mxu0 0
        %4190 = vmatpush1.bf16.msra.mxu0 0
        %4191 = vmatprep.subr.bf16.mxu0 0
        %4192 = vmatpush1.bf16.msra.mxu0 0
        %4193 = vmatprep.subr.bf16.mxu0 0
        %4194 = vmatpush1.bf16.msra.mxu0 0
        %4195 = vmatprep.subr.bf16.mxu0 0
        %4196 = vmatpush1.bf16.msra.mxu0 0
        %4197 = vmatprep.subr.bf16.mxu0 0
        %4198 = vmatpush1.bf16.msra.mxu0 0
        %4199 = vmatprep.subr.bf16.mxu0 0
        %4200 = vmatpush1.bf16.msra.mxu0 0
        %4201 = vmatprep.subr.bf16.mxu0 0
        %4202 = vmatpush1.bf16.msra.mxu0 0
        %4203 = vmatprep.mubr.bf16.mxu0 0
        %4204 = vmatmul.mubr.bf16.gmra.mrb[0].mxu0 %v4166
        %v4205 = vpop.f32.mrb[0].mxu0
        %v4206 = vadd.f32 0.0, %v4205
        %v4207 = vpop.f32.mrb[0].mxu0
        %v4208 = vpop.f32.mrb[0].mxu0
        %v4209 = vpop.f32.mrb[0].mxu0
        %4210 = vdwg.mxu0
        %v4212 = vsel %vm846, %v4068, 0
        %v4215 = vsel %vm1097, %v4072, 0
        %4217 = vmatprep.subr.bf16.mxu0 0
        %4218 = vmatpush1.bf16.msra.mxu0 %v4215
        %4219 = vmatprep.subr.bf16.mxu0 0
        %4220 = vmatpush1.bf16.msra.mxu0 0
        %4221 = vmatprep.subr.bf16.mxu0 0
        %4222 = vmatpush1.bf16.msra.mxu0 0
        %4223 = vmatprep.subr.bf16.mxu0 0
        %4224 = vmatpush1.bf16.msra.mxu0 0
        %4225 = vmatprep.subr.bf16.mxu0 0
        %4226 = vmatpush1.bf16.msra.mxu0 0
        %4227 = vmatprep.subr.bf16.mxu0 0
        %4228 = vmatpush1.bf16.msra.mxu0 0
        %4229 = vmatprep.subr.bf16.mxu0 0
        %4230 = vmatpush1.bf16.msra.mxu0 0
        %4231 = vmatprep.subr.bf16.mxu0 0
        %4232 = vmatpush1.bf16.msra.mxu0 0
        %4233 = vmatprep.subr.bf16.mxu0 0
        %4234 = vmatpush1.bf16.msra.mxu0 0
        %4235 = vmatprep.subr.bf16.mxu0 0
        %4236 = vmatpush1.bf16.msra.mxu0 0
        %4237 = vmatprep.subr.bf16.mxu0 0
        %4238 = vmatpush1.bf16.msra.mxu0 0
        %4239 = vmatprep.subr.bf16.mxu0 0
        %4240 = vmatpush1.bf16.msra.mxu0 0
        %4241 = vmatprep.subr.bf16.mxu0 0
        %4242 = vmatpush1.bf16.msra.mxu0 0
        %4243 = vmatprep.subr.bf16.mxu0 0
        %4244 = vmatpush1.bf16.msra.mxu0 0
        %4245 = vmatprep.subr.bf16.mxu0 0
        %4246 = vmatpush1.bf16.msra.mxu0 0
        %4247 = vmatprep.subr.bf16.mxu0 0
        %4248 = vmatpush1.bf16.msra.mxu0 0
        %4249 = vmatprep.mubr.bf16.mxu0 0
        %4250 = vmatmul.mubr.bf16.gmra.mrb[0].mxu0 %v4212
        %v4251 = vpop.f32.mrb[0].mxu0
        %v4252 = vadd.f32 0.0, %v4251
        %v4253 = vpop.f32.mrb[0].mxu0
        %v4254 = vpop.f32.mrb[0].mxu0
        %v4255 = vpop.f32.mrb[0].mxu0
        %4256 = vdwg.mxu0
        %v4257 = vsel %vm785, %v4114, 0.0
        %v4258 = vsel %vm785, %v4160, 0.0
        %v4259 = vadd.f32 %v4257, %v4258
        %v4260 = vsel %vm785, %v4206, 0.0
        %v4261 = vadd.f32 %v4259, %v4260
        %v4262 = vsel %vm785, %v4252, 0.0
        %v4263 = vadd.f32 %v4261, %v4262
        %v4264 = vld [vmem:[%s16] sm:$0x1]
        %v4266 = vlaneseq
        %v4267 = vshrl.u32 %v4266, 7
        %v4268 = vsub.s32 0, %v4267
        %v4269 = vrot.slane %v4264, %v4268
        %v4271 = vadd.f32 %v4263, %v4269
        %v4272 = vadd.f32 %v3543, %v4271
        %v4273 = vsel %vm785, %v4272, 0.0
        %4274 = vadd.xlane.f32.xlu0 %v4273
        %v4275 = vpop.xlane.xlu0 %4274
        %v4276 = vmul.f32 %v4275, %v1496
        %v4277 = vsub.f32 %v4272, %v4276
        %v4278 = vmul.f32 %v4277, %v4277
        %v4279 = vsel %vm785, %v4278, 0.0
        %4280 = vadd.xlane.f32.xlu0 %v4279
        %v4281 = vpop.xlane.xlu0 %4280
        %v4282 = vmul.f32 %v4281, %v1496
        %v4283 = vadd.f32 %v4282, 1e-05
        %v4284 = vrsqrt.pop %v4283
        %v4285 = vmul.f32 %v4277, %v4284
        %v4286 = vld [vmem:[%s17] sm:$0x1]
        %v4288 = vlaneseq
        %v4289 = vshrl.u32 %v4288, 7
        %v4290 = vsub.s32 0, %v4289
        %v4291 = vrot.slane %v4286, %v4290
        %v4293 = vmul.f32 %v4285, %v4291
        %v4294 = vld [vmem:[%s18] sm:$0x1]
        %v4296 = vlaneseq
        %v4297 = vshrl.u32 %v4296, 7
        %v4298 = vsub.s32 0, %v4297
        %v4299 = vrot.slane %v4294, %v4298
        %v4301 = vadd.f32 %v4293, %v4299
        %v4302 = vpack.c.bf16 %v4301, %v4301
        %v4303 = vld [vmem:[%s21] sm:$0xff]
        %v4304 = vld [vmem:[%s21 + $0x8] sm:$0xff]
        %v4305 = vld [vmem:[%s21 + $0x10] sm:$0xff]
        %v4306 = vld [vmem:[%s21 + $0x18] sm:$0xff]
        %v4307 = vld [vmem:[%s21 + $0x20] sm:$0xff]
        %v4308 = vld [vmem:[%s21 + $0x28] sm:$0xff]
        %v4309 = vld [vmem:[%s21 + $0x30] sm:$0xff]
        %v4310 = vld [vmem:[%s21 + $0x38] sm:$0xff]
        %v4311 = vld [vmem:[%s21 + $0x40] sm:$0xff]
        %v4312 = vld [vmem:[%s21 + $0x48] sm:$0xff]
        %v4313 = vld [vmem:[%s21 + $0x50] sm:$0xff]
        %v4314 = vld [vmem:[%s21 + $0x58] sm:$0xff]
        %v4315 = vld [vmem:[%s21 + $0x60] sm:$0xff]
        %v4316 = vld [vmem:[%s21 + $0x68] sm:$0xff]
        %v4317 = vld [vmem:[%s21 + $0x70] sm:$0xff]
        %v4318 = vld [vmem:[%s21 + $0x78] sm:$0xff]
        %v4319 = vld [vmem:[%s21 + $0x80] sm:$0xff]
        %v4320 = vld [vmem:[%s21 + $0x88] sm:$0xff]
        %v4321 = vld [vmem:[%s21 + $0x90] sm:$0xff]
        %v4322 = vld [vmem:[%s21 + $0x98] sm:$0xff]
        %v4323 = vld [vmem:[%s21 + $0xa0] sm:$0xff]
        %v4324 = vld [vmem:[%s21 + $0xa8] sm:$0xff]
        %v4325 = vld [vmem:[%s21 + $0xb0] sm:$0xff]
        %v4326 = vld [vmem:[%s21 + $0xb8] sm:$0xff]
        %v4327 = vld [vmem:[%s21 + $0xc0] sm:$0xff]
        %v4328 = vld [vmem:[%s21 + $0xc8] sm:$0xff]
        %v4329 = vld [vmem:[%s21 + $0xd0] sm:$0xff]
        %v4330 = vld [vmem:[%s21 + $0xd8] sm:$0xff]
        %v4331 = vld [vmem:[%s21 + $0xe0] sm:$0xff]
        %v4332 = vld [vmem:[%s21 + $0xe8] sm:$0xff]
        %v4333 = vld [vmem:[%s21 + $0xf0] sm:$0xff]
        %v4334 = vld [vmem:[%s21 + $0xf8] sm:$0xff]
        %v4335 = vld [vmem:[%s22] sm:$0xff]
        %v4336 = vld [vmem:[%s22 + $0x8] sm:$0xff]
        %v4339 = vlaneseq
        %v4340 = vshrl.u32 %v4339, 7
        %v4341 = vsub.s32 0, %v4340
        %v4342 = vrot.slane %v4335, %v4341
        %v4343 = vlaneseq
        %v4344 = vshrl.u32 %v4343, 7
        %v4345 = vsub.s32 1, %v4344
        %v4346 = vrot.slane %v4335, %v4345
        %v4347 = vlaneseq
        %v4348 = vshrl.u32 %v4347, 7
        %v4349 = vsub.s32 2, %v4348
        %v4350 = vrot.slane %v4335, %v4349
        %v4351 = vlaneseq
        %v4352 = vshrl.u32 %v4351, 7
        %v4353 = vsub.s32 3, %v4352
        %v4354 = vrot.slane %v4335, %v4353
        %v4355 = vlaneseq
        %v4356 = vshrl.u32 %v4355, 7
        %v4357 = vsub.s32 4, %v4356
        %v4358 = vrot.slane %v4335, %v4357
        %v4359 = vlaneseq
        %v4360 = vshrl.u32 %v4359, 7
        %v4361 = vsub.s32 5, %v4360
        %v4362 = vrot.slane %v4335, %v4361
        %v4363 = vlaneseq
        %v4364 = vshrl.u32 %v4363, 7
        %v4365 = vsub.s32 6, %v4364
        %v4366 = vrot.slane %v4335, %v4365
        %v4367 = vlaneseq
        %v4368 = vshrl.u32 %v4367, 7
        %v4369 = vsub.s32 7, %v4368
        %v4370 = vrot.slane %v4335, %v4369
        %v4371 = vlaneseq
        %v4372 = vshrl.u32 %v4371, 7
        %v4373 = vsub.s32 0, %v4372
        %v4374 = vrot.slane %v4336, %v4373
        %v4375 = vlaneseq
        %v4376 = vshrl.u32 %v4375, 7
        %v4377 = vsub.s32 1, %v4376
        %v4378 = vrot.slane %v4336, %v4377
        %v4379 = vlaneseq
        %v4380 = vshrl.u32 %v4379, 7
        %v4381 = vsub.s32 2, %v4380
        %v4382 = vrot.slane %v4336, %v4381
        %v4383 = vlaneseq
        %v4384 = vshrl.u32 %v4383, 7
        %v4385 = vsub.s32 3, %v4384
        %v4386 = vrot.slane %v4336, %v4385
        %v4387 = vlaneseq
        %v4388 = vshrl.u32 %v4387, 7
        %v4389 = vsub.s32 4, %v4388
        %v4390 = vrot.slane %v4336, %v4389
        %v4391 = vlaneseq
        %v4392 = vshrl.u32 %v4391, 7
        %v4393 = vsub.s32 5, %v4392
        %v4394 = vrot.slane %v4336, %v4393
        %v4395 = vlaneseq
        %v4396 = vshrl.u32 %v4395, 7
        %v4397 = vsub.s32 6, %v4396
        %v4398 = vrot.slane %v4336, %v4397
        %v4399 = vlaneseq
        %v4400 = vshrl.u32 %v4399, 7
        %v4401 = vsub.s32 7, %v4400
        %v4402 = vrot.slane %v4336, %v4401
        %v4451 = vunpack.c.l.b16 %v4303
        %v4452 = vunpack.c.h.b16 %v4303
        %v4453 = vunpack.c.l.b16 %v4304
        %v4454 = vunpack.c.h.b16 %v4304
        %v4455 = vunpack.c.l.b16 %v4305
        %v4456 = vunpack.c.h.b16 %v4305
        %v4457 = vunpack.c.l.b16 %v4306
        %v4458 = vunpack.c.h.b16 %v4306
        %v4459 = vunpack.c.l.b16 %v4307
        %v4460 = vunpack.c.h.b16 %v4307
        %v4461 = vunpack.c.l.b16 %v4308
        %v4462 = vunpack.c.h.b16 %v4308
        %v4463 = vunpack.c.l.b16 %v4309
        %v4464 = vunpack.c.h.b16 %v4309
        %v4465 = vunpack.c.l.b16 %v4310
        %v4466 = vunpack.c.h.b16 %v4310
        %v4467 = vunpack.c.l.b16 %v4311
        %v4468 = vunpack.c.h.b16 %v4311
        %v4469 = vunpack.c.l.b16 %v4312
        %v4470 = vunpack.c.h.b16 %v4312
        %v4471 = vunpack.c.l.b16 %v4313
        %v4472 = vunpack.c.h.b16 %v4313
        %v4473 = vunpack.c.l.b16 %v4314
        %v4474 = vunpack.c.h.b16 %v4314
        %v4475 = vunpack.c.l.b16 %v4315
        %v4476 = vunpack.c.h.b16 %v4315
        %v4477 = vunpack.c.l.b16 %v4316
        %v4478 = vunpack.c.h.b16 %v4316
        %v4479 = vunpack.c.l.b16 %v4317
        %v4480 = vunpack.c.h.b16 %v4317
        %v4481 = vunpack.c.l.b16 %v4318
        %v4482 = vunpack.c.h.b16 %v4318
        %v4483 = vunpack.c.l.b16 %v4319
        %v4484 = vunpack.c.h.b16 %v4319
        %v4485 = vunpack.c.l.b16 %v4320
        %v4486 = vunpack.c.h.b16 %v4320
        %v4487 = vunpack.c.l.b16 %v4321
        %v4488 = vunpack.c.h.b16 %v4321
        %v4489 = vunpack.c.l.b16 %v4322
        %v4490 = vunpack.c.h.b16 %v4322
        %v4491 = vunpack.c.l.b16 %v4323
        %v4492 = vunpack.c.h.b16 %v4323
        %v4493 = vunpack.c.l.b16 %v4324
        %v4494 = vunpack.c.h.b16 %v4324
        %v4495 = vunpack.c.l.b16 %v4325
        %v4496 = vunpack.c.h.b16 %v4325
        %v4497 = vunpack.c.l.b16 %v4326
        %v4498 = vunpack.c.h.b16 %v4326
        %v4499 = vunpack.c.l.b16 %v4327
        %v4500 = vunpack.c.h.b16 %v4327
        %v4501 = vunpack.c.l.b16 %v4328
        %v4502 = vunpack.c.h.b16 %v4328
        %v4503 = vunpack.c.l.b16 %v4329
        %v4504 = vunpack.c.h.b16 %v4329
        %v4505 = vunpack.c.l.b16 %v4330
        %v4506 = vunpack.c.h.b16 %v4330
        %v4507 = vunpack.c.l.b16 %v4331
        %v4508 = vunpack.c.h.b16 %v4331
        %v4509 = vunpack.c.l.b16 %v4332
        %v4510 = vunpack.c.h.b16 %v4332
        %v4511 = vunpack.c.l.b16 %v4333
        %v4512 = vunpack.c.h.b16 %v4333
        %v4513 = vunpack.c.l.b16 %v4334
        %v4514 = vunpack.c.h.b16 %v4334
        %v4515 = vpack.c.b16 %v4467, %v4451
        %v4516 = vpack.c.b16 %v4468, %v4452
        %v4517 = vpack.c.b16 %v4469, %v4453
        %v4518 = vpack.c.b16 %v4470, %v4454
        %v4519 = vpack.c.b16 %v4471, %v4455
        %v4520 = vpack.c.b16 %v4472, %v4456
        %v4521 = vpack.c.b16 %v4473, %v4457
        %v4522 = vpack.c.b16 %v4474, %v4458
        %v4523 = vpack.c.b16 %v4475, %v4459
        %v4524 = vpack.c.b16 %v4476, %v4460
        %v4525 = vpack.c.b16 %v4477, %v4461
        %v4526 = vpack.c.b16 %v4478, %v4462
        %v4527 = vpack.c.b16 %v4479, %v4463
        %v4528 = vpack.c.b16 %v4480, %v4464
        %v4529 = vpack.c.b16 %v4481, %v4465
        %v4530 = vpack.c.b16 %v4482, %v4466
        %v4531 = vpack.c.b16 %v4499, %v4483
        %v4532 = vpack.c.b16 %v4500, %v4484
        %v4533 = vpack.c.b16 %v4501, %v4485
        %v4534 = vpack.c.b16 %v4502, %v4486
        %v4535 = vpack.c.b16 %v4503, %v4487
        %v4536 = vpack.c.b16 %v4504, %v4488
        %v4537 = vpack.c.b16 %v4505, %v4489
        %v4538 = vpack.c.b16 %v4506, %v4490
        %v4539 = vpack.c.b16 %v4507, %v4491
        %v4540 = vpack.c.b16 %v4508, %v4492
        %v4541 = vpack.c.b16 %v4509, %v4493
        %v4542 = vpack.c.b16 %v4510, %v4494
        %v4543 = vpack.c.b16 %v4511, %v4495
        %v4544 = vpack.c.b16 %v4512, %v4496
        %v4545 = vpack.c.b16 %v4513, %v4497
        %v4546 = vpack.c.b16 %v4514, %v4498
        %v4580 = vsel %vm785, %v4302, 0
        %4582 = vmatprep.subr.bf16.mxu0 %v4516
        %4583 = vmatpush1.bf16.msra.mxu0 %v4515
        %4584 = vmatprep.subr.bf16.mxu0 %v4532
        %4585 = vmatpush1.bf16.msra.mxu0 %v4531
        %4586 = vmatprep.subr.bf16.mxu0 0
        %4587 = vmatpush1.bf16.msra.mxu0 0
        %4588 = vmatprep.subr.bf16.mxu0 0
        %4589 = vmatpush1.bf16.msra.mxu0 0
        %4590 = vmatprep.subr.bf16.mxu0 0
        %4591 = vmatpush1.bf16.msra.mxu0 0
        %4592 = vmatprep.subr.bf16.mxu0 0
        %4593 = vmatpush1.bf16.msra.mxu0 0
        %4594 = vmatprep.subr.bf16.mxu0 0
        %4595 = vmatpush1.bf16.msra.mxu0 0
        %4596 = vmatprep.subr.bf16.mxu0 0
        %4597 = vmatpush1.bf16.msra.mxu0 0
        %4598 = vmatprep.subr.bf16.mxu0 0
        %4599 = vmatpush1.bf16.msra.mxu0 0
        %4600 = vmatprep.subr.bf16.mxu0 0
        %4601 = vmatpush1.bf16.msra.mxu0 0
        %4602 = vmatprep.subr.bf16.mxu0 0
        %4603 = vmatpush1.bf16.msra.mxu0 0
        %4604 = vmatprep.subr.bf16.mxu0 0
        %4605 = vmatpush1.bf16.msra.mxu0 0
        %4606 = vmatprep.subr.bf16.mxu0 0
        %4607 = vmatpush1.bf16.msra.mxu0 0
        %4608 = vmatprep.subr.bf16.mxu0 0
        %4609 = vmatpush1.bf16.msra.mxu0 0
        %4610 = vmatprep.subr.bf16.mxu0 0
        %4611 = vmatpush1.bf16.msra.mxu0 0
        %4612 = vmatprep.subr.bf16.mxu0 0
        %4613 = vmatpush1.bf16.msra.mxu0 0
        %4614 = vmatprep.mubr.bf16.mxu0 0
        %4615 = vmatmul.mubr.bf16.gmra.mrb[0].mxu0 %v4580
        %v4616 = vpop.f32.mrb[0].mxu0
        %v4617 = vadd.f32 %v4342, %v4616
        %v4618 = vpop.f32.mrb[0].mxu0
        %v4619 = vadd.f32 %v4346, %v4618
        %v4620 = vpop.f32.mrb[0].mxu0
        %v4621 = vpop.f32.mrb[0].mxu0
        %4622 = vdwg.mxu0
        %4623 = vmatprep.subr.bf16.mxu0 %v4518
        %4624 = vmatpush1.bf16.msra.mxu0 %v4517
        %4625 = vmatprep.subr.bf16.mxu0 %v4534
        %4626 = vmatpush1.bf16.msra.mxu0 %v4533
        %4627 = vmatprep.subr.bf16.mxu0 0
        %4628 = vmatpush1.bf16.msra.mxu0 0
        %4629 = vmatprep.subr.bf16.mxu0 0
        %4630 = vmatpush1.bf16.msra.mxu0 0
        %4631 = vmatprep.subr.bf16.mxu0 0
        %4632 = vmatpush1.bf16.msra.mxu0 0
        %4633 = vmatprep.subr.bf16.mxu0 0
        %4634 = vmatpush1.bf16.msra.mxu0 0
        %4635 = vmatprep.subr.bf16.mxu0 0
        %4636 = vmatpush1.bf16.msra.mxu0 0
        %4637 = vmatprep.subr.bf16.mxu0 0
        %4638 = vmatpush1.bf16.msra.mxu0 0
        %4639 = vmatprep.subr.bf16.mxu0 0
        %4640 = vmatpush1.bf16.msra.mxu0 0
        %4641 = vmatprep.subr.bf16.mxu0 0
        %4642 = vmatpush1.bf16.msra.mxu0 0
        %4643 = vmatprep.subr.bf16.mxu0 0
        %4644 = vmatpush1.bf16.msra.mxu0 0
        %4645 = vmatprep.subr.bf16.mxu0 0
        %4646 = vmatpush1.bf16.msra.mxu0 0
        %4647 = vmatprep.subr.bf16.mxu0 0
        %4648 = vmatpush1.bf16.msra.mxu0 0
        %4649 = vmatprep.subr.bf16.mxu0 0
        %4650 = vmatpush1.bf16.msra.mxu0 0
        %4651 = vmatprep.subr.bf16.mxu0 0
        %4652 = vmatpush1.bf16.msra.mxu0 0
        %4653 = vmatprep.subr.bf16.mxu0 0
        %4654 = vmatpush1.bf16.msra.mxu0 0
        %4655 = vmatprep.mubr.bf16.mxu0 0
        %4656 = vmatmul.mubr.bf16.gmra.mrb[0].mxu0 %v4580
        %v4657 = vpop.f32.mrb[0].mxu0
        %v4658 = vadd.f32 %v4350, %v4657
        %v4659 = vpop.f32.mrb[0].mxu0
        %v4660 = vadd.f32 %v4354, %v4659
        %v4661 = vpop.f32.mrb[0].mxu0
        %v4662 = vpop.f32.mrb[0].mxu0
        %4663 = vdwg.mxu0
        %4664 = vmatprep.subr.bf16.mxu0 %v4520
        %4665 = vmatpush1.bf16.msra.mxu0 %v4519
        %4666 = vmatprep.subr.bf16.mxu0 %v4536
        %4667 = vmatpush1.bf16.msra.mxu0 %v4535
        %4668 = vmatprep.subr.bf16.mxu0 0
        %4669 = vmatpush1.bf16.msra.mxu0 0
        %4670 = vmatprep.subr.bf16.mxu0 0
        %4671 = vmatpush1.bf16.msra.mxu0 0
        %4672 = vmatprep.subr.bf16.mxu0 0
        %4673 = vmatpush1.bf16.msra.mxu0 0
        %4674 = vmatprep.subr.bf16.mxu0 0
        %4675 = vmatpush1.bf16.msra.mxu0 0
        %4676 = vmatprep.subr.bf16.mxu0 0
        %4677 = vmatpush1.bf16.msra.mxu0 0
        %4678 = vmatprep.subr.bf16.mxu0 0
        %4679 = vmatpush1.bf16.msra.mxu0 0
        %4680 = vmatprep.subr.bf16.mxu0 0
        %4681 = vmatpush1.bf16.msra.mxu0 0
        %4682 = vmatprep.subr.bf16.mxu0 0
        %4683 = vmatpush1.bf16.msra.mxu0 0
        %4684 = vmatprep.subr.bf16.mxu0 0
        %4685 = vmatpush1.bf16.msra.mxu0 0
        %4686 = vmatprep.subr.bf16.mxu0 0
        %4687 = vmatpush1.bf16.msra.mxu0 0
        %4688 = vmatprep.subr.bf16.mxu0 0
        %4689 = vmatpush1.bf16.msra.mxu0 0
        %4690 = vmatprep.subr.bf16.mxu0 0
        %4691 = vmatpush1.bf16.msra.mxu0 0
        %4692 = vmatprep.subr.bf16.mxu0 0
        %4693 = vmatpush1.bf16.msra.mxu0 0
        %4694 = vmatprep.subr.bf16.mxu0 0
        %4695 = vmatpush1.bf16.msra.mxu0 0
        %4696 = vmatprep.mubr.bf16.mxu0 0
        %4697 = vmatmul.mubr.bf16.gmra.mrb[0].mxu0 %v4580
        %v4698 = vpop.f32.mrb[0].mxu0
        %v4699 = vadd.f32 %v4358, %v4698
        %v4700 = vpop.f32.mrb[0].mxu0
        %v4701 = vadd.f32 %v4362, %v4700
        %v4702 = vpop.f32.mrb[0].mxu0
        %v4703 = vpop.f32.mrb[0].mxu0
        %4704 = vdwg.mxu0
        %4705 = vmatprep.subr.bf16.mxu0 %v4522
        %4706 = vmatpush1.bf16.msra.mxu0 %v4521
        %4707 = vmatprep.subr.bf16.mxu0 %v4538
        %4708 = vmatpush1.bf16.msra.mxu0 %v4537
        %4709 = vmatprep.subr.bf16.mxu0 0
        %4710 = vmatpush1.bf16.msra.mxu0 0
        %4711 = vmatprep.subr.bf16.mxu0 0
        %4712 = vmatpush1.bf16.msra.mxu0 0
        %4713 = vmatprep.subr.bf16.mxu0 0
        %4714 = vmatpush1.bf16.msra.mxu0 0
        %4715 = vmatprep.subr.bf16.mxu0 0
        %4716 = vmatpush1.bf16.msra.mxu0 0
        %4717 = vmatprep.subr.bf16.mxu0 0
        %4718 = vmatpush1.bf16.msra.mxu0 0
        %4719 = vmatprep.subr.bf16.mxu0 0
        %4720 = vmatpush1.bf16.msra.mxu0 0
        %4721 = vmatprep.subr.bf16.mxu0 0
        %4722 = vmatpush1.bf16.msra.mxu0 0
        %4723 = vmatprep.subr.bf16.mxu0 0
        %4724 = vmatpush1.bf16.msra.mxu0 0
        %4725 = vmatprep.subr.bf16.mxu0 0
        %4726 = vmatpush1.bf16.msra.mxu0 0
        %4727 = vmatprep.subr.bf16.mxu0 0
        %4728 = vmatpush1.bf16.msra.mxu0 0
        %4729 = vmatprep.subr.bf16.mxu0 0
        %4730 = vmatpush1.bf16.msra.mxu0 0
        %4731 = vmatprep.subr.bf16.mxu0 0
        %4732 = vmatpush1.bf16.msra.mxu0 0
        %4733 = vmatprep.subr.bf16.mxu0 0
        %4734 = vmatpush1.bf16.msra.mxu0 0
        %4735 = vmatprep.subr.bf16.mxu0 0
        %4736 = vmatpush1.bf16.msra.mxu0 0
        %4737 = vmatprep.mubr.bf16.mxu0 0
        %4738 = vmatmul.mubr.bf16.gmra.mrb[0].mxu0 %v4580
        %v4739 = vpop.f32.mrb[0].mxu0
        %v4740 = vadd.f32 %v4366, %v4739
        %v4741 = vpop.f32.mrb[0].mxu0
        %v4742 = vadd.f32 %v4370, %v4741
        %v4743 = vpop.f32.mrb[0].mxu0
        %v4744 = vpop.f32.mrb[0].mxu0
        %4745 = vdwg.mxu0
        %4746 = vmatprep.subr.bf16.mxu0 %v4524
        %4747 = vmatpush1.bf16.msra.mxu0 %v4523
        %4748 = vmatprep.subr.bf16.mxu0 %v4540
        %4749 = vmatpush1.bf16.msra.mxu0 %v4539
        %4750 = vmatprep.subr.bf16.mxu0 0
        %4751 = vmatpush1.bf16.msra.mxu0 0
        %4752 = vmatprep.subr.bf16.mxu0 0
        %4753 = vmatpush1.bf16.msra.mxu0 0
        %4754 = vmatprep.subr.bf16.mxu0 0
        %4755 = vmatpush1.bf16.msra.mxu0 0
        %4756 = vmatprep.subr.bf16.mxu0 0
        %4757 = vmatpush1.bf16.msra.mxu0 0
        %4758 = vmatprep.subr.bf16.mxu0 0
        %4759 = vmatpush1.bf16.msra.mxu0 0
        %4760 = vmatprep.subr.bf16.mxu0 0
        %4761 = vmatpush1.bf16.msra.mxu0 0
        %4762 = vmatprep.subr.bf16.mxu0 0
        %4763 = vmatpush1.bf16.msra.mxu0 0
        %4764 = vmatprep.subr.bf16.mxu0 0
        %4765 = vmatpush1.bf16.msra.mxu0 0
        %4766 = vmatprep.subr.bf16.mxu0 0
        %4767 = vmatpush1.bf16.msra.mxu0 0
        %4768 = vmatprep.subr.bf16.mxu0 0
        %4769 = vmatpush1.bf16.msra.mxu0 0
        %4770 = vmatprep.subr.bf16.mxu0 0
        %4771 = vmatpush1.bf16.msra.mxu0 0
        %4772 = vmatprep.subr.bf16.mxu0 0
        %4773 = vmatpush1.bf16.msra.mxu0 0
        %4774 = vmatprep.subr.bf16.mxu0 0
        %4775 = vmatpush1.bf16.msra.mxu0 0
        %4776 = vmatprep.subr.bf16.mxu0 0
        %4777 = vmatpush1.bf16.msra.mxu0 0
        %4778 = vmatprep.mubr.bf16.mxu0 0
        %4779 = vmatmul.mubr.bf16.gmra.mrb[0].mxu0 %v4580
        %v4780 = vpop.f32.mrb[0].mxu0
        %v4781 = vadd.f32 %v4374, %v4780
        %v4782 = vpop.f32.mrb[0].mxu0
        %v4783 = vadd.f32 %v4378, %v4782
        %v4784 = vpop.f32.mrb[0].mxu0
        %v4785 = vpop.f32.mrb[0].mxu0
        %4786 = vdwg.mxu0
        %4787 = vmatprep.subr.bf16.mxu0 %v4526
        %4788 = vmatpush1.bf16.msra.mxu0 %v4525
        %4789 = vmatprep.subr.bf16.mxu0 %v4542
        %4790 = vmatpush1.bf16.msra.mxu0 %v4541
        %4791 = vmatprep.subr.bf16.mxu0 0
        %4792 = vmatpush1.bf16.msra.mxu0 0
        %4793 = vmatprep.subr.bf16.mxu0 0
        %4794 = vmatpush1.bf16.msra.mxu0 0
        %4795 = vmatprep.subr.bf16.mxu0 0
        %4796 = vmatpush1.bf16.msra.mxu0 0
        %4797 = vmatprep.subr.bf16.mxu0 0
        %4798 = vmatpush1.bf16.msra.mxu0 0
        %4799 = vmatprep.subr.bf16.mxu0 0
        %4800 = vmatpush1.bf16.msra.mxu0 0
        %4801 = vmatprep.subr.bf16.mxu0 0
        %4802 = vmatpush1.bf16.msra.mxu0 0
        %4803 = vmatprep.subr.bf16.mxu0 0
        %4804 = vmatpush1.bf16.msra.mxu0 0
        %4805 = vmatprep.subr.bf16.mxu0 0
        %4806 = vmatpush1.bf16.msra.mxu0 0
        %4807 = vmatprep.subr.bf16.mxu0 0
        %4808 = vmatpush1.bf16.msra.mxu0 0
        %4809 = vmatprep.subr.bf16.mxu0 0
        %4810 = vmatpush1.bf16.msra.mxu0 0
        %4811 = vmatprep.subr.bf16.mxu0 0
        %4812 = vmatpush1.bf16.msra.mxu0 0
        %4813 = vmatprep.subr.bf16.mxu0 0
        %4814 = vmatpush1.bf16.msra.mxu0 0
        %4815 = vmatprep.subr.bf16.mxu0 0
        %4816 = vmatpush1.bf16.msra.mxu0 0
        %4817 = vmatprep.subr.bf16.mxu0 0
        %4818 = vmatpush1.bf16.msra.mxu0 0
        %4819 = vmatprep.mubr.bf16.mxu0 0
        %4820 = vmatmul.mubr.bf16.gmra.mrb[0].mxu0 %v4580
        %v4821 = vpop.f32.mrb[0].mxu0
        %v4822 = vadd.f32 %v4382, %v4821
        %v4823 = vpop.f32.mrb[0].mxu0
        %v4824 = vadd.f32 %v4386, %v4823
        %v4825 = vpop.f32.mrb[0].mxu0
        %v4826 = vpop.f32.mrb[0].mxu0
        %4827 = vdwg.mxu0
        %4828 = vmatprep.subr.bf16.mxu0 %v4528
        %4829 = vmatpush1.bf16.msra.mxu0 %v4527
        %4830 = vmatprep.subr.bf16.mxu0 %v4544
        %4831 = vmatpush1.bf16.msra.mxu0 %v4543
        %4832 = vmatprep.subr.bf16.mxu0 0
        %4833 = vmatpush1.bf16.msra.mxu0 0
        %4834 = vmatprep.subr.bf16.mxu0 0
        %4835 = vmatpush1.bf16.msra.mxu0 0
        %4836 = vmatprep.subr.bf16.mxu0 0
        %4837 = vmatpush1.bf16.msra.mxu0 0
        %4838 = vmatprep.subr.bf16.mxu0 0
        %4839 = vmatpush1.bf16.msra.mxu0 0
        %4840 = vmatprep.subr.bf16.mxu0 0
        %4841 = vmatpush1.bf16.msra.mxu0 0
        %4842 = vmatprep.subr.bf16.mxu0 0
        %4843 = vmatpush1.bf16.msra.mxu0 0
        %4844 = vmatprep.subr.bf16.mxu0 0
        %4845 = vmatpush1.bf16.msra.mxu0 0
        %4846 = vmatprep.subr.bf16.mxu0 0
        %4847 = vmatpush1.bf16.msra.mxu0 0
        %4848 = vmatprep.subr.bf16.mxu0 0
        %4849 = vmatpush1.bf16.msra.mxu0 0
        %4850 = vmatprep.subr.bf16.mxu0 0
        %4851 = vmatpush1.bf16.msra.mxu0 0
        %4852 = vmatprep.subr.bf16.mxu0 0
        %4853 = vmatpush1.bf16.msra.mxu0 0
        %4854 = vmatprep.subr.bf16.mxu0 0
        %4855 = vmatpush1.bf16.msra.mxu0 0
        %4856 = vmatprep.subr.bf16.mxu0 0
        %4857 = vmatpush1.bf16.msra.mxu0 0
        %4858 = vmatprep.subr.bf16.mxu0 0
        %4859 = vmatpush1.bf16.msra.mxu0 0
        %4860 = vmatprep.mubr.bf16.mxu0 0
        %4861 = vmatmul.mubr.bf16.gmra.mrb[0].mxu0 %v4580
        %v4862 = vpop.f32.mrb[0].mxu0
        %v4863 = vadd.f32 %v4390, %v4862
        %v4864 = vpop.f32.mrb[0].mxu0
        %v4865 = vadd.f32 %v4394, %v4864
        %v4866 = vpop.f32.mrb[0].mxu0
        %v4867 = vpop.f32.mrb[0].mxu0
        %4868 = vdwg.mxu0
        %4869 = vmatprep.subr.bf16.mxu0 %v4530
        %4870 = vmatpush1.bf16.msra.mxu0 %v4529
        %4871 = vmatprep.subr.bf16.mxu0 %v4546
        %4872 = vmatpush1.bf16.msra.mxu0 %v4545
        %4873 = vmatprep.subr.bf16.mxu0 0
        %4874 = vmatpush1.bf16.msra.mxu0 0
        %4875 = vmatprep.subr.bf16.mxu0 0
        %4876 = vmatpush1.bf16.msra.mxu0 0
        %4877 = vmatprep.subr.bf16.mxu0 0
        %4878 = vmatpush1.bf16.msra.mxu0 0
        %4879 = vmatprep.subr.bf16.mxu0 0
        %4880 = vmatpush1.bf16.msra.mxu0 0
        %4881 = vmatprep.subr.bf16.mxu0 0
        %4882 = vmatpush1.bf16.msra.mxu0 0
        %4883 = vmatprep.subr.bf16.mxu0 0
        %4884 = vmatpush1.bf16.msra.mxu0 0
        %4885 = vmatprep.subr.bf16.mxu0 0
        %4886 = vmatpush1.bf16.msra.mxu0 0
        %4887 = vmatprep.subr.bf16.mxu0 0
        %4888 = vmatpush1.bf16.msra.mxu0 0
        %4889 = vmatprep.subr.bf16.mxu0 0
        %4890 = vmatpush1.bf16.msra.mxu0 0
        %4891 = vmatprep.subr.bf16.mxu0 0
        %4892 = vmatpush1.bf16.msra.mxu0 0
        %4893 = vmatprep.subr.bf16.mxu0 0
        %4894 = vmatpush1.bf16.msra.mxu0 0
        %4895 = vmatprep.subr.bf16.mxu0 0
        %4896 = vmatpush1.bf16.msra.mxu0 0
        %4897 = vmatprep.subr.bf16.mxu0 0
        %4898 = vmatpush1.bf16.msra.mxu0 0
        %4899 = vmatprep.subr.bf16.mxu0 0
        %4900 = vmatpush1.bf16.msra.mxu0 0
        %4901 = vmatprep.mubr.bf16.mxu0 0
        %4902 = vmatmul.mubr.bf16.gmra.mrb[0].mxu0 %v4580
        %v4903 = vpop.f32.mrb[0].mxu0
        %v4904 = vadd.f32 %v4398, %v4903
        %v4905 = vpop.f32.mrb[0].mxu0
        %v4906 = vadd.f32 %v4402, %v4905
        %v4907 = vpop.f32.mrb[0].mxu0
        %v4908 = vpop.f32.mrb[0].mxu0
        %4909 = vdwg.mxu0
        %v4910 = vmax.f32 %v4617, 0.0
        %v4911 = vmax.f32 %v4619, 0.0
        %v4912 = vmax.f32 %v4658, 0.0
        %v4913 = vmax.f32 %v4660, 0.0
        %v4914 = vmax.f32 %v4699, 0.0
        %v4915 = vmax.f32 %v4701, 0.0
        %v4916 = vmax.f32 %v4740, 0.0
        %v4917 = vmax.f32 %v4742, 0.0
        %v4918 = vmax.f32 %v4781, 0.0
        %v4919 = vmax.f32 %v4783, 0.0
        %v4920 = vmax.f32 %v4822, 0.0
        %v4921 = vmax.f32 %v4824, 0.0
        %v4922 = vmax.f32 %v4863, 0.0
        %v4923 = vmax.f32 %v4865, 0.0
        %v4924 = vmax.f32 %v4904, 0.0
        %v4925 = vmax.f32 %v4906, 0.0
        %v4926 = vpack.c.bf16 %v4910, %v4910
        %v4927 = vpack.c.bf16 %v4911, %v4911
        %v4928 = vpack.c.bf16 %v4912, %v4912
        %v4929 = vpack.c.bf16 %v4913, %v4913
        %v4930 = vpack.c.bf16 %v4914, %v4914
        %v4931 = vpack.c.bf16 %v4915, %v4915
        %v4932 = vpack.c.bf16 %v4916, %v4916
        %v4933 = vpack.c.bf16 %v4917, %v4917
        %v4934 = vpack.c.bf16 %v4918, %v4918
        %v4935 = vpack.c.bf16 %v4919, %v4919
        %v4936 = vpack.c.bf16 %v4920, %v4920
        %v4937 = vpack.c.bf16 %v4921, %v4921
        %v4938 = vpack.c.bf16 %v4922, %v4922
        %v4939 = vpack.c.bf16 %v4923, %v4923
        %v4940 = vpack.c.bf16 %v4924, %v4924
        %v4941 = vpack.c.bf16 %v4925, %v4925
        %v4942 = vld [vmem:[%s23] sm:$0xf]
        %v4943 = vld [vmem:[%s23 + $0x4] sm:$0xf]
        %v4944 = vld [vmem:[%s23 + $0x8] sm:$0xf]
        %v4945 = vld [vmem:[%s23 + $0xc] sm:$0xf]
        %v4946 = vld [vmem:[%s23 + $0x10] sm:$0xf]
        %v4947 = vld [vmem:[%s23 + $0x14] sm:$0xf]
        %v4948 = vld [vmem:[%s23 + $0x18] sm:$0xf]
        %v4949 = vld [vmem:[%s23 + $0x1c] sm:$0xf]
        %v4950 = vld [vmem:[%s23 + $0x20] sm:$0xf]
        %v4951 = vld [vmem:[%s23 + $0x24] sm:$0xf]
        %v4952 = vld [vmem:[%s23 + $0x28] sm:$0xf]
        %v4953 = vld [vmem:[%s23 + $0x2c] sm:$0xf]
        %v4954 = vld [vmem:[%s23 + $0x30] sm:$0xf]
        %v4955 = vld [vmem:[%s23 + $0x34] sm:$0xf]
        %v4956 = vld [vmem:[%s23 + $0x38] sm:$0xf]
        %v4957 = vld [vmem:[%s23 + $0x3c] sm:$0xf]
        %v4958 = vld [vmem:[%s23 + $0x40] sm:$0xf]
        %v4959 = vld [vmem:[%s23 + $0x44] sm:$0xf]
        %v4960 = vld [vmem:[%s23 + $0x48] sm:$0xf]
        %v4961 = vld [vmem:[%s23 + $0x4c] sm:$0xf]
        %v4962 = vld [vmem:[%s23 + $0x50] sm:$0xf]
        %v4963 = vld [vmem:[%s23 + $0x54] sm:$0xf]
        %v4964 = vld [vmem:[%s23 + $0x58] sm:$0xf]
        %v4965 = vld [vmem:[%s23 + $0x5c] sm:$0xf]
        %v4966 = vld [vmem:[%s23 + $0x60] sm:$0xf]
        %v4967 = vld [vmem:[%s23 + $0x64] sm:$0xf]
        %v4968 = vld [vmem:[%s23 + $0x68] sm:$0xf]
        %v4969 = vld [vmem:[%s23 + $0x6c] sm:$0xf]
        %v4970 = vld [vmem:[%s23 + $0x70] sm:$0xf]
        %v4971 = vld [vmem:[%s23 + $0x74] sm:$0xf]
        %v4972 = vld [vmem:[%s23 + $0x78] sm:$0xf]
        %v4973 = vld [vmem:[%s23 + $0x7c] sm:$0xf]
        %v4974 = vld [vmem:[%s23 + $0x80] sm:$0xf]
        %v4975 = vld [vmem:[%s23 + $0x84] sm:$0xf]
        %v4976 = vld [vmem:[%s23 + $0x88] sm:$0xf]
        %v4977 = vld [vmem:[%s23 + $0x8c] sm:$0xf]
        %v4978 = vld [vmem:[%s23 + $0x90] sm:$0xf]
        %v4979 = vld [vmem:[%s23 + $0x94] sm:$0xf]
        %v4980 = vld [vmem:[%s23 + $0x98] sm:$0xf]
        %v4981 = vld [vmem:[%s23 + $0x9c] sm:$0xf]
        %v4982 = vld [vmem:[%s23 + $0xa0] sm:$0xf]
        %v4983 = vld [vmem:[%s23 + $0xa4] sm:$0xf]
        %v4984 = vld [vmem:[%s23 + $0xa8] sm:$0xf]
        %v4985 = vld [vmem:[%s23 + $0xac] sm:$0xf]
        %v4986 = vld [vmem:[%s23 + $0xb0] sm:$0xf]
        %v4987 = vld [vmem:[%s23 + $0xb4] sm:$0xf]
        %v4988 = vld [vmem:[%s23 + $0xb8] sm:$0xf]
        %v4989 = vld [vmem:[%s23 + $0xbc] sm:$0xf]
        %v4990 = vld [vmem:[%s23 + $0xc0] sm:$0xf]
        %v4991 = vld [vmem:[%s23 + $0xc4] sm:$0xf]
        %v4992 = vld [vmem:[%s23 + $0xc8] sm:$0xf]
        %v4993 = vld [vmem:[%s23 + $0xcc] sm:$0xf]
        %v4994 = vld [vmem:[%s23 + $0xd0] sm:$0xf]
        %v4995 = vld [vmem:[%s23 + $0xd4] sm:$0xf]
        %v4996 = vld [vmem:[%s23 + $0xd8] sm:$0xf]
        %v4997 = vld [vmem:[%s23 + $0xdc] sm:$0xf]
        %v4998 = vld [vmem:[%s23 + $0xe0] sm:$0xf]
        %v4999 = vld [vmem:[%s23 + $0xe4] sm:$0xf]
        %v5000 = vld [vmem:[%s23 + $0xe8] sm:$0xf]
        %v5001 = vld [vmem:[%s23 + $0xec] sm:$0xf]
        %v5002 = vld [vmem:[%s23 + $0xf0] sm:$0xf]
        %v5003 = vld [vmem:[%s23 + $0xf4] sm:$0xf]
        %v5004 = vld [vmem:[%s23 + $0xf8] sm:$0xf]
        %v5005 = vld [vmem:[%s23 + $0xfc] sm:$0xf]
        %v5006 = vld [vmem:[%s23 + $0x100] sm:$0xf]
        %v5007 = vld [vmem:[%s23 + $0x104] sm:$0xf]
        %v5008 = vld [vmem:[%s23 + $0x108] sm:$0xf]
        %v5009 = vld [vmem:[%s23 + $0x10c] sm:$0xf]
        %v5010 = vld [vmem:[%s23 + $0x110] sm:$0xf]
        %v5011 = vld [vmem:[%s23 + $0x114] sm:$0xf]
        %v5012 = vld [vmem:[%s23 + $0x118] sm:$0xf]
        %v5013 = vld [vmem:[%s23 + $0x11c] sm:$0xf]
        %v5014 = vld [vmem:[%s23 + $0x120] sm:$0xf]
        %v5015 = vld [vmem:[%s23 + $0x124] sm:$0xf]
        %v5016 = vld [vmem:[%s23 + $0x128] sm:$0xf]
        %v5017 = vld [vmem:[%s23 + $0x12c] sm:$0xf]
        %v5018 = vld [vmem:[%s23 + $0x130] sm:$0xf]
        %v5019 = vld [vmem:[%s23 + $0x134] sm:$0xf]
        %v5020 = vld [vmem:[%s23 + $0x138] sm:$0xf]
        %v5021 = vld [vmem:[%s23 + $0x13c] sm:$0xf]
        %v5022 = vld [vmem:[%s23 + $0x140] sm:$0xf]
        %v5023 = vld [vmem:[%s23 + $0x144] sm:$0xf]
        %v5024 = vld [vmem:[%s23 + $0x148] sm:$0xf]
        %v5025 = vld [vmem:[%s23 + $0x14c] sm:$0xf]
        %v5026 = vld [vmem:[%s23 + $0x150] sm:$0xf]
        %v5027 = vld [vmem:[%s23 + $0x154] sm:$0xf]
        %v5028 = vld [vmem:[%s23 + $0x158] sm:$0xf]
        %v5029 = vld [vmem:[%s23 + $0x15c] sm:$0xf]
        %v5030 = vld [vmem:[%s23 + $0x160] sm:$0xf]
        %v5031 = vld [vmem:[%s23 + $0x164] sm:$0xf]
        %v5032 = vld [vmem:[%s23 + $0x168] sm:$0xf]
        %v5033 = vld [vmem:[%s23 + $0x16c] sm:$0xf]
        %v5034 = vld [vmem:[%s23 + $0x170] sm:$0xf]
        %v5035 = vld [vmem:[%s23 + $0x174] sm:$0xf]
        %v5036 = vld [vmem:[%s23 + $0x178] sm:$0xf]
        %v5037 = vld [vmem:[%s23 + $0x17c] sm:$0xf]
        %v5038 = vld [vmem:[%s23 + $0x180] sm:$0xf]
        %v5039 = vld [vmem:[%s23 + $0x184] sm:$0xf]
        %v5040 = vld [vmem:[%s23 + $0x188] sm:$0xf]
        %v5041 = vld [vmem:[%s23 + $0x18c] sm:$0xf]
        %v5042 = vld [vmem:[%s23 + $0x190] sm:$0xf]
        %v5043 = vld [vmem:[%s23 + $0x194] sm:$0xf]
        %v5044 = vld [vmem:[%s23 + $0x198] sm:$0xf]
        %v5045 = vld [vmem:[%s23 + $0x19c] sm:$0xf]
        %v5046 = vld [vmem:[%s23 + $0x1a0] sm:$0xf]
        %v5047 = vld [vmem:[%s23 + $0x1a4] sm:$0xf]
        %v5048 = vld [vmem:[%s23 + $0x1a8] sm:$0xf]
        %v5049 = vld [vmem:[%s23 + $0x1ac] sm:$0xf]
        %v5050 = vld [vmem:[%s23 + $0x1b0] sm:$0xf]
        %v5051 = vld [vmem:[%s23 + $0x1b4] sm:$0xf]
        %v5052 = vld [vmem:[%s23 + $0x1b8] sm:$0xf]
        %v5053 = vld [vmem:[%s23 + $0x1bc] sm:$0xf]
        %v5054 = vld [vmem:[%s23 + $0x1c0] sm:$0xf]
        %v5055 = vld [vmem:[%s23 + $0x1c4] sm:$0xf]
        %v5056 = vld [vmem:[%s23 + $0x1c8] sm:$0xf]
        %v5057 = vld [vmem:[%s23 + $0x1cc] sm:$0xf]
        %v5058 = vld [vmem:[%s23 + $0x1d0] sm:$0xf]
        %v5059 = vld [vmem:[%s23 + $0x1d4] sm:$0xf]
        %v5060 = vld [vmem:[%s23 + $0x1d8] sm:$0xf]
        %v5061 = vld [vmem:[%s23 + $0x1dc] sm:$0xf]
        %v5062 = vld [vmem:[%s23 + $0x1e0] sm:$0xf]
        %v5063 = vld [vmem:[%s23 + $0x1e4] sm:$0xf]
        %v5064 = vld [vmem:[%s23 + $0x1e8] sm:$0xf]
        %v5065 = vld [vmem:[%s23 + $0x1ec] sm:$0xf]
        %v5066 = vld [vmem:[%s23 + $0x1f0] sm:$0xf]
        %v5067 = vld [vmem:[%s23 + $0x1f4] sm:$0xf]
        %v5068 = vld [vmem:[%s23 + $0x1f8] sm:$0xf]
        %v5069 = vld [vmem:[%s23 + $0x1fc] sm:$0xf]
        %v5070 = vld [vmem:[%s23 + $0x200] sm:$0xf]
        %v5071 = vld [vmem:[%s23 + $0x204] sm:$0xf]
        %v5072 = vld [vmem:[%s23 + $0x208] sm:$0xf]
        %v5073 = vld [vmem:[%s23 + $0x20c] sm:$0xf]
        %v5074 = vld [vmem:[%s23 + $0x210] sm:$0xf]
        %v5075 = vld [vmem:[%s23 + $0x214] sm:$0xf]
        %v5076 = vld [vmem:[%s23 + $0x218] sm:$0xf]
        %v5077 = vld [vmem:[%s23 + $0x21c] sm:$0xf]
        %v5078 = vld [vmem:[%s23 + $0x220] sm:$0xf]
        %v5079 = vld [vmem:[%s23 + $0x224] sm:$0xf]
        %v5080 = vld [vmem:[%s23 + $0x228] sm:$0xf]
        %v5081 = vld [vmem:[%s23 + $0x22c] sm:$0xf]
        %v5082 = vld [vmem:[%s23 + $0x230] sm:$0xf]
        %v5083 = vld [vmem:[%s23 + $0x234] sm:$0xf]
        %v5084 = vld [vmem:[%s23 + $0x238] sm:$0xf]
        %v5085 = vld [vmem:[%s23 + $0x23c] sm:$0xf]
        %v5086 = vld [vmem:[%s23 + $0x240] sm:$0xf]
        %v5087 = vld [vmem:[%s23 + $0x244] sm:$0xf]
        %v5088 = vld [vmem:[%s23 + $0x248] sm:$0xf]
        %v5089 = vld [vmem:[%s23 + $0x24c] sm:$0xf]
        %v5090 = vld [vmem:[%s23 + $0x250] sm:$0xf]
        %v5091 = vld [vmem:[%s23 + $0x254] sm:$0xf]
        %v5092 = vld [vmem:[%s23 + $0x258] sm:$0xf]
        %v5093 = vld [vmem:[%s23 + $0x25c] sm:$0xf]
        %v5094 = vld [vmem:[%s23 + $0x260] sm:$0xf]
        %v5095 = vld [vmem:[%s23 + $0x264] sm:$0xf]
        %v5096 = vld [vmem:[%s23 + $0x268] sm:$0xf]
        %v5097 = vld [vmem:[%s23 + $0x26c] sm:$0xf]
        %v5098 = vld [vmem:[%s23 + $0x270] sm:$0xf]
        %v5099 = vld [vmem:[%s23 + $0x274] sm:$0xf]
        %v5100 = vld [vmem:[%s23 + $0x278] sm:$0xf]
        %v5101 = vld [vmem:[%s23 + $0x27c] sm:$0xf]
        %v5102 = vld [vmem:[%s23 + $0x280] sm:$0xf]
        %v5103 = vld [vmem:[%s23 + $0x284] sm:$0xf]
        %v5104 = vld [vmem:[%s23 + $0x288] sm:$0xf]
        %v5105 = vld [vmem:[%s23 + $0x28c] sm:$0xf]
        %v5106 = vld [vmem:[%s23 + $0x290] sm:$0xf]
        %v5107 = vld [vmem:[%s23 + $0x294] sm:$0xf]
        %v5108 = vld [vmem:[%s23 + $0x298] sm:$0xf]
        %v5109 = vld [vmem:[%s23 + $0x29c] sm:$0xf]
        %v5110 = vld [vmem:[%s23 + $0x2a0] sm:$0xf]
        %v5111 = vld [vmem:[%s23 + $0x2a4] sm:$0xf]
        %v5112 = vld [vmem:[%s23 + $0x2a8] sm:$0xf]
        %v5113 = vld [vmem:[%s23 + $0x2ac] sm:$0xf]
        %v5114 = vld [vmem:[%s23 + $0x2b0] sm:$0xf]
        %v5115 = vld [vmem:[%s23 + $0x2b4] sm:$0xf]
        %v5116 = vld [vmem:[%s23 + $0x2b8] sm:$0xf]
        %v5117 = vld [vmem:[%s23 + $0x2bc] sm:$0xf]
        %v5118 = vld [vmem:[%s23 + $0x2c0] sm:$0xf]
        %v5119 = vld [vmem:[%s23 + $0x2c4] sm:$0xf]
        %v5120 = vld [vmem:[%s23 + $0x2c8] sm:$0xf]
        %v5121 = vld [vmem:[%s23 + $0x2cc] sm:$0xf]
        %v5122 = vld [vmem:[%s23 + $0x2d0] sm:$0xf]
        %v5123 = vld [vmem:[%s23 + $0x2d4] sm:$0xf]
        %v5124 = vld [vmem:[%s23 + $0x2d8] sm:$0xf]
        %v5125 = vld [vmem:[%s23 + $0x2dc] sm:$0xf]
        %v5126 = vld [vmem:[%s23 + $0x2e0] sm:$0xf]
        %v5127 = vld [vmem:[%s23 + $0x2e4] sm:$0xf]
        %v5128 = vld [vmem:[%s23 + $0x2e8] sm:$0xf]
        %v5129 = vld [vmem:[%s23 + $0x2ec] sm:$0xf]
        %v5130 = vld [vmem:[%s23 + $0x2f0] sm:$0xf]
        %v5131 = vld [vmem:[%s23 + $0x2f4] sm:$0xf]
        %v5132 = vld [vmem:[%s23 + $0x2f8] sm:$0xf]
        %v5133 = vld [vmem:[%s23 + $0x2fc] sm:$0xf]
        %v5134 = vld [vmem:[%s23 + $0x300] sm:$0xf]
        %v5135 = vld [vmem:[%s23 + $0x304] sm:$0xf]
        %v5136 = vld [vmem:[%s23 + $0x308] sm:$0xf]
        %v5137 = vld [vmem:[%s23 + $0x30c] sm:$0xf]
        %v5138 = vld [vmem:[%s23 + $0x310] sm:$0xf]
        %v5139 = vld [vmem:[%s23 + $0x314] sm:$0xf]
        %v5140 = vld [vmem:[%s23 + $0x318] sm:$0xf]
        %v5141 = vld [vmem:[%s23 + $0x31c] sm:$0xf]
        %v5142 = vld [vmem:[%s23 + $0x320] sm:$0xf]
        %v5143 = vld [vmem:[%s23 + $0x324] sm:$0xf]
        %v5144 = vld [vmem:[%s23 + $0x328] sm:$0xf]
        %v5145 = vld [vmem:[%s23 + $0x32c] sm:$0xf]
        %v5146 = vld [vmem:[%s23 + $0x330] sm:$0xf]
        %v5147 = vld [vmem:[%s23 + $0x334] sm:$0xf]
        %v5148 = vld [vmem:[%s23 + $0x338] sm:$0xf]
        %v5149 = vld [vmem:[%s23 + $0x33c] sm:$0xf]
        %v5150 = vld [vmem:[%s23 + $0x340] sm:$0xf]
        %v5151 = vld [vmem:[%s23 + $0x344] sm:$0xf]
        %v5152 = vld [vmem:[%s23 + $0x348] sm:$0xf]
        %v5153 = vld [vmem:[%s23 + $0x34c] sm:$0xf]
        %v5154 = vld [vmem:[%s23 + $0x350] sm:$0xf]
        %v5155 = vld [vmem:[%s23 + $0x354] sm:$0xf]
        %v5156 = vld [vmem:[%s23 + $0x358] sm:$0xf]
        %v5157 = vld [vmem:[%s23 + $0x35c] sm:$0xf]
        %v5158 = vld [vmem:[%s23 + $0x360] sm:$0xf]
        %v5159 = vld [vmem:[%s23 + $0x364] sm:$0xf]
        %v5160 = vld [vmem:[%s23 + $0x368] sm:$0xf]
        %v5161 = vld [vmem:[%s23 + $0x36c] sm:$0xf]
        %v5162 = vld [vmem:[%s23 + $0x370] sm:$0xf]
        %v5163 = vld [vmem:[%s23 + $0x374] sm:$0xf]
        %v5164 = vld [vmem:[%s23 + $0x378] sm:$0xf]
        %v5165 = vld [vmem:[%s23 + $0x37c] sm:$0xf]
        %v5166 = vld [vmem:[%s23 + $0x380] sm:$0xf]
        %v5167 = vld [vmem:[%s23 + $0x384] sm:$0xf]
        %v5168 = vld [vmem:[%s23 + $0x388] sm:$0xf]
        %v5169 = vld [vmem:[%s23 + $0x38c] sm:$0xf]
        %v5170 = vld [vmem:[%s23 + $0x390] sm:$0xf]
        %v5171 = vld [vmem:[%s23 + $0x394] sm:$0xf]
        %v5172 = vld [vmem:[%s23 + $0x398] sm:$0xf]
        %v5173 = vld [vmem:[%s23 + $0x39c] sm:$0xf]
        %v5174 = vld [vmem:[%s23 + $0x3a0] sm:$0xf]
        %v5175 = vld [vmem:[%s23 + $0x3a4] sm:$0xf]
        %v5176 = vld [vmem:[%s23 + $0x3a8] sm:$0xf]
        %v5177 = vld [vmem:[%s23 + $0x3ac] sm:$0xf]
        %v5178 = vld [vmem:[%s23 + $0x3b0] sm:$0xf]
        %v5179 = vld [vmem:[%s23 + $0x3b4] sm:$0xf]
        %v5180 = vld [vmem:[%s23 + $0x3b8] sm:$0xf]
        %v5181 = vld [vmem:[%s23 + $0x3bc] sm:$0xf]
        %v5182 = vld [vmem:[%s23 + $0x3c0] sm:$0xf]
        %v5183 = vld [vmem:[%s23 + $0x3c4] sm:$0xf]
        %v5184 = vld [vmem:[%s23 + $0x3c8] sm:$0xf]
        %v5185 = vld [vmem:[%s23 + $0x3cc] sm:$0xf]
        %v5186 = vld [vmem:[%s23 + $0x3d0] sm:$0xf]
        %v5187 = vld [vmem:[%s23 + $0x3d4] sm:$0xf]
        %v5188 = vld [vmem:[%s23 + $0x3d8] sm:$0xf]
        %v5189 = vld [vmem:[%s23 + $0x3dc] sm:$0xf]
        %v5190 = vld [vmem:[%s23 + $0x3e0] sm:$0xf]
        %v5191 = vld [vmem:[%s23 + $0x3e4] sm:$0xf]
        %v5192 = vld [vmem:[%s23 + $0x3e8] sm:$0xf]
        %v5193 = vld [vmem:[%s23 + $0x3ec] sm:$0xf]
        %v5194 = vld [vmem:[%s23 + $0x3f0] sm:$0xf]
        %v5195 = vld [vmem:[%s23 + $0x3f4] sm:$0xf]
        %v5196 = vld [vmem:[%s23 + $0x3f8] sm:$0xf]
        %v5197 = vld [vmem:[%s23 + $0x3fc] sm:$0xf]
        %v5198 = vld [vmem:[%s24] sm:$0x1]
        %v5200 = vlaneseq
        %v5201 = vshrl.u32 %v5200, 7
        %v5202 = vsub.s32 0, %v5201
        %v5203 = vrot.slane %v5198, %v5202
        %v5461 = vunpack.c.l.b16 %v4942
        %v5462 = vunpack.c.l.b16 %v4943
        %v5463 = vunpack.c.l.b16 %v4944
        %v5464 = vunpack.c.l.b16 %v4945
        %v5465 = vunpack.c.l.b16 %v4946
        %v5466 = vunpack.c.l.b16 %v4947
        %v5467 = vunpack.c.l.b16 %v4948
        %v5468 = vunpack.c.l.b16 %v4949
        %v5469 = vunpack.c.l.b16 %v4950
        %v5470 = vunpack.c.l.b16 %v4951
        %v5471 = vunpack.c.l.b16 %v4952
        %v5472 = vunpack.c.l.b16 %v4953
        %v5473 = vunpack.c.l.b16 %v4954
        %v5474 = vunpack.c.l.b16 %v4955
        %v5475 = vunpack.c.l.b16 %v4956
        %v5476 = vunpack.c.l.b16 %v4957
        %v5477 = vunpack.c.l.b16 %v4958
        %v5478 = vunpack.c.l.b16 %v4959
        %v5479 = vunpack.c.l.b16 %v4960
        %v5480 = vunpack.c.l.b16 %v4961
        %v5481 = vunpack.c.l.b16 %v4962
        %v5482 = vunpack.c.l.b16 %v4963
        %v5483 = vunpack.c.l.b16 %v4964
        %v5484 = vunpack.c.l.b16 %v4965
        %v5485 = vunpack.c.l.b16 %v4966
        %v5486 = vunpack.c.l.b16 %v4967
        %v5487 = vunpack.c.l.b16 %v4968
        %v5488 = vunpack.c.l.b16 %v4969
        %v5489 = vunpack.c.l.b16 %v4970
        %v5490 = vunpack.c.l.b16 %v4971
        %v5491 = vunpack.c.l.b16 %v4972
        %v5492 = vunpack.c.l.b16 %v4973
        %v5493 = vunpack.c.l.b16 %v4974
        %v5494 = vunpack.c.l.b16 %v4975
        %v5495 = vunpack.c.l.b16 %v4976
        %v5496 = vunpack.c.l.b16 %v4977
        %v5497 = vunpack.c.l.b16 %v4978
        %v5498 = vunpack.c.l.b16 %v4979
        %v5499 = vunpack.c.l.b16 %v4980
        %v5500 = vunpack.c.l.b16 %v4981
        %v5501 = vunpack.c.l.b16 %v4982
        %v5502 = vunpack.c.l.b16 %v4983
        %v5503 = vunpack.c.l.b16 %v4984
        %v5504 = vunpack.c.l.b16 %v4985
        %v5505 = vunpack.c.l.b16 %v4986
        %v5506 = vunpack.c.l.b16 %v4987
        %v5507 = vunpack.c.l.b16 %v4988
        %v5508 = vunpack.c.l.b16 %v4989
        %v5509 = vunpack.c.l.b16 %v4990
        %v5510 = vunpack.c.l.b16 %v4991
        %v5511 = vunpack.c.l.b16 %v4992
        %v5512 = vunpack.c.l.b16 %v4993
        %v5513 = vunpack.c.l.b16 %v4994
        %v5514 = vunpack.c.l.b16 %v4995
        %v5515 = vunpack.c.l.b16 %v4996
        %v5516 = vunpack.c.l.b16 %v4997
        %v5517 = vunpack.c.l.b16 %v4998
        %v5518 = vunpack.c.l.b16 %v4999
        %v5519 = vunpack.c.l.b16 %v5000
        %v5520 = vunpack.c.l.b16 %v5001
        %v5521 = vunpack.c.l.b16 %v5002
        %v5522 = vunpack.c.l.b16 %v5003
        %v5523 = vunpack.c.l.b16 %v5004
        %v5524 = vunpack.c.l.b16 %v5005
        %v5525 = vunpack.c.l.b16 %v5006
        %v5526 = vunpack.c.l.b16 %v5007
        %v5527 = vunpack.c.l.b16 %v5008
        %v5528 = vunpack.c.l.b16 %v5009
        %v5529 = vunpack.c.l.b16 %v5010
        %v5530 = vunpack.c.l.b16 %v5011
        %v5531 = vunpack.c.l.b16 %v5012
        %v5532 = vunpack.c.l.b16 %v5013
        %v5533 = vunpack.c.l.b16 %v5014
        %v5534 = vunpack.c.l.b16 %v5015
        %v5535 = vunpack.c.l.b16 %v5016
        %v5536 = vunpack.c.l.b16 %v5017
        %v5537 = vunpack.c.l.b16 %v5018
        %v5538 = vunpack.c.l.b16 %v5019
        %v5539 = vunpack.c.l.b16 %v5020
        %v5540 = vunpack.c.l.b16 %v5021
        %v5541 = vunpack.c.l.b16 %v5022
        %v5542 = vunpack.c.l.b16 %v5023
        %v5543 = vunpack.c.l.b16 %v5024
        %v5544 = vunpack.c.l.b16 %v5025
        %v5545 = vunpack.c.l.b16 %v5026
        %v5546 = vunpack.c.l.b16 %v5027
        %v5547 = vunpack.c.l.b16 %v5028
        %v5548 = vunpack.c.l.b16 %v5029
        %v5549 = vunpack.c.l.b16 %v5030
        %v5550 = vunpack.c.l.b16 %v5031
        %v5551 = vunpack.c.l.b16 %v5032
        %v5552 = vunpack.c.l.b16 %v5033
        %v5553 = vunpack.c.l.b16 %v5034
        %v5554 = vunpack.c.l.b16 %v5035
        %v5555 = vunpack.c.l.b16 %v5036
        %v5556 = vunpack.c.l.b16 %v5037
        %v5557 = vunpack.c.l.b16 %v5038
        %v5558 = vunpack.c.l.b16 %v5039
        %v5559 = vunpack.c.l.b16 %v5040
        %v5560 = vunpack.c.l.b16 %v5041
        %v5561 = vunpack.c.l.b16 %v5042
        %v5562 = vunpack.c.l.b16 %v5043
        %v5563 = vunpack.c.l.b16 %v5044
        %v5564 = vunpack.c.l.b16 %v5045
        %v5565 = vunpack.c.l.b16 %v5046
        %v5566 = vunpack.c.l.b16 %v5047
        %v5567 = vunpack.c.l.b16 %v5048
        %v5568 = vunpack.c.l.b16 %v5049
        %v5569 = vunpack.c.l.b16 %v5050
        %v5570 = vunpack.c.l.b16 %v5051
        %v5571 = vunpack.c.l.b16 %v5052
        %v5572 = vunpack.c.l.b16 %v5053
        %v5573 = vunpack.c.l.b16 %v5054
        %v5574 = vunpack.c.l.b16 %v5055
        %v5575 = vunpack.c.l.b16 %v5056
        %v5576 = vunpack.c.l.b16 %v5057
        %v5577 = vunpack.c.l.b16 %v5058
        %v5578 = vunpack.c.l.b16 %v5059
        %v5579 = vunpack.c.l.b16 %v5060
        %v5580 = vunpack.c.l.b16 %v5061
        %v5581 = vunpack.c.l.b16 %v5062
        %v5582 = vunpack.c.l.b16 %v5063
        %v5583 = vunpack.c.l.b16 %v5064
        %v5584 = vunpack.c.l.b16 %v5065
        %v5585 = vunpack.c.l.b16 %v5066
        %v5586 = vunpack.c.l.b16 %v5067
        %v5587 = vunpack.c.l.b16 %v5068
        %v5588 = vunpack.c.l.b16 %v5069
        %v5589 = vunpack.c.l.b16 %v5070
        %v5590 = vunpack.c.l.b16 %v5071
        %v5591 = vunpack.c.l.b16 %v5072
        %v5592 = vunpack.c.l.b16 %v5073
        %v5593 = vunpack.c.l.b16 %v5074
        %v5594 = vunpack.c.l.b16 %v5075
        %v5595 = vunpack.c.l.b16 %v5076
        %v5596 = vunpack.c.l.b16 %v5077
        %v5597 = vunpack.c.l.b16 %v5078
        %v5598 = vunpack.c.l.b16 %v5079
        %v5599 = vunpack.c.l.b16 %v5080
        %v5600 = vunpack.c.l.b16 %v5081
        %v5601 = vunpack.c.l.b16 %v5082
        %v5602 = vunpack.c.l.b16 %v5083
        %v5603 = vunpack.c.l.b16 %v5084
        %v5604 = vunpack.c.l.b16 %v5085
        %v5605 = vunpack.c.l.b16 %v5086
        %v5606 = vunpack.c.l.b16 %v5087
        %v5607 = vunpack.c.l.b16 %v5088
        %v5608 = vunpack.c.l.b16 %v5089
        %v5609 = vunpack.c.l.b16 %v5090
        %v5610 = vunpack.c.l.b16 %v5091
        %v5611 = vunpack.c.l.b16 %v5092
        %v5612 = vunpack.c.l.b16 %v5093
        %v5613 = vunpack.c.l.b16 %v5094
        %v5614 = vunpack.c.l.b16 %v5095
        %v5615 = vunpack.c.l.b16 %v5096
        %v5616 = vunpack.c.l.b16 %v5097
        %v5617 = vunpack.c.l.b16 %v5098
        %v5618 = vunpack.c.l.b16 %v5099
        %v5619 = vunpack.c.l.b16 %v5100
        %v5620 = vunpack.c.l.b16 %v5101
        %v5621 = vunpack.c.l.b16 %v5102
        %v5622 = vunpack.c.l.b16 %v5103
        %v5623 = vunpack.c.l.b16 %v5104
        %v5624 = vunpack.c.l.b16 %v5105
        %v5625 = vunpack.c.l.b16 %v5106
        %v5626 = vunpack.c.l.b16 %v5107
        %v5627 = vunpack.c.l.b16 %v5108
        %v5628 = vunpack.c.l.b16 %v5109
        %v5629 = vunpack.c.l.b16 %v5110
        %v5630 = vunpack.c.l.b16 %v5111
        %v5631 = vunpack.c.l.b16 %v5112
        %v5632 = vunpack.c.l.b16 %v5113
        %v5633 = vunpack.c.l.b16 %v5114
        %v5634 = vunpack.c.l.b16 %v5115
        %v5635 = vunpack.c.l.b16 %v5116
        %v5636 = vunpack.c.l.b16 %v5117
        %v5637 = vunpack.c.l.b16 %v5118
        %v5638 = vunpack.c.l.b16 %v5119
        %v5639 = vunpack.c.l.b16 %v5120
        %v5640 = vunpack.c.l.b16 %v5121
        %v5641 = vunpack.c.l.b16 %v5122
        %v5642 = vunpack.c.l.b16 %v5123
        %v5643 = vunpack.c.l.b16 %v5124
        %v5644 = vunpack.c.l.b16 %v5125
        %v5645 = vunpack.c.l.b16 %v5126
        %v5646 = vunpack.c.l.b16 %v5127
        %v5647 = vunpack.c.l.b16 %v5128
        %v5648 = vunpack.c.l.b16 %v5129
        %v5649 = vunpack.c.l.b16 %v5130
        %v5650 = vunpack.c.l.b16 %v5131
        %v5651 = vunpack.c.l.b16 %v5132
        %v5652 = vunpack.c.l.b16 %v5133
        %v5653 = vunpack.c.l.b16 %v5134
        %v5654 = vunpack.c.l.b16 %v5135
        %v5655 = vunpack.c.l.b16 %v5136
        %v5656 = vunpack.c.l.b16 %v5137
        %v5657 = vunpack.c.l.b16 %v5138
        %v5658 = vunpack.c.l.b16 %v5139
        %v5659 = vunpack.c.l.b16 %v5140
        %v5660 = vunpack.c.l.b16 %v5141
        %v5661 = vunpack.c.l.b16 %v5142
        %v5662 = vunpack.c.l.b16 %v5143
        %v5663 = vunpack.c.l.b16 %v5144
        %v5664 = vunpack.c.l.b16 %v5145
        %v5665 = vunpack.c.l.b16 %v5146
        %v5666 = vunpack.c.l.b16 %v5147
        %v5667 = vunpack.c.l.b16 %v5148
        %v5668 = vunpack.c.l.b16 %v5149
        %v5669 = vunpack.c.l.b16 %v5150
        %v5670 = vunpack.c.l.b16 %v5151
        %v5671 = vunpack.c.l.b16 %v5152
        %v5672 = vunpack.c.l.b16 %v5153
        %v5673 = vunpack.c.l.b16 %v5154
        %v5674 = vunpack.c.l.b16 %v5155
        %v5675 = vunpack.c.l.b16 %v5156
        %v5676 = vunpack.c.l.b16 %v5157
        %v5677 = vunpack.c.l.b16 %v5158
        %v5678 = vunpack.c.l.b16 %v5159
        %v5679 = vunpack.c.l.b16 %v5160
        %v5680 = vunpack.c.l.b16 %v5161
        %v5681 = vunpack.c.l.b16 %v5162
        %v5682 = vunpack.c.l.b16 %v5163
        %v5683 = vunpack.c.l.b16 %v5164
        %v5684 = vunpack.c.l.b16 %v5165
        %v5685 = vunpack.c.l.b16 %v5166
        %v5686 = vunpack.c.l.b16 %v5167
        %v5687 = vunpack.c.l.b16 %v5168
        %v5688 = vunpack.c.l.b16 %v5169
        %v5689 = vunpack.c.l.b16 %v5170
        %v5690 = vunpack.c.l.b16 %v5171
        %v5691 = vunpack.c.l.b16 %v5172
        %v5692 = vunpack.c.l.b16 %v5173
        %v5693 = vunpack.c.l.b16 %v5174
        %v5694 = vunpack.c.l.b16 %v5175
        %v5695 = vunpack.c.l.b16 %v5176
        %v5696 = vunpack.c.l.b16 %v5177
        %v5697 = vunpack.c.l.b16 %v5178
        %v5698 = vunpack.c.l.b16 %v5179
        %v5699 = vunpack.c.l.b16 %v5180
        %v5700 = vunpack.c.l.b16 %v5181
        %v5701 = vunpack.c.l.b16 %v5182
        %v5702 = vunpack.c.l.b16 %v5183
        %v5703 = vunpack.c.l.b16 %v5184
        %v5704 = vunpack.c.l.b16 %v5185
        %v5705 = vunpack.c.l.b16 %v5186
        %v5706 = vunpack.c.l.b16 %v5187
        %v5707 = vunpack.c.l.b16 %v5188
        %v5708 = vunpack.c.l.b16 %v5189
        %v5709 = vunpack.c.l.b16 %v5190
        %v5710 = vunpack.c.l.b16 %v5191
        %v5711 = vunpack.c.l.b16 %v5192
        %v5712 = vunpack.c.l.b16 %v5193
        %v5713 = vunpack.c.l.b16 %v5194
        %v5714 = vunpack.c.l.b16 %v5195
        %v5715 = vunpack.c.l.b16 %v5196
        %v5716 = vunpack.c.l.b16 %v5197
        %v5717 = vpack.c.b16 %v5462, %v5461
        %v5718 = vpack.c.b16 %v5464, %v5463
        %v5719 = vpack.c.b16 %v5466, %v5465
        %v5720 = vpack.c.b16 %v5468, %v5467
        %v5721 = vpack.c.b16 %v5470, %v5469
        %v5722 = vpack.c.b16 %v5472, %v5471
        %v5723 = vpack.c.b16 %v5474, %v5473
        %v5724 = vpack.c.b16 %v5476, %v5475
        %v5725 = vpack.c.b16 %v5478, %v5477
        %v5726 = vpack.c.b16 %v5480, %v5479
        %v5727 = vpack.c.b16 %v5482, %v5481
        %v5728 = vpack.c.b16 %v5484, %v5483
        %v5729 = vpack.c.b16 %v5486, %v5485
        %v5730 = vpack.c.b16 %v5488, %v5487
        %v5731 = vpack.c.b16 %v5490, %v5489
        %v5732 = vpack.c.b16 %v5492, %v5491
        %v5733 = vpack.c.b16 %v5494, %v5493
        %v5734 = vpack.c.b16 %v5496, %v5495
        %v5735 = vpack.c.b16 %v5498, %v5497
        %v5736 = vpack.c.b16 %v5500, %v5499
        %v5737 = vpack.c.b16 %v5502, %v5501
        %v5738 = vpack.c.b16 %v5504, %v5503
        %v5739 = vpack.c.b16 %v5506, %v5505
        %v5740 = vpack.c.b16 %v5508, %v5507
        %v5741 = vpack.c.b16 %v5510, %v5509
        %v5742 = vpack.c.b16 %v5512, %v5511
        %v5743 = vpack.c.b16 %v5514, %v5513
        %v5744 = vpack.c.b16 %v5516, %v5515
        %v5745 = vpack.c.b16 %v5518, %v5517
        %v5746 = vpack.c.b16 %v5520, %v5519
        %v5747 = vpack.c.b16 %v5522, %v5521
        %v5748 = vpack.c.b16 %v5524, %v5523
        %v5749 = vpack.c.b16 %v5526, %v5525
        %v5750 = vpack.c.b16 %v5528, %v5527
        %v5751 = vpack.c.b16 %v5530, %v5529
        %v5752 = vpack.c.b16 %v5532, %v5531
        %v5753 = vpack.c.b16 %v5534, %v5533
        %v5754 = vpack.c.b16 %v5536, %v5535
        %v5755 = vpack.c.b16 %v5538, %v5537
        %v5756 = vpack.c.b16 %v5540, %v5539
        %v5757 = vpack.c.b16 %v5542, %v5541
        %v5758 = vpack.c.b16 %v5544, %v5543
        %v5759 = vpack.c.b16 %v5546, %v5545
        %v5760 = vpack.c.b16 %v5548, %v5547
        %v5761 = vpack.c.b16 %v5550, %v5549
        %v5762 = vpack.c.b16 %v5552, %v5551
        %v5763 = vpack.c.b16 %v5554, %v5553
        %v5764 = vpack.c.b16 %v5556, %v5555
        %v5765 = vpack.c.b16 %v5558, %v5557
        %v5766 = vpack.c.b16 %v5560, %v5559
        %v5767 = vpack.c.b16 %v5562, %v5561
        %v5768 = vpack.c.b16 %v5564, %v5563
        %v5769 = vpack.c.b16 %v5566, %v5565
        %v5770 = vpack.c.b16 %v5568, %v5567
        %v5771 = vpack.c.b16 %v5570, %v5569
        %v5772 = vpack.c.b16 %v5572, %v5571
        %v5773 = vpack.c.b16 %v5574, %v5573
        %v5774 = vpack.c.b16 %v5576, %v5575
        %v5775 = vpack.c.b16 %v5578, %v5577
        %v5776 = vpack.c.b16 %v5580, %v5579
        %v5777 = vpack.c.b16 %v5582, %v5581
        %v5778 = vpack.c.b16 %v5584, %v5583
        %v5779 = vpack.c.b16 %v5586, %v5585
        %v5780 = vpack.c.b16 %v5588, %v5587
        %v5781 = vpack.c.b16 %v5590, %v5589
        %v5782 = vpack.c.b16 %v5592, %v5591
        %v5783 = vpack.c.b16 %v5594, %v5593
        %v5784 = vpack.c.b16 %v5596, %v5595
        %v5785 = vpack.c.b16 %v5598, %v5597
        %v5786 = vpack.c.b16 %v5600, %v5599
        %v5787 = vpack.c.b16 %v5602, %v5601
        %v5788 = vpack.c.b16 %v5604, %v5603
        %v5789 = vpack.c.b16 %v5606, %v5605
        %v5790 = vpack.c.b16 %v5608, %v5607
        %v5791 = vpack.c.b16 %v5610, %v5609
        %v5792 = vpack.c.b16 %v5612, %v5611
        %v5793 = vpack.c.b16 %v5614, %v5613
        %v5794 = vpack.c.b16 %v5616, %v5615
        %v5795 = vpack.c.b16 %v5618, %v5617
        %v5796 = vpack.c.b16 %v5620, %v5619
        %v5797 = vpack.c.b16 %v5622, %v5621
        %v5798 = vpack.c.b16 %v5624, %v5623
        %v5799 = vpack.c.b16 %v5626, %v5625
        %v5800 = vpack.c.b16 %v5628, %v5627
        %v5801 = vpack.c.b16 %v5630, %v5629
        %v5802 = vpack.c.b16 %v5632, %v5631
        %v5803 = vpack.c.b16 %v5634, %v5633
        %v5804 = vpack.c.b16 %v5636, %v5635
        %v5805 = vpack.c.b16 %v5638, %v5637
        %v5806 = vpack.c.b16 %v5640, %v5639
        %v5807 = vpack.c.b16 %v5642, %v5641
        %v5808 = vpack.c.b16 %v5644, %v5643
        %v5809 = vpack.c.b16 %v5646, %v5645
        %v5810 = vpack.c.b16 %v5648, %v5647
        %v5811 = vpack.c.b16 %v5650, %v5649
        %v5812 = vpack.c.b16 %v5652, %v5651
        %v5813 = vpack.c.b16 %v5654, %v5653
        %v5814 = vpack.c.b16 %v5656, %v5655
        %v5815 = vpack.c.b16 %v5658, %v5657
        %v5816 = vpack.c.b16 %v5660, %v5659
        %v5817 = vpack.c.b16 %v5662, %v5661
        %v5818 = vpack.c.b16 %v5664, %v5663
        %v5819 = vpack.c.b16 %v5666, %v5665
        %v5820 = vpack.c.b16 %v5668, %v5667
        %v5821 = vpack.c.b16 %v5670, %v5669
        %v5822 = vpack.c.b16 %v5672, %v5671
        %v5823 = vpack.c.b16 %v5674, %v5673
        %v5824 = vpack.c.b16 %v5676, %v5675
        %v5825 = vpack.c.b16 %v5678, %v5677
        %v5826 = vpack.c.b16 %v5680, %v5679
        %v5827 = vpack.c.b16 %v5682, %v5681
        %v5828 = vpack.c.b16 %v5684, %v5683
        %v5829 = vpack.c.b16 %v5686, %v5685
        %v5830 = vpack.c.b16 %v5688, %v5687
        %v5831 = vpack.c.b16 %v5690, %v5689
        %v5832 = vpack.c.b16 %v5692, %v5691
        %v5833 = vpack.c.b16 %v5694, %v5693
        %v5834 = vpack.c.b16 %v5696, %v5695
        %v5835 = vpack.c.b16 %v5698, %v5697
        %v5836 = vpack.c.b16 %v5700, %v5699
        %v5837 = vpack.c.b16 %v5702, %v5701
        %v5838 = vpack.c.b16 %v5704, %v5703
        %v5839 = vpack.c.b16 %v5706, %v5705
        %v5840 = vpack.c.b16 %v5708, %v5707
        %v5841 = vpack.c.b16 %v5710, %v5709
        %v5842 = vpack.c.b16 %v5712, %v5711
        %v5843 = vpack.c.b16 %v5714, %v5713
        %v5844 = vpack.c.b16 %v5716, %v5715
        %5973 = vmatprep.subr.bf16.mxu0 0
        %5974 = vmatpush1.bf16.msra.mxu0 %v5717
        %5975 = vmatprep.subr.bf16.mxu0 0
        %5976 = vmatpush1.bf16.msra.mxu0 %v5718
        %5977 = vmatprep.subr.bf16.mxu0 0
        %5978 = vmatpush1.bf16.msra.mxu0 %v5719
        %5979 = vmatprep.subr.bf16.mxu0 0
        %5980 = vmatpush1.bf16.msra.mxu0 %v5720
        %5981 = vmatprep.subr.bf16.mxu0 0
        %5982 = vmatpush1.bf16.msra.mxu0 %v5721
        %5983 = vmatprep.subr.bf16.mxu0 0
        %5984 = vmatpush1.bf16.msra.mxu0 %v5722
        %5985 = vmatprep.subr.bf16.mxu0 0
        %5986 = vmatpush1.bf16.msra.mxu0 %v5723
        %5987 = vmatprep.subr.bf16.mxu0 0
        %5988 = vmatpush1.bf16.msra.mxu0 %v5724
        %5989 = vmatprep.subr.bf16.mxu0 0
        %5990 = vmatpush1.bf16.msra.mxu0 %v5725
        %5991 = vmatprep.subr.bf16.mxu0 0
        %5992 = vmatpush1.bf16.msra.mxu0 %v5726
        %5993 = vmatprep.subr.bf16.mxu0 0
        %5994 = vmatpush1.bf16.msra.mxu0 %v5727
        %5995 = vmatprep.subr.bf16.mxu0 0
        %5996 = vmatpush1.bf16.msra.mxu0 %v5728
        %5997 = vmatprep.subr.bf16.mxu0 0
        %5998 = vmatpush1.bf16.msra.mxu0 %v5729
        %5999 = vmatprep.subr.bf16.mxu0 0
        %6000 = vmatpush1.bf16.msra.mxu0 %v5730
        %6001 = vmatprep.subr.bf16.mxu0 0
        %6002 = vmatpush1.bf16.msra.mxu0 %v5731
        %6003 = vmatprep.subr.bf16.mxu0 0
        %6004 = vmatpush1.bf16.msra.mxu0 %v5732
        %6005 = vmatprep.mubr.bf16.mxu0 %v4927
        %6006 = vmatmul.mubr.bf16.gmra.mrb[0].mxu0 %v4926
        %v6007 = vpop.f32.mrb[0].mxu0
        %v6008 = vadd.f32 %v5203, %v6007
        %v6009 = vpop.f32.mrb[0].mxu0
        %v6010 = vpop.f32.mrb[0].mxu0
        %v6011 = vpop.f32.mrb[0].mxu0
        %6012 = vdwg.mxu0
        %6013 = vmatprep.subr.bf16.mxu0 0
        %6014 = vmatpush1.bf16.msra.mxu0 %v5733
        %6015 = vmatprep.subr.bf16.mxu0 0
        %6016 = vmatpush1.bf16.msra.mxu0 %v5734
        %6017 = vmatprep.subr.bf16.mxu0 0
        %6018 = vmatpush1.bf16.msra.mxu0 %v5735
        %6019 = vmatprep.subr.bf16.mxu0 0
        %6020 = vmatpush1.bf16.msra.mxu0 %v5736
        %6021 = vmatprep.subr.bf16.mxu0 0
        %6022 = vmatpush1.bf16.msra.mxu0 %v5737
        %6023 = vmatprep.subr.bf16.mxu0 0
        %6024 = vmatpush1.bf16.msra.mxu0 %v5738
        %6025 = vmatprep.subr.bf16.mxu0 0
        %6026 = vmatpush1.bf16.msra.mxu0 %v5739
        %6027 = vmatprep.subr.bf16.mxu0 0
        %6028 = vmatpush1.bf16.msra.mxu0 %v5740
        %6029 = vmatprep.subr.bf16.mxu0 0
        %6030 = vmatpush1.bf16.msra.mxu0 %v5741
        %6031 = vmatprep.subr.bf16.mxu0 0
        %6032 = vmatpush1.bf16.msra.mxu0 %v5742
        %6033 = vmatprep.subr.bf16.mxu0 0
        %6034 = vmatpush1.bf16.msra.mxu0 %v5743
        %6035 = vmatprep.subr.bf16.mxu0 0
        %6036 = vmatpush1.bf16.msra.mxu0 %v5744
        %6037 = vmatprep.subr.bf16.mxu0 0
        %6038 = vmatpush1.bf16.msra.mxu0 %v5745
        %6039 = vmatprep.subr.bf16.mxu0 0
        %6040 = vmatpush1.bf16.msra.mxu0 %v5746
        %6041 = vmatprep.subr.bf16.mxu0 0
        %6042 = vmatpush1.bf16.msra.mxu0 %v5747
        %6043 = vmatprep.subr.bf16.mxu0 0
        %6044 = vmatpush1.bf16.msra.mxu0 %v5748
        %6045 = vmatprep.mubr.bf16.mxu0 %v4929
        %6046 = vmatmul.mubr.bf16.gmra.mrb[0].mxu0 %v4928
        %v6047 = vpop.f32.mrb[0].mxu0
        %v6048 = vadd.f32 %v6008, %v6047
        %v6049 = vpop.f32.mrb[0].mxu0
        %v6050 = vpop.f32.mrb[0].mxu0
        %v6051 = vpop.f32.mrb[0].mxu0
        %6052 = vdwg.mxu0
        %6053 = vmatprep.subr.bf16.mxu0 0
        %6054 = vmatpush1.bf16.msra.mxu0 %v5749
        %6055 = vmatprep.subr.bf16.mxu0 0
        %6056 = vmatpush1.bf16.msra.mxu0 %v5750
        %6057 = vmatprep.subr.bf16.mxu0 0
        %6058 = vmatpush1.bf16.msra.mxu0 %v5751
        %6059 = vmatprep.subr.bf16.mxu0 0
        %6060 = vmatpush1.bf16.msra.mxu0 %v5752
        %6061 = vmatprep.subr.bf16.mxu0 0
        %6062 = vmatpush1.bf16.msra.mxu0 %v5753
        %6063 = vmatprep.subr.bf16.mxu0 0
        %6064 = vmatpush1.bf16.msra.mxu0 %v5754
        %6065 = vmatprep.subr.bf16.mxu0 0
        %6066 = vmatpush1.bf16.msra.mxu0 %v5755
        %6067 = vmatprep.subr.bf16.mxu0 0
        %6068 = vmatpush1.bf16.msra.mxu0 %v5756
        %6069 = vmatprep.subr.bf16.mxu0 0
        %6070 = vmatpush1.bf16.msra.mxu0 %v5757
        %6071 = vmatprep.subr.bf16.mxu0 0
        %6072 = vmatpush1.bf16.msra.mxu0 %v5758
        %6073 = vmatprep.subr.bf16.mxu0 0
        %6074 = vmatpush1.bf16.msra.mxu0 %v5759
        %6075 = vmatprep.subr.bf16.mxu0 0
        %6076 = vmatpush1.bf16.msra.mxu0 %v5760
        %6077 = vmatprep.subr.bf16.mxu0 0
        %6078 = vmatpush1.bf16.msra.mxu0 %v5761
        %6079 = vmatprep.subr.bf16.mxu0 0
        %6080 = vmatpush1.bf16.msra.mxu0 %v5762
        %6081 = vmatprep.subr.bf16.mxu0 0
        %6082 = vmatpush1.bf16.msra.mxu0 %v5763
        %6083 = vmatprep.subr.bf16.mxu0 0
        %6084 = vmatpush1.bf16.msra.mxu0 %v5764
        %6085 = vmatprep.mubr.bf16.mxu0 %v4931
        %6086 = vmatmul.mubr.bf16.gmra.mrb[0].mxu0 %v4930
        %v6087 = vpop.f32.mrb[0].mxu0
        %v6088 = vadd.f32 %v6048, %v6087
        %v6089 = vpop.f32.mrb[0].mxu0
        %v6090 = vpop.f32.mrb[0].mxu0
        %v6091 = vpop.f32.mrb[0].mxu0
        %6092 = vdwg.mxu0
        %6093 = vmatprep.subr.bf16.mxu0 0
        %6094 = vmatpush1.bf16.msra.mxu0 %v5765
        %6095 = vmatprep.subr.bf16.mxu0 0
        %6096 = vmatpush1.bf16.msra.mxu0 %v5766
        %6097 = vmatprep.subr.bf16.mxu0 0
        %6098 = vmatpush1.bf16.msra.mxu0 %v5767
        %6099 = vmatprep.subr.bf16.mxu0 0
        %6100 = vmatpush1.bf16.msra.mxu0 %v5768
        %6101 = vmatprep.subr.bf16.mxu0 0
        %6102 = vmatpush1.bf16.msra.mxu0 %v5769
        %6103 = vmatprep.subr.bf16.mxu0 0
        %6104 = vmatpush1.bf16.msra.mxu0 %v5770
        %6105 = vmatprep.subr.bf16.mxu0 0
        %6106 = vmatpush1.bf16.msra.mxu0 %v5771
        %6107 = vmatprep.subr.bf16.mxu0 0
        %6108 = vmatpush1.bf16.msra.mxu0 %v5772
        %6109 = vmatprep.subr.bf16.mxu0 0
        %6110 = vmatpush1.bf16.msra.mxu0 %v5773
        %6111 = vmatprep.subr.bf16.mxu0 0
        %6112 = vmatpush1.bf16.msra.mxu0 %v5774
        %6113 = vmatprep.subr.bf16.mxu0 0
        %6114 = vmatpush1.bf16.msra.mxu0 %v5775
        %6115 = vmatprep.subr.bf16.mxu0 0
        %6116 = vmatpush1.bf16.msra.mxu0 %v5776
        %6117 = vmatprep.subr.bf16.mxu0 0
        %6118 = vmatpush1.bf16.msra.mxu0 %v5777
        %6119 = vmatprep.subr.bf16.mxu0 0
        %6120 = vmatpush1.bf16.msra.mxu0 %v5778
        %6121 = vmatprep.subr.bf16.mxu0 0
        %6122 = vmatpush1.bf16.msra.mxu0 %v5779
        %6123 = vmatprep.subr.bf16.mxu0 0
        %6124 = vmatpush1.bf16.msra.mxu0 %v5780
        %6125 = vmatprep.mubr.bf16.mxu0 %v4933
        %6126 = vmatmul.mubr.bf16.gmra.mrb[0].mxu0 %v4932
        %v6127 = vpop.f32.mrb[0].mxu0
        %v6128 = vadd.f32 %v6088, %v6127
        %v6129 = vpop.f32.mrb[0].mxu0
        %v6130 = vpop.f32.mrb[0].mxu0
        %v6131 = vpop.f32.mrb[0].mxu0
        %6132 = vdwg.mxu0
        %6133 = vmatprep.subr.bf16.mxu0 0
        %6134 = vmatpush1.bf16.msra.mxu0 %v5781
        %6135 = vmatprep.subr.bf16.mxu0 0
        %6136 = vmatpush1.bf16.msra.mxu0 %v5782
        %6137 = vmatprep.subr.bf16.mxu0 0
        %6138 = vmatpush1.bf16.msra.mxu0 %v5783
        %6139 = vmatprep.subr.bf16.mxu0 0
        %6140 = vmatpush1.bf16.msra.mxu0 %v5784
        %6141 = vmatprep.subr.bf16.mxu0 0
        %6142 = vmatpush1.bf16.msra.mxu0 %v5785
        %6143 = vmatprep.subr.bf16.mxu0 0
        %6144 = vmatpush1.bf16.msra.mxu0 %v5786
        %6145 = vmatprep.subr.bf16.mxu0 0
        %6146 = vmatpush1.bf16.msra.mxu0 %v5787
        %6147 = vmatprep.subr.bf16.mxu0 0
        %6148 = vmatpush1.bf16.msra.mxu0 %v5788
        %6149 = vmatprep.subr.bf16.mxu0 0
        %6150 = vmatpush1.bf16.msra.mxu0 %v5789
        %6151 = vmatprep.subr.bf16.mxu0 0
        %6152 = vmatpush1.bf16.msra.mxu0 %v5790
        %6153 = vmatprep.subr.bf16.mxu0 0
        %6154 = vmatpush1.bf16.msra.mxu0 %v5791
        %6155 = vmatprep.subr.bf16.mxu0 0
        %6156 = vmatpush1.bf16.msra.mxu0 %v5792
        %6157 = vmatprep.subr.bf16.mxu0 0
        %6158 = vmatpush1.bf16.msra.mxu0 %v5793
        %6159 = vmatprep.subr.bf16.mxu0 0
        %6160 = vmatpush1.bf16.msra.mxu0 %v5794
        %6161 = vmatprep.subr.bf16.mxu0 0
        %6162 = vmatpush1.bf16.msra.mxu0 %v5795
        %6163 = vmatprep.subr.bf16.mxu0 0
        %6164 = vmatpush1.bf16.msra.mxu0 %v5796
        %6165 = vmatprep.mubr.bf16.mxu0 %v4935
        %6166 = vmatmul.mubr.bf16.gmra.mrb[0].mxu0 %v4934
        %v6167 = vpop.f32.mrb[0].mxu0
        %v6168 = vadd.f32 %v6128, %v6167
        %v6169 = vpop.f32.mrb[0].mxu0
        %v6170 = vpop.f32.mrb[0].mxu0
        %v6171 = vpop.f32.mrb[0].mxu0
        %6172 = vdwg.mxu0
        %6173 = vmatprep.subr.bf16.mxu0 0
        %6174 = vmatpush1.bf16.msra.mxu0 %v5797
        %6175 = vmatprep.subr.bf16.mxu0 0
        %6176 = vmatpush1.bf16.msra.mxu0 %v5798
        %6177 = vmatprep.subr.bf16.mxu0 0
        %6178 = vmatpush1.bf16.msra.mxu0 %v5799
        %6179 = vmatprep.subr.bf16.mxu0 0
        %6180 = vmatpush1.bf16.msra.mxu0 %v5800
        %6181 = vmatprep.subr.bf16.mxu0 0
        %6182 = vmatpush1.bf16.msra.mxu0 %v5801
        %6183 = vmatprep.subr.bf16.mxu0 0
        %6184 = vmatpush1.bf16.msra.mxu0 %v5802
        %6185 = vmatprep.subr.bf16.mxu0 0
        %6186 = vmatpush1.bf16.msra.mxu0 %v5803
        %6187 = vmatprep.subr.bf16.mxu0 0
        %6188 = vmatpush1.bf16.msra.mxu0 %v5804
        %6189 = vmatprep.subr.bf16.mxu0 0
        %6190 = vmatpush1.bf16.msra.mxu0 %v5805
        %6191 = vmatprep.subr.bf16.mxu0 0
        %6192 = vmatpush1.bf16.msra.mxu0 %v5806
        %6193 = vmatprep.subr.bf16.mxu0 0
        %6194 = vmatpush1.bf16.msra.mxu0 %v5807
        %6195 = vmatprep.subr.bf16.mxu0 0
        %6196 = vmatpush1.bf16.msra.mxu0 %v5808
        %6197 = vmatprep.subr.bf16.mxu0 0
        %6198 = vmatpush1.bf16.msra.mxu0 %v5809
        %6199 = vmatprep.subr.bf16.mxu0 0
        %6200 = vmatpush1.bf16.msra.mxu0 %v5810
        %6201 = vmatprep.subr.bf16.mxu0 0
        %6202 = vmatpush1.bf16.msra.mxu0 %v5811
        %6203 = vmatprep.subr.bf16.mxu0 0
        %6204 = vmatpush1.bf16.msra.mxu0 %v5812
        %6205 = vmatprep.mubr.bf16.mxu0 %v4937
        %6206 = vmatmul.mubr.bf16.gmra.mrb[0].mxu0 %v4936
        %v6207 = vpop.f32.mrb[0].mxu0
        %v6208 = vadd.f32 %v6168, %v6207
        %v6209 = vpop.f32.mrb[0].mxu0
        %v6210 = vpop.f32.mrb[0].mxu0
        %v6211 = vpop.f32.mrb[0].mxu0
        %6212 = vdwg.mxu0
        %6213 = vmatprep.subr.bf16.mxu0 0
        %6214 = vmatpush1.bf16.msra.mxu0 %v5813
        %6215 = vmatprep.subr.bf16.mxu0 0
        %6216 = vmatpush1.bf16.msra.mxu0 %v5814
        %6217 = vmatprep.subr.bf16.mxu0 0
        %6218 = vmatpush1.bf16.msra.mxu0 %v5815
        %6219 = vmatprep.subr.bf16.mxu0 0
        %6220 = vmatpush1.bf16.msra.mxu0 %v5816
        %6221 = vmatprep.subr.bf16.mxu0 0
        %6222 = vmatpush1.bf16.msra.mxu0 %v5817
        %6223 = vmatprep.subr.bf16.mxu0 0
        %6224 = vmatpush1.bf16.msra.mxu0 %v5818
        %6225 = vmatprep.subr.bf16.mxu0 0
        %6226 = vmatpush1.bf16.msra.mxu0 %v5819
        %6227 = vmatprep.subr.bf16.mxu0 0
        %6228 = vmatpush1.bf16.msra.mxu0 %v5820
        %6229 = vmatprep.subr.bf16.mxu0 0
        %6230 = vmatpush1.bf16.msra.mxu0 %v5821
        %6231 = vmatprep.subr.bf16.mxu0 0
        %6232 = vmatpush1.bf16.msra.mxu0 %v5822
        %6233 = vmatprep.subr.bf16.mxu0 0
        %6234 = vmatpush1.bf16.msra.mxu0 %v5823
        %6235 = vmatprep.subr.bf16.mxu0 0
        %6236 = vmatpush1.bf16.msra.mxu0 %v5824
        %6237 = vmatprep.subr.bf16.mxu0 0
        %6238 = vmatpush1.bf16.msra.mxu0 %v5825
        %6239 = vmatprep.subr.bf16.mxu0 0
        %6240 = vmatpush1.bf16.msra.mxu0 %v5826
        %6241 = vmatprep.subr.bf16.mxu0 0
        %6242 = vmatpush1.bf16.msra.mxu0 %v5827
        %6243 = vmatprep.subr.bf16.mxu0 0
        %6244 = vmatpush1.bf16.msra.mxu0 %v5828
        %6245 = vmatprep.mubr.bf16.mxu0 %v4939
        %6246 = vmatmul.mubr.bf16.gmra.mrb[0].mxu0 %v4938
        %v6247 = vpop.f32.mrb[0].mxu0
        %v6248 = vadd.f32 %v6208, %v6247
        %v6249 = vpop.f32.mrb[0].mxu0
        %v6250 = vpop.f32.mrb[0].mxu0
        %v6251 = vpop.f32.mrb[0].mxu0
        %6252 = vdwg.mxu0
        %6253 = vmatprep.subr.bf16.mxu0 0
        %6254 = vmatpush1.bf16.msra.mxu0 %v5829
        %6255 = vmatprep.subr.bf16.mxu0 0
        %6256 = vmatpush1.bf16.msra.mxu0 %v5830
        %6257 = vmatprep.subr.bf16.mxu0 0
        %6258 = vmatpush1.bf16.msra.mxu0 %v5831
        %6259 = vmatprep.subr.bf16.mxu0 0
        %6260 = vmatpush1.bf16.msra.mxu0 %v5832
        %6261 = vmatprep.subr.bf16.mxu0 0
        %6262 = vmatpush1.bf16.msra.mxu0 %v5833
        %6263 = vmatprep.subr.bf16.mxu0 0
        %6264 = vmatpush1.bf16.msra.mxu0 %v5834
        %6265 = vmatprep.subr.bf16.mxu0 0
        %6266 = vmatpush1.bf16.msra.mxu0 %v5835
        %6267 = vmatprep.subr.bf16.mxu0 0
        %6268 = vmatpush1.bf16.msra.mxu0 %v5836
        %6269 = vmatprep.subr.bf16.mxu0 0
        %6270 = vmatpush1.bf16.msra.mxu0 %v5837
        %6271 = vmatprep.subr.bf16.mxu0 0
        %6272 = vmatpush1.bf16.msra.mxu0 %v5838
        %6273 = vmatprep.subr.bf16.mxu0 0
        %6274 = vmatpush1.bf16.msra.mxu0 %v5839
        %6275 = vmatprep.subr.bf16.mxu0 0
        %6276 = vmatpush1.bf16.msra.mxu0 %v5840
        %6277 = vmatprep.subr.bf16.mxu0 0
        %6278 = vmatpush1.bf16.msra.mxu0 %v5841
        %6279 = vmatprep.subr.bf16.mxu0 0
        %6280 = vmatpush1.bf16.msra.mxu0 %v5842
        %6281 = vmatprep.subr.bf16.mxu0 0
        %6282 = vmatpush1.bf16.msra.mxu0 %v5843
        %6283 = vmatprep.subr.bf16.mxu0 0
        %6284 = vmatpush1.bf16.msra.mxu0 %v5844
        %6285 = vmatprep.mubr.bf16.mxu0 %v4941
        %6286 = vmatmul.mubr.bf16.gmra.mrb[0].mxu0 %v4940
        %v6287 = vpop.f32.mrb[0].mxu0
        %v6288 = vadd.f32 %v6248, %v6287
        %v6289 = vpop.f32.mrb[0].mxu0
        %v6290 = vpop.f32.mrb[0].mxu0
        %v6291 = vpop.f32.mrb[0].mxu0
        %6292 = vdwg.mxu0
        %v6293 = vadd.f32 %v4301, %v6288
        %v6294 = vsel %vm785, %v6293, 0.0
        %6295 = vadd.xlane.f32.xlu0 %v6294
        %v6296 = vpop.xlane.xlu0 %6295
        %v6297 = vmul.f32 %v6296, %v1496
        %v6298 = vsub.f32 %v6293, %v6297
        %v6299 = vmul.f32 %v6298, %v6298
        %v6300 = vsel %vm785, %v6299, 0.0
        %6301 = vadd.xlane.f32.xlu0 %v6300
        %v6302 = vpop.xlane.xlu0 %6301
        %v6303 = vmul.f32 %v6302, %v1496
        %v6304 = vadd.f32 %v6303, 1e-05
        %v6305 = vrsqrt.pop %v6304
        %v6306 = vmul.f32 %v6298, %v6305
        %v6307 = vld [vmem:[%s19] sm:$0x1]
        %v6309 = vlaneseq
        %v6310 = vshrl.u32 %v6309, 7
        %v6311 = vsub.s32 0, %v6310
        %v6312 = vrot.slane %v6307, %v6311
        %v6314 = vmul.f32 %v6306, %v6312
        %v6315 = vld [vmem:[%s20] sm:$0x1]
        %v6317 = vlaneseq
        %v6318 = vshrl.u32 %v6317, 7
        %v6319 = vsub.s32 0, %v6318
        %v6320 = vrot.slane %v6315, %v6319
        %v6322 = vadd.f32 %v6314, %v6320
        %v6323 = vsel %vm785, %v6322, 0.0
        %v6324 = vrot.slane %v6323, 4
        %v6325 = vadd.f32 %v6323, %v6324
        %v6326 = vrot.slane %v6325, 2
        %v6327 = vadd.f32 %v6325, %v6326
        %v6328 = vrot.slane %v6327, 1
        %v6329 = vadd.f32 %v6327, %v6328
        %v6330 = vrcp.pop 8.0
        %v6331 = vmul.f32 %v6329, %v6330
        %vm6332 = vcmask 253952
        %6333 = vst.msk [vmem:[%s754] sm:$0x1] %vm6332, %v6331
        %s6334 = sand.u32 %s577, 1
        %s6335 = scalar_lea.sflag [#allocation3], %s6334
        %s6336 = sand.u32 %s577, 1
        %s6337 = scalar_lea.vmem [#allocation2], %s6336
        // Predicated region
        $region121: #{transformer_encoder.1} parent=119 // pred_check
          %p6338 = pneg %p587
        $region122: #{transformer_encoder.1} parent=119 // pred_check_branch
          %6340 = sbr.rel (%p6338) target = $region124
        $region123: #{transformer_encoder.1} parent=119 // pred_region
          %s6342 = ssub.s32 16, 16
          %6343 = vsyncadd %s6335, %s6342
          %s6344 = smul.addr %s39, 16
          %s6345 = scalar_lea.hbm %s25, %s6344
          %s6347 = sshll.u32 %s6337, 4
          %s6348 = int_to_ptr.vmem [resolvable:$true] %s6347
          %6350 = dma.vmem_to_hbm [thread:$0]  %s6348, 16, %s6345, %s6335
        $region124: #{transformer_encoder.1} parent=119 // pred_fallthru
          _
      $region120: #{transformer_encoder.1} parent=5 // pred_fallthru
        _
      %p6351 = scmp.le.s32.totalorder 2, %s34
      // Predicated region
      $region125: #{transformer_encoder.1} parent=5 // pred_check
        %p6352 = pneg %p6351
      $region126: #{transformer_encoder.1} parent=5 // pred_check_branch
        %6354 = sbr.rel (%p6352) target = $region128
      $region127: #{transformer_encoder.1} parent=5 // pred_region
        %s6355 = ssub.s32 %s34, 2
        // Predicated region
        $region129: #{transformer_encoder.1} parent=127 // pred_check
          %p6356 = pneg %p593
        $region130: #{transformer_encoder.1} parent=127 // pred_check_branch
          %6358 = sbr.rel (%p6356) target = $region132
        $region131: #{transformer_encoder.1} parent=127 // pred_region
          %s6359 = sand.u32 %s578, 1
          %s6360 = scalar_lea.sflag [#allocation3], %s6359
          %s6361 = sand.u32 %s578, 1
          %s6362 = scalar_lea.vmem [#allocation2], %s6361
          %6363 = dma.done %s6360, 16
        $region132: #{transformer_encoder.1} parent=127 // pred_fallthru
          _
      $region128: #{transformer_encoder.1} parent=5 // pred_fallthru
        _
    $region6: #{transformer_encoder.1} parent=1 // loop_footer
      %s38 = sadd.s32 1, %s34
    $region7: #{transformer_encoder.1} parent=1 // loop_footer_branch
      %33 = sbr.rel target = $region3
    $region8: #{transformer_encoder.1} parent=1 // loop_exit
      _
    %6364 = vsyncpa [#allocation3], 1
    %s6365 = scalar_lea.sflag [#allocation3], 1
    %6366 = vsyncpa %s6365, 1

</llo_original>
